<compile_context>
chip_gen: v7x
topology: tpu7x:2x2x1
jax: 0.10.0
libtpu: 0.0.40
codegen_flags: <defaults>
</compile_context>

<pallas_src>
import functools

import jax
import jax.numpy as jnp
from jax.experimental import pallas as pl
from jax.experimental.pallas import tpu as pltpu

_BN_EPS = 1e-5


# ==========================================================================
# Kernel 1: fused per-view conv1(+BN+ReLU) and multi-view conv1(+BN+ReLU).
#   grid = (batch, views); views is the reduction axis (f32 VMEM accumulator).
#   Output loc is written channel-major as (64, B*N) bf16, ready for the head.
# ==========================================================================
def _feat_mv_kernel(x_ref, w1_ref, b1_ref, wmv_ref, bmv_ref, loc_ref, acc_ref):
    v = pl.program_id(1)

    @pl.when(v == 0)
    def _():
        acc_ref[...] = jnp.zeros_like(acc_ref)

    # per-view conv1 (6->64, BN folded into weights) + ReLU
    h1 = jnp.dot(w1_ref[v], x_ref[...],
                 preferred_element_type=jnp.float32)          # (64, N) f32
    h1 = jnp.maximum(h1 + b1_ref[v], 0.0)

    # this view's contribution to the multi-view conv1 (64V -> 64)
    acc_ref[...] += jnp.dot(wmv_ref[v], h1.astype(jnp.bfloat16),
                            preferred_element_type=jnp.float32)

    @pl.when(v == pl.num_programs(1) - 1)
    def _():
        loc_ref[...] = jnp.maximum(acc_ref[...] + bmv_ref[...], 0.0
                                   ).astype(loc_ref.dtype)


def feat_mv_fused(xt, kp):
    B, V, _, N = xt.shape
    return pl.pallas_call(
        _feat_mv_kernel,
        out_shape=jax.ShapeDtypeStruct((64, B * N), jnp.bfloat16),
        grid=(B, V),
        in_specs=[
            # per-view input slab (8, N), channel-major, cin padded 6 -> 8
            pl.BlockSpec((None, None, 8, N), lambda b, v: (b, v, 0, 0)),
            # all per-view weights loaded once (constant block index), sliced
            # with program_id inside the kernel -- no per-step weight DMA.
            pl.BlockSpec((V, 64, 8),  lambda b, v: (0, 0, 0)),
            pl.BlockSpec((V, 64, 1),  lambda b, v: (0, 0, 0)),
            pl.BlockSpec((V, 64, 64), lambda b, v: (0, 0, 0)),
            pl.BlockSpec((64, 1),     lambda b, v: (0, 0)),
        ],
        out_specs=pl.BlockSpec((64, N), lambda b, v: (0, b)),
        scratch_shapes=[pltpu.VMEM((64, N), jnp.float32)],
        compiler_params=pltpu.CompilerParams(
            dimension_semantics=("parallel", "arbitrary")),
    )(xt, kp["w1s"], kp["b1s"], kp["wmv"], kp["bmv"])


# ==========================================================================
# Kernel 2: classifier head, tiled over the 64-channel axis:
#   fc1 + BN + ReLU -> fc2 + BN + ReLU -> fc3 -> log_softmax over dim 0.
#   Input loc is (64, B*1024); each channel tile contains complete softmax
#   groups (softmax runs over the batch axis for a fixed channel/class), so
#   the per-tile computation is exact.
# ==========================================================================
def _head_kernel(x_ref, w1_ref, b1_ref, w2_ref, b2_ref, w3_ref, b3_ref, o_ref,
                 *, batch, n, k):
    bf16 = jnp.bfloat16
    lgs = []
    for b in range(batch):                           # static, small unroll
        xb = x_ref[:, b * n:(b + 1) * n]             # (tc, 1024) bf16
        h = jnp.dot(xb, w1_ref[...], preferred_element_type=jnp.float32)
        h = jnp.maximum(h + b1_ref[...], 0.0)        # (tc, 512) f32
        h = jnp.dot(h.astype(bf16), w2_ref[...],
                    preferred_element_type=jnp.float32)
        h = jnp.maximum(h + b2_ref[...], 0.0)        # (tc, 256) f32
        lg = jnp.dot(h.astype(bf16), w3_ref[...],
                     preferred_element_type=jnp.float32) + b3_ref[...]
        lgs.append(lg)                               # (tc, k) f32

    # F.log_softmax(., dim=0): softmax over batch for each (channel, class).
    m = lgs[0]
    for lg in lgs[1:]:
        m = jnp.maximum(m, lg)
    s = jnp.zeros_like(m)
    for lg in lgs:
        s = s + jnp.exp(lg - m)
    lse = m + jnp.log(s)
    o_ref[...] = jnp.concatenate([lg - lse for lg in lgs], axis=1)


def head_fused(xh, kp, *, batch, n, k, tc=16):
    C = xh.shape[0]                                  # 64 channels
    assert C % tc == 0 and tc % 8 == 0
    return pl.pallas_call(
        functools.partial(_head_kernel, batch=batch, n=n, k=k),
        out_shape=jax.ShapeDtypeStruct((C, batch * k), jnp.float32),
        grid=(C // tc,),
        in_specs=[
            pl.BlockSpec((tc, batch * n), lambda i: (i, 0)),
            pl.BlockSpec((1024, 512),     lambda i: (0, 0)),
            pl.BlockSpec((1, 512),        lambda i: (0, 0)),
            pl.BlockSpec((512, 256),      lambda i: (0, 0)),
            pl.BlockSpec((1, 256),        lambda i: (0, 0)),
            pl.BlockSpec((256, k),        lambda i: (0, 0)),
            pl.BlockSpec((1, k),          lambda i: (0, 0)),
        ],
        out_specs=pl.BlockSpec((tc, batch * k), lambda i: (i, 0)),
        compiler_params=pltpu.CompilerParams(
            dimension_semantics=("parallel",)),
    )(xh, kp["w1h"], kp["b1h"], kp["w2h"], kp["b2h"], kp["w3h"], kp["b3h"])


# ==========================================================================
# Parameters: deterministic synthetic init + host-side BN folding / packing.
# Only parameters that reach the module's forward output are instantiated
# (per-view conv2/conv3/bn2/bn3 and the multi-view conv2/bn2 feed the glo
# branch, which PointNetCls discards: `_, x = self.feat(x)`).
# ==========================================================================
def init_params(key, views, k):
    def nxt():
        nonlocal key
        key, sub = jax.random.split(key)
        return sub

    def lin_p(cin, cout):  # weight stored as (in, out)
        w = jax.random.normal(nxt(), (cin, cout), jnp.float32) / jnp.sqrt(cin)
        b = 0.1 * jax.random.normal(nxt(), (cout,), jnp.float32)
        return w, b

    def bn_p(c):
        gamma = 1.0 + 0.1 * jax.random.normal(nxt(), (c,), jnp.float32)
        beta = 0.1 * jax.random.normal(nxt(), (c,), jnp.float32)
        mean = 0.1 * jax.random.normal(nxt(), (c,), jnp.float32)
        var = jax.random.uniform(nxt(), (c,), jnp.float32, minval=0.5, maxval=1.5)
        return gamma, beta, mean, var

    params = {"view": [], "mv": {}, "head": {}}
    for _ in range(views):  # PointNetfeat conv1/bn1 per view
        w1, b1 = lin_p(6, 64)
        params["view"].append({"w1": w1, "b1": b1, "bn1": bn_p(64)})
    # PointNetMultiView fusion conv1/bn1 only (glo branch discarded upstream).
    w1, b1 = lin_p(64 * views, 64)
    params["mv"] = {"w1": w1, "b1": b1, "bn1": bn_p(64)}
    # Classifier head
    w1, b1 = lin_p(1024, 512)
    w2, b2 = lin_p(512, 256)
    w3, b3 = lin_p(256, k)
    params["head"] = {"w1": w1, "b1": b1, "bn1": bn_p(512),
                      "w2": w2, "b2": b2, "bn2": bn_p(256),
                      "w3": w3, "b3": b3}
    return params


def _fold_bn(w, b, bn):
    """Fold eval-mode BatchNorm into the preceding conv/linear: y = x@w' + b'."""
    gamma, beta, mean, var = bn
    scale = gamma / jnp.sqrt(var + _BN_EPS)
    return w * scale[None, :], (b - mean) * scale + beta


def prepare_params(params, views):
    """BN-fold, stack per-view tensors, transpose to channel-major (out, in),
    pad conv1 input channels 6 -> 8, cast weights to bf16 (biases stay f32)."""
    bf16 = jnp.bfloat16
    w1s, b1s = [], []
    for p in params["view"]:
        w1, b1 = _fold_bn(p["w1"], p["b1"], p["bn1"])      # (6,64), (64,)
        w1 = jnp.pad(w1, ((0, 2), (0, 0)))                 # cin 6 -> 8
        w1s.append(w1.T)                                   # (64, 8)
        b1s.append(b1[:, None])                            # (64, 1)

    mv = params["mv"]
    wmv, bmv = _fold_bn(mv["w1"], mv["b1"], mv["bn1"])     # (64V,64), (64,)
    # row index of wmv = v*64 + cin  ->  per-view transposed slices (cout, cin)
    wmv_t = wmv.reshape(views, 64, 64).transpose(0, 2, 1)  # (V, 64, 64)

    hd = params["head"]
    w1h, b1h = _fold_bn(hd["w1"], hd["b1"], hd["bn1"])
    w2h, b2h = _fold_bn(hd["w2"], hd["b2"], hd["bn2"])

    return {
        "w1s": jnp.stack(w1s).astype(bf16), "b1s": jnp.stack(b1s),
        "wmv": wmv_t.astype(bf16), "bmv": bmv[:, None],
        "w1h": w1h.astype(bf16), "b1h": b1h[None, :],
        "w2h": w2h.astype(bf16), "b2h": b2h[None, :],
        "w3h": hd["w3"].astype(bf16), "b3h": hd["b3"][None, :],
    }


# ==========================================================================
# Forward pass: 2 fused Pallas kernels.
# ==========================================================================
def pointnet_cls_forward(x, kp, *, views, k, head_tc=16):
    # x: (B, views, n_pts, 6) -- same layout the PyTorch module expects.
    B, V, N, C = x.shape
    assert V == views and C == 6
    assert N == 1024, "fc1 = Linear(1024, 512) is applied along the point axis"

    # channel-major bf16 input for the kernels: (B, V, 8, N); this tiny
    # transpose/pad of the raw input is the only XLA data movement in the net.
    xt = jnp.transpose(x, (0, 1, 3, 2))
    xt = jnp.pad(xt, ((0, 0), (0, 0), (0, 2), (0, 0))).astype(jnp.bfloat16)

    # Fused per-view conv1 + multi-view conv1, reduced over views; emitted
    # channel-major as (64, B*N) bf16 (exactly the head's input layout).
    loc = feat_mv_fused(xt, kp)                      # (64, B*1024) bf16

    # Head: fc1/fc2/fc3 along the point axis + log_softmax over dim 0.
    out = head_fused(loc, kp, batch=B, n=N, k=k, tc=head_tc)   # (64, B*k) f32
    return out.reshape(64, B, k).transpose(1, 0, 2)  # (B, 64, k), PyTorch order


if __name__ == "__main__":
    B, VIEWS, NPTS, CIN, K = 2, 2, 1024, 6, 2  # small but shape-consistent
    key = jax.random.PRNGKey(0)
    kx, kparams = jax.random.split(key)
    x = jax.random.normal(kx, (B, VIEWS, NPTS, CIN), jnp.float32)
    raw_params = init_params(kparams, VIEWS, K)
    kernel_params = prepare_params(raw_params, VIEWS)

    fwd = jax.jit(functools.partial(pointnet_cls_forward, views=VIEWS, k=K))
    out = jax.block_until_ready(fwd(x, kernel_params))
    assert out.shape == (B, 64, K) and out.dtype == jnp.float32
    assert bool(jnp.all(jnp.isfinite(out)))
    print("KERNEL_OK")
</pallas_src>

<mosaic_0001>
module attributes {stable_mosaic.version = 11 : i64} {
  func.func @_head_kernel(%arg0: i32, %arg1: memref<16x2048xbf16, #tpu.memory_space<vmem>>, %arg2: memref<1024x512xbf16, #tpu.memory_space<vmem>>, %arg3: memref<1x512xf32, #tpu.memory_space<vmem>>, %arg4: memref<512x256xbf16, #tpu.memory_space<vmem>>, %arg5: memref<1x256xf32, #tpu.memory_space<vmem>>, %arg6: memref<256x2xbf16, #tpu.memory_space<vmem>>, %arg7: memref<1x2xf32, #tpu.memory_space<vmem>>, %arg8: memref<16x4xf32, #tpu.memory_space<vmem>>) attributes {dimension_semantics = [#tpu.dimension_semantics<parallel>], iteration_bounds = array<i64: 4>, scalar_prefetch = 0 : i64, scratch_operands = 0 : i64, tpu.core_type = #tpu.core_type<tc>, window_params = [{transform_indices = @transform_0, window_bounds = array<i64: 16, 2048>}, {pipeline_mode = #tpu.pipeline_mode<synchronous>, transform_indices = @transform_1, window_bounds = array<i64: 1024, 512>}, {pipeline_mode = #tpu.pipeline_mode<synchronous>, transform_indices = @transform_2, window_bounds = array<i64: 1, 512>}, {pipeline_mode = #tpu.pipeline_mode<synchronous>, transform_indices = @transform_3, window_bounds = array<i64: 512, 256>}, {pipeline_mode = #tpu.pipeline_mode<synchronous>, transform_indices = @transform_4, window_bounds = array<i64: 1, 256>}, {pipeline_mode = #tpu.pipeline_mode<synchronous>, transform_indices = @transform_5, window_bounds = array<i64: 256, 2>}, {pipeline_mode = #tpu.pipeline_mode<synchronous>, transform_indices = @transform_6, window_bounds = array<i64: 1, 2>}, {transform_indices = @transform_7, window_bounds = array<i64: 16, 4>}]} {
    %c0 = arith.constant 0 : index
    %c0_0 = arith.constant 0 : index
    %0 = vector.load %arg1[%c0, %c0_0] : memref<16x2048xbf16, #tpu.memory_space<vmem>>, vector<16x1024xbf16>
    %c0_1 = arith.constant 0 : index
    %c0_2 = arith.constant 0 : index
    %1 = vector.load %arg2[%c0_1, %c0_2] : memref<1024x512xbf16, #tpu.memory_space<vmem>>, vector<1024x512xbf16>
    %cst = arith.constant dense<0.000000e+00> : vector<16x512xf32>
    %2 = tpu.matmul %0, %1, %cst {dimension_numbers = #tpu.dot_dimension_numbers<[1], [0], [0], [1], [0, 0, 1, 1], [], []>} : vector<16x1024xbf16>, vector<1024x512xbf16>, vector<16x512xf32> -> vector<16x512xf32>
    %c0_3 = arith.constant 0 : index
    %c0_4 = arith.constant 0 : index
    %3 = vector.load %arg3[%c0_3, %c0_4] : memref<1x512xf32, #tpu.memory_space<vmem>>, vector<1x512xf32>
    %4 = vector.broadcast %3 : vector<1x512xf32> to vector<16x512xf32>
    %5 = arith.addf %2, %4 : vector<16x512xf32>
    %cst_5 = arith.constant 0.000000e+00 : f32
    %6 = vector.broadcast %cst_5 : f32 to vector<16x512xf32>
    %7 = arith.maximumf %5, %6 : vector<16x512xf32>
    %8 = arith.truncf %7 : vector<16x512xf32> to vector<16x512xbf16>
    %c0_6 = arith.constant 0 : index
    %c0_7 = arith.constant 0 : index
    %9 = vector.load %arg4[%c0_6, %c0_7] : memref<512x256xbf16, #tpu.memory_space<vmem>>, vector<512x256xbf16>
    %cst_8 = arith.constant dense<0.000000e+00> : vector<16x256xf32>
    %10 = tpu.matmul %8, %9, %cst_8 {dimension_numbers = #tpu.dot_dimension_numbers<[1], [0], [0], [1], [0, 0, 1, 1], [], []>} : vector<16x512xbf16>, vector<512x256xbf16>, vector<16x256xf32> -> vector<16x256xf32>
    %c0_9 = arith.constant 0 : index
    %c0_10 = arith.constant 0 : index
    %11 = vector.load %arg5[%c0_9, %c0_10] : memref<1x256xf32, #tpu.memory_space<vmem>>, vector<1x256xf32>
    %12 = vector.broadcast %11 : vector<1x256xf32> to vector<16x256xf32>
    %13 = arith.addf %10, %12 : vector<16x256xf32>
    %cst_11 = arith.constant 0.000000e+00 : f32
    %14 = vector.broadcast %cst_11 : f32 to vector<16x256xf32>
    %15 = arith.maximumf %13, %14 : vector<16x256xf32>
    %16 = arith.truncf %15 : vector<16x256xf32> to vector<16x256xbf16>
    %c0_12 = arith.constant 0 : index
    %c0_13 = arith.constant 0 : index
    %17 = vector.load %arg6[%c0_12, %c0_13] : memref<256x2xbf16, #tpu.memory_space<vmem>>, vector<256x2xbf16>
    %cst_14 = arith.constant dense<0.000000e+00> : vector<16x2xf32>
    %18 = tpu.matmul %16, %17, %cst_14 {dimension_numbers = #tpu.dot_dimension_numbers<[1], [0], [0], [1], [0, 0, 1, 1], [], []>} : vector<16x256xbf16>, vector<256x2xbf16>, vector<16x2xf32> -> vector<16x2xf32>
    %c0_15 = arith.constant 0 : index
    %c0_16 = arith.constant 0 : index
    %19 = vector.load %arg7[%c0_15, %c0_16] : memref<1x2xf32, #tpu.memory_space<vmem>>, vector<1x2xf32>
    %20 = vector.broadcast %19 : vector<1x2xf32> to vector<16x2xf32>
    %21 = arith.addf %18, %20 : vector<16x2xf32>
    %c0_17 = arith.constant 0 : index
    %c1024 = arith.constant 1024 : index
    %22 = vector.load %arg1[%c0_17, %c1024] : memref<16x2048xbf16, #tpu.memory_space<vmem>>, vector<16x1024xbf16>
    %c0_18 = arith.constant 0 : index
    %c0_19 = arith.constant 0 : index
    %23 = vector.load %arg2[%c0_18, %c0_19] : memref<1024x512xbf16, #tpu.memory_space<vmem>>, vector<1024x512xbf16>
    %cst_20 = arith.constant dense<0.000000e+00> : vector<16x512xf32>
    %24 = tpu.matmul %22, %23, %cst_20 {dimension_numbers = #tpu.dot_dimension_numbers<[1], [0], [0], [1], [0, 0, 1, 1], [], []>} : vector<16x1024xbf16>, vector<1024x512xbf16>, vector<16x512xf32> -> vector<16x512xf32>
    %c0_21 = arith.constant 0 : index
    %c0_22 = arith.constant 0 : index
    %25 = vector.load %arg3[%c0_21, %c0_22] : memref<1x512xf32, #tpu.memory_space<vmem>>, vector<1x512xf32>
    %26 = vector.broadcast %25 : vector<1x512xf32> to vector<16x512xf32>
    %27 = arith.addf %24, %26 : vector<16x512xf32>
    %cst_23 = arith.constant 0.000000e+00 : f32
    %28 = vector.broadcast %cst_23 : f32 to vector<16x512xf32>
    %29 = arith.maximumf %27, %28 : vector<16x512xf32>
    %30 = arith.truncf %29 : vector<16x512xf32> to vector<16x512xbf16>
    %c0_24 = arith.constant 0 : index
    %c0_25 = arith.constant 0 : index
    %31 = vector.load %arg4[%c0_24, %c0_25] : memref<512x256xbf16, #tpu.memory_space<vmem>>, vector<512x256xbf16>
    %cst_26 = arith.constant dense<0.000000e+00> : vector<16x256xf32>
    %32 = tpu.matmul %30, %31, %cst_26 {dimension_numbers = #tpu.dot_dimension_numbers<[1], [0], [0], [1], [0, 0, 1, 1], [], []>} : vector<16x512xbf16>, vector<512x256xbf16>, vector<16x256xf32> -> vector<16x256xf32>
    %c0_27 = arith.constant 0 : index
    %c0_28 = arith.constant 0 : index
    %33 = vector.load %arg5[%c0_27, %c0_28] : memref<1x256xf32, #tpu.memory_space<vmem>>, vector<1x256xf32>
    %34 = vector.broadcast %33 : vector<1x256xf32> to vector<16x256xf32>
    %35 = arith.addf %32, %34 : vector<16x256xf32>
    %cst_29 = arith.constant 0.000000e+00 : f32
    %36 = vector.broadcast %cst_29 : f32 to vector<16x256xf32>
    %37 = arith.maximumf %35, %36 : vector<16x256xf32>
    %38 = arith.truncf %37 : vector<16x256xf32> to vector<16x256xbf16>
    %c0_30 = arith.constant 0 : index
    %c0_31 = arith.constant 0 : index
    %39 = vector.load %arg6[%c0_30, %c0_31] : memref<256x2xbf16, #tpu.memory_space<vmem>>, vector<256x2xbf16>
    %cst_32 = arith.constant dense<0.000000e+00> : vector<16x2xf32>
    %40 = tpu.matmul %38, %39, %cst_32 {dimension_numbers = #tpu.dot_dimension_numbers<[1], [0], [0], [1], [0, 0, 1, 1], [], []>} : vector<16x256xbf16>, vector<256x2xbf16>, vector<16x2xf32> -> vector<16x2xf32>
    %c0_33 = arith.constant 0 : index
    %c0_34 = arith.constant 0 : index
    %41 = vector.load %arg7[%c0_33, %c0_34] : memref<1x2xf32, #tpu.memory_space<vmem>>, vector<1x2xf32>
    %42 = vector.broadcast %41 : vector<1x2xf32> to vector<16x2xf32>
    %43 = arith.addf %40, %42 : vector<16x2xf32>
    %44 = arith.maximumf %21, %43 : vector<16x2xf32>
    %cst_35 = arith.constant 0.000000e+00 : f32
    %45 = vector.broadcast %cst_35 : f32 to vector<16x2xf32>
    %46 = arith.subf %21, %44 : vector<16x2xf32>
    %47 = math.exp %46 : vector<16x2xf32>
    %48 = arith.addf %45, %47 : vector<16x2xf32>
    %49 = arith.subf %43, %44 : vector<16x2xf32>
    %50 = math.exp %49 : vector<16x2xf32>
    %51 = arith.addf %48, %50 : vector<16x2xf32>
    %52 = math.log %51 : vector<16x2xf32>
    %53 = arith.addf %44, %52 : vector<16x2xf32>
    %54 = arith.subf %21, %53 : vector<16x2xf32>
    %55 = arith.subf %43, %53 : vector<16x2xf32>
    %56 = tpu.concatenate %54, %55 in 1 : vector<16x2xf32>, vector<16x2xf32> -> vector<16x4xf32>
    %c0_36 = arith.constant 0 : index
    %c0_37 = arith.constant 0 : index
    %57 = vector.load %arg8[%c0_36, %c0_37] : memref<16x4xf32, #tpu.memory_space<vmem>>, vector<16x4xf32>
    tpu.vector_store %arg8[%c0_36, %c0_37], %56 {strides = array<i32>} : memref<16x4xf32, #tpu.memory_space<vmem>>, vector<16x4xf32>,
    return
  }
  func.func @transform_0(%arg0: i32) -> (i32, i32) {
    %c0_i32 = arith.constant 0 : i32
    %c0_i32_0 = arith.constant 0 : i32
    return %arg0, %c0_i32 : i32, i32
  }
  func.func @transform_1(%arg0: i32) -> (i32, i32) {
    %c0_i32 = arith.constant 0 : i32
    %c0_i32_0 = arith.constant 0 : i32
    %c0_i32_1 = arith.constant 0 : i32
    return %c0_i32, %c0_i32_0 : i32, i32
  }
  func.func @transform_2(%arg0: i32) -> (i32, i32) {
    %c0_i32 = arith.constant 0 : i32
    %c0_i32_0 = arith.constant 0 : i32
    %c0_i32_1 = arith.constant 0 : i32
    return %c0_i32, %c0_i32_0 : i32, i32
  }
  func.func @transform_3(%arg0: i32) -> (i32, i32) {
    %c0_i32 = arith.constant 0 : i32
    %c0_i32_0 = arith.constant 0 : i32
    %c0_i32_1 = arith.constant 0 : i32
    return %c0_i32, %c0_i32_0 : i32, i32
  }
  func.func @transform_4(%arg0: i32) -> (i32, i32) {
    %c0_i32 = arith.constant 0 : i32
    %c0_i32_0 = arith.constant 0 : i32
    %c0_i32_1 = arith.constant 0 : i32
    return %c0_i32, %c0_i32_0 : i32, i32
  }
  func.func @transform_5(%arg0: i32) -> (i32, i32) {
    %c0_i32 = arith.constant 0 : i32
    %c0_i32_0 = arith.constant 0 : i32
    %c0_i32_1 = arith.constant 0 : i32
    return %c0_i32, %c0_i32_0 : i32, i32
  }
  func.func @transform_6(%arg0: i32) -> (i32, i32) {
    %c0_i32 = arith.constant 0 : i32
    %c0_i32_0 = arith.constant 0 : i32
    %c0_i32_1 = arith.constant 0 : i32
    return %c0_i32, %c0_i32_0 : i32, i32
  }
  func.func @transform_7(%arg0: i32) -> (i32, i32) {
    %c0_i32 = arith.constant 0 : i32
    %c0_i32_0 = arith.constant 0 : i32
    return %arg0, %c0_i32 : i32, i32
  }
}

module attributes {stable_mosaic.version = 11 : i64} {
  func.func @_feat_mv_kernel(%arg0: i32, %arg1: i32, %arg2: memref<1x1x8x1024xbf16, #tpu.memory_space<vmem>>, %arg3: memref<2x64x8xbf16, #tpu.memory_space<vmem>>, %arg4: memref<2x64x1xf32, #tpu.memory_space<vmem>>, %arg5: memref<2x64x64xbf16, #tpu.memory_space<vmem>>, %arg6: memref<64x1xf32, #tpu.memory_space<vmem>>, %arg7: memref<64x1024xbf16, #tpu.memory_space<vmem>>, %arg8: memref<64x1024xf32, #tpu.memory_space<vmem>>) attributes {dimension_semantics = [#tpu.dimension_semantics<parallel>, #tpu.dimension_semantics<arbitrary>], iteration_bounds = array<i64: 2, 2>, scalar_prefetch = 0 : i64, scratch_operands = 1 : i64, tpu.core_type = #tpu.core_type<tc>, window_params = [{transform_indices = @transform_0, window_bounds = array<i64: 1, 1, 8, 1024>}, {pipeline_mode = #tpu.pipeline_mode<synchronous>, transform_indices = @transform_1, window_bounds = array<i64: 2, 64, 8>}, {pipeline_mode = #tpu.pipeline_mode<synchronous>, transform_indices = @transform_2, window_bounds = array<i64: 2, 64, 1>}, {pipeline_mode = #tpu.pipeline_mode<synchronous>, transform_indices = @transform_3, window_bounds = array<i64: 2, 64, 64>}, {pipeline_mode = #tpu.pipeline_mode<synchronous>, transform_indices = @transform_4, window_bounds = array<i64: 64, 1>}, {transform_indices = @transform_5, window_bounds = array<i64: 64, 1024>}]} {
    %c0_i32 = arith.constant 0 : i32
    %0 = arith.cmpi eq, %arg1, %c0_i32 : i32
    %1 = arith.extui %0 : i1 to i32
    %c0_i32_0 = arith.constant 0 : i32
    %2 = arith.cmpi ne, %1, %c0_i32_0 : i32
    scf.if %2 {
      %cst_17 = arith.constant 0.000000e+00 : f32
      %27 = vector.broadcast %cst_17 : f32 to vector<64x1024xf32>
      %c0_18 = arith.constant 0 : index
      %c0_19 = arith.constant 0 : index
      %28 = vector.load %arg8[%c0_18, %c0_19] : memref<64x1024xf32, #tpu.memory_space<vmem>>, vector<64x1024xf32>
      tpu.vector_store %arg8[%c0_18, %c0_19], %27 {strides = array<i32>} : memref<64x1024xf32, #tpu.memory_space<vmem>>, vector<64x1024xf32>,
    } else {
    }
    %3 = arith.index_cast %arg1 : i32 to index
    %c0 = arith.constant 0 : index
    %c0_1 = arith.constant 0 : index
    %4 = vector.load %arg3[%3, %c0, %c0_1] : memref<2x64x8xbf16, #tpu.memory_space<vmem>>, vector<1x64x8xbf16>
    %5 = vector.shape_cast %4 : vector<1x64x8xbf16> to vector<64x8xbf16>
    %c0_2 = arith.constant 0 : index
    %c0_3 = arith.constant 0 : index
    %c0_4 = arith.constant 0 : index
    %c0_5 = arith.constant 0 : index
    %6 = vector.load %arg2[%c0_2, %c0_3, %c0_4, %c0_5] : memref<1x1x8x1024xbf16, #tpu.memory_space<vmem>>, vector<1x1x8x1024xbf16>
    %7 = vector.shape_cast %6 : vector<1x1x8x1024xbf16> to vector<8x1024xbf16>
    %cst = arith.constant dense<0.000000e+00> : vector<64x1024xf32>
    %8 = tpu.matmul %5, %7, %cst {dimension_numbers = #tpu.dot_dimension_numbers<[1], [0], [0], [1], [0, 0, 1, 1], [], []>} : vector<64x8xbf16>, vector<8x1024xbf16>, vector<64x1024xf32> -> vector<64x1024xf32>
    %9 = arith.index_cast %arg1 : i32 to index
    %c0_6 = arith.constant 0 : index
    %c0_7 = arith.constant 0 : index
    %10 = vector.load %arg4[%9, %c0_6, %c0_7] : memref<2x64x1xf32, #tpu.memory_space<vmem>>, vector<1x64x1xf32>
    %11 = vector.shape_cast %10 : vector<1x64x1xf32> to vector<64x1xf32>
    %12 = vector.broadcast %11 : vector<64x1xf32> to vector<64x1024xf32>
    %13 = arith.addf %8, %12 : vector<64x1024xf32>
    %cst_8 = arith.constant 0.000000e+00 : f32
    %14 = vector.broadcast %cst_8 : f32 to vector<64x1024xf32>
    %15 = arith.maximumf %13, %14 : vector<64x1024xf32>
    %c0_9 = arith.constant 0 : index
    %c0_10 = arith.constant 0 : index
    %16 = vector.load %arg8[%c0_9, %c0_10] : memref<64x1024xf32, #tpu.memory_space<vmem>>, vector<64x1024xf32>
    %17 = arith.index_cast %arg1 : i32 to index
    %c0_11 = arith.constant 0 : index
    %c0_12 = arith.constant 0 : index
    %18 = vector.load %arg5[%17, %c0_11, %c0_12] : memref<2x64x64xbf16, #tpu.memory_space<vmem>>, vector<1x64x64xbf16>
    %19 = vector.shape_cast %18 : vector<1x64x64xbf16> to vector<64x64xbf16>
    %20 = arith.truncf %15 : vector<64x1024xf32> to vector<64x1024xbf16>
    %cst_13 = arith.constant dense<0.000000e+00> : vector<64x1024xf32>
    %21 = tpu.matmul %19, %20, %cst_13 {dimension_numbers = #tpu.dot_dimension_numbers<[1], [0], [0], [1], [0, 0, 1, 1], [], []>} : vector<64x64xbf16>, vector<64x1024xbf16>, vector<64x1024xf32> -> vector<64x1024xf32>
    %22 = arith.addf %16, %21 : vector<64x1024xf32>
    %c0_14 = arith.constant 0 : index
    %c0_15 = arith.constant 0 : index
    %23 = vector.load %arg8[%c0_14, %c0_15] : memref<64x1024xf32, #tpu.memory_space<vmem>>, vector<64x1024xf32>
    tpu.vector_store %arg8[%c0_14, %c0_15], %22 {strides = array<i32>} : memref<64x1024xf32, #tpu.memory_space<vmem>>, vector<64x1024xf32>,
    %c1_i32 = arith.constant 1 : i32
    %24 = arith.cmpi eq, %arg1, %c1_i32 : i32
    %25 = arith.extui %24 : i1 to i32
    %c0_i32_16 = arith.constant 0 : i32
    %26 = arith.cmpi ne, %25, %c0_i32_16 : i32
    scf.if %26 {
      %c0_17 = arith.constant 0 : index
      %c0_18 = arith.constant 0 : index
      %27 = vector.load %arg8[%c0_17, %c0_18] : memref<64x1024xf32, #tpu.memory_space<vmem>>, vector<64x1024xf32>
      %c0_19 = arith.constant 0 : index
      %c0_20 = arith.constant 0 : index
      %28 = vector.load %arg6[%c0_19, %c0_20] : memref<64x1xf32, #tpu.memory_space<vmem>>, vector<64x1xf32>
      %29 = vector.broadcast %28 : vector<64x1xf32> to vector<64x1024xf32>
      %30 = arith.addf %27, %29 : vector<64x1024xf32>
      %cst_21 = arith.constant 0.000000e+00 : f32
      %31 = vector.broadcast %cst_21 : f32 to vector<64x1024xf32>
      %32 = arith.maximumf %30, %31 : vector<64x1024xf32>
      %33 = arith.truncf %32 : vector<64x1024xf32> to vector<64x1024xbf16>
      %c0_22 = arith.constant 0 : index
      %c0_23 = arith.constant 0 : index
      %34 = vector.load %arg7[%c0_22, %c0_23] : memref<64x1024xbf16, #tpu.memory_space<vmem>>, vector<64x1024xbf16>
      tpu.vector_store %arg7[%c0_22, %c0_23], %33 {strides = array<i32>} : memref<64x1024xbf16, #tpu.memory_space<vmem>>, vector<64x1024xbf16>,
    } else {
    }
    return
  }
  func.func @transform_0(%arg0: i32, %arg1: i32) -> (i32, i32, i32, i32) {
    %c0_i32 = arith.constant 0 : i32
    %c0_i32_0 = arith.constant 0 : i32
    %c0_i32_1 = arith.constant 0 : i32
    return %arg0, %arg1, %c0_i32, %c0_i32_0 : i32, i32, i32, i32
  }
  func.func @transform_1(%arg0: i32, %arg1: i32) -> (i32, i32, i32) {
    %c0_i32 = arith.constant 0 : i32
    %c0_i32_0 = arith.constant 0 : i32
    %c0_i32_1 = arith.constant 0 : i32
    %c0_i32_2 = arith.constant 0 : i32
    return %c0_i32, %c0_i32_0, %c0_i32_1 : i32, i32, i32
  }
  func.func @transform_2(%arg0: i32, %arg1: i32) -> (i32, i32, i32) {
    %c0_i32 = arith.constant 0 : i32
    %c0_i32_0 = arith.constant 0 : i32
    %c0_i32_1 = arith.constant 0 : i32
    %c0_i32_2 = arith.constant 0 : i32
    return %c0_i32, %c0_i32_0, %c0_i32_1 : i32, i32, i32
  }
  func.func @transform_3(%arg0: i32, %arg1: i32) -> (i32, i32, i32) {
    %c0_i32 = arith.constant 0 : i32
    %c0_i32_0 = arith.constant 0 : i32
    %c0_i32_1 = arith.constant 0 : i32
    %c0_i32_2 = arith.constant 0 : i32
    return %c0_i32, %c0_i32_0, %c0_i32_1 : i32, i32, i32
  }
  func.func @transform_4(%arg0: i32, %arg1: i32) -> (i32, i32) {
    %c0_i32 = arith.constant 0 : i32
    %c0_i32_0 = arith.constant 0 : i32
    %c0_i32_1 = arith.constant 0 : i32
    return %c0_i32, %c0_i32_0 : i32, i32
  }
  func.func @transform_5(%arg0: i32, %arg1: i32) -> (i32, i32) {
    %c0_i32 = arith.constant 0 : i32
    %c0_i32_0 = arith.constant 0 : i32
    return %c0_i32, %arg0 : i32, i32
  }
}

</mosaic_0001>

<llo_original>
// kernel: pointnet_cls_forward.2
$region0: #{pointnet_cls_forward.2}
  #allocation0 [shape = 'u32[]', space=smem, size = 0x4, offset = 0x4, fixed_abs, tag = 'smem constant byte address 0x4 - core index']
  #allocation1 [shape = 'u32[144,128]{1,0:T(1,128)}', space=vmem, size = 0x12000, scoped, tag = 'internal scratch']
  #allocation2 [shape = 'f32[64,1024]{1,0:T(8,128)}', space=vmem, size = 0x40000, scoped, tag = 'scratch operand']
  %s0 = inlined_call_operand.vmem [shape: bf16[2,2,8,1024], index: 0, kind: input, shape index: {}]
  %s1 = inlined_call_operand.vmem [shape: bf16[2,64,8], index: 1, kind: input, shape index: {}]
  %s2 = inlined_call_operand.vmem [shape: f32[2,64,1], index: 2, kind: input, shape index: {}]
  %s3 = inlined_call_operand.vmem [shape: bf16[2,64,64], index: 3, kind: input, shape index: {}]
  %s4 = inlined_call_operand.vmem [shape: f32[64,1], index: 4, kind: input, shape index: {}]
  %s5 = inlined_call_operand.vmem [shape: bf16[64,2048], index: 5, kind: output, shape index: {}]
  %s6 = sld [smem:[#allocation0]]
  $region80: #{pointnet_cls_forward.2} parent=0
    _
  %s8 = ssub.s32 1, %s6
  %s9 = scalar_select 0, %s8, %s6
  $region1: #{pointnet_cls_forward.2} parent=0
    #allocation3 [shape = 'u8[262144]{0}', space=vmem, size = 0x40000, scoped, tag = 'output window, operand 0']
    loop: start=0, step=1, limit=6
    $region2: #{pointnet_cls_forward.2} parent=1 // loop_pre_header
      _
    $region3: #{pointnet_cls_forward.2} parent=1 // loop_header
      %s11 = sphi 0, %s15
      %p12 = scmp.ge.s32.totalorder %s11, 6
      %s18 = sphi 0, %s30
      %s19 = sphi 0, %s26
      %s20 = sphi 0, %s18
      %s21 = sphi 0, %s19
      %s22 = sphi 0, %s20
      %s23 = sphi 0, %s21
      %s35 = sphi 0, %s37
      %s38 = sphi 0, %s35
      %s39 = sphi 0, %s38
      %s55 = sphi 0, %s39
      %s59 = sphi 0, %s59
      %s61 = sphi 0, %s59
      %s62 = sphi 0, %s61
      %s76 = sphi 0, %s62
      %s80 = sphi 0, %s80
      %s82 = sphi 0, %s80
      %s83 = sphi 0, %s82
      %s97 = sphi 0, %s83
      %s101 = sphi 0, %s101
      %s103 = sphi 0, %s101
      %s104 = sphi 0, %s103
      %s118 = sphi 0, %s104
      %s122 = sphi 0, %s122
      %s124 = sphi 0, %s122
      %s125 = sphi 0, %s124
      %s139 = sphi 0, %s125
      %s145 = sphi 0, %s147
      %s148 = sphi 0, %s145
      %s149 = sphi 0, %s148
      %s165 = sphi 0, %s149
    $region4: #{pointnet_cls_forward.2} parent=1 // loop_header_branch
      %14 = sbr.rel (%p12) target = $region8
    $region5: #{pointnet_cls_forward.2} parent=1 // loop_body
      %s16 = ssub.s32 %s11, 1
      %s17 = ssub.s32 %s11, 2
      %s24 = sadd.s32 1, %s19
      %p25 = scmp.ge.s32.totalorder %s24, 2
      %s26 = scalar_select %p25, 0, %s24
      %s27 = sadd.s32 1, %s18
      %s28 = scalar_select %p25, %s27, %s18
      %p29 = scmp.ge.s32.totalorder %s28, 2
      %s30 = scalar_select %p29, 0, %s28
      %s31 = ssub.s32 %s18, %s30
      %s32 = ssub.s32 %s19, %s26
      %s33 = sor.u32 %s31, %s32
      %p34 = scmp.eq.s32.totalorder %s33, 0
      %s36 = sadd.s32 %s35, 1
      %s37 = scalar_select %p34, %s35, %s36
      %p40 = pneg %p34
      %p41 = scmp.eq.s32.totalorder %s11, 3
      %p42 = por %p40, %p41
      %p43 = scmp.ne.s32.totalorder %s35, %s38
      %p44 = scmp.eq.s32.totalorder %s11, 0
      %p45 = por %p43, %p44
      %p46 = scmp.ne.s32.totalorder %s35, %s38
      %p47 = scmp.eq.s32.totalorder %s16, 3
      %p48 = por %p46, %p47
      %p49 = scmp.ne.s32.totalorder %s38, %s39
      %p50 = scmp.eq.s32.totalorder %s16, 0
      %p51 = por %p49, %p50
      %p52 = scmp.ne.s32.totalorder %s38, %s39
      %p53 = scmp.eq.s32.totalorder %s17, 3
      %p54 = por %p52, %p53
      %p56 = scmp.ne.s32.totalorder %s39, %s55
      %p57 = scmp.eq.s32.totalorder %s17, 0
      %p58 = por %p56, %p57
      %s60 = sadd.s32 %s59, 1
      %p63 = scmp.eq.s32.totalorder %s11, 3
      %p64 = scmp.ne.s32.totalorder %s59, %s61
      %p65 = scmp.eq.s32.totalorder %s11, 0
      %p66 = por %p64, %p65
      %p67 = scmp.ne.s32.totalorder %s59, %s61
      %p68 = scmp.eq.s32.totalorder %s16, 3
      %p69 = por %p67, %p68
      %p70 = scmp.ne.s32.totalorder %s61, %s62
      %p71 = scmp.eq.s32.totalorder %s16, 0
      %p72 = por %p70, %p71
      %p73 = scmp.ne.s32.totalorder %s61, %s62
      %p74 = scmp.eq.s32.totalorder %s17, 3
      %p75 = por %p73, %p74
      %p77 = scmp.ne.s32.totalorder %s62, %s76
      %p78 = scmp.eq.s32.totalorder %s17, 0
      %p79 = por %p77, %p78
      %s81 = sadd.s32 %s80, 1
      %p84 = scmp.eq.s32.totalorder %s11, 3
      %p85 = scmp.ne.s32.totalorder %s80, %s82
      %p86 = scmp.eq.s32.totalorder %s11, 0
      %p87 = por %p85, %p86
      %p88 = scmp.ne.s32.totalorder %s80, %s82
      %p89 = scmp.eq.s32.totalorder %s16, 3
      %p90 = por %p88, %p89
      %p91 = scmp.ne.s32.totalorder %s82, %s83
      %p92 = scmp.eq.s32.totalorder %s16, 0
      %p93 = por %p91, %p92
      %p94 = scmp.ne.s32.totalorder %s82, %s83
      %p95 = scmp.eq.s32.totalorder %s17, 3
      %p96 = por %p94, %p95
      %p98 = scmp.ne.s32.totalorder %s83, %s97
      %p99 = scmp.eq.s32.totalorder %s17, 0
      %p100 = por %p98, %p99
      %s102 = sadd.s32 %s101, 1
      %p105 = scmp.eq.s32.totalorder %s11, 3
      %p106 = scmp.ne.s32.totalorder %s101, %s103
      %p107 = scmp.eq.s32.totalorder %s11, 0
      %p108 = por %p106, %p107
      %p109 = scmp.ne.s32.totalorder %s101, %s103
      %p110 = scmp.eq.s32.totalorder %s16, 3
      %p111 = por %p109, %p110
      %p112 = scmp.ne.s32.totalorder %s103, %s104
      %p113 = scmp.eq.s32.totalorder %s16, 0
      %p114 = por %p112, %p113
      %p115 = scmp.ne.s32.totalorder %s103, %s104
      %p116 = scmp.eq.s32.totalorder %s17, 3
      %p117 = por %p115, %p116
      %p119 = scmp.ne.s32.totalorder %s104, %s118
      %p120 = scmp.eq.s32.totalorder %s17, 0
      %p121 = por %p119, %p120
      %s123 = sadd.s32 %s122, 1
      %p126 = scmp.eq.s32.totalorder %s11, 3
      %p127 = scmp.ne.s32.totalorder %s122, %s124
      %p128 = scmp.eq.s32.totalorder %s11, 0
      %p129 = por %p127, %p128
      %p130 = scmp.ne.s32.totalorder %s122, %s124
      %p131 = scmp.eq.s32.totalorder %s16, 3
      %p132 = por %p130, %p131
      %p133 = scmp.ne.s32.totalorder %s124, %s125
      %p134 = scmp.eq.s32.totalorder %s16, 0
      %p135 = por %p133, %p134
      %p136 = scmp.ne.s32.totalorder %s124, %s125
      %p137 = scmp.eq.s32.totalorder %s17, 3
      %p138 = por %p136, %p137
      %p140 = scmp.ne.s32.totalorder %s125, %s139
      %p141 = scmp.eq.s32.totalorder %s17, 0
      %p142 = por %p140, %p141
      %s143 = ssub.s32 %s18, %s30
      %p144 = scmp.eq.s32.totalorder %s143, 0
      %s146 = sadd.s32 %s145, 1
      %s147 = scalar_select %p144, %s145, %s146
      %p150 = pneg %p144
      %p151 = scmp.eq.s32.totalorder %s11, 3
      %p152 = por %p150, %p151
      %p153 = scmp.ne.s32.totalorder %s145, %s148
      %p154 = scmp.eq.s32.totalorder %s11, 0
      %p155 = por %p153, %p154
      %p156 = scmp.ne.s32.totalorder %s145, %s148
      %p157 = scmp.eq.s32.totalorder %s16, 3
      %p158 = por %p156, %p157
      %p159 = scmp.ne.s32.totalorder %s148, %s149
      %p160 = scmp.eq.s32.totalorder %s16, 0
      %p161 = por %p159, %p160
      %p162 = scmp.ne.s32.totalorder %s148, %s149
      %p163 = scmp.eq.s32.totalorder %s17, 3
      %p164 = por %p162, %p163
      %p166 = scmp.ne.s32.totalorder %s149, %s165
      %p167 = scmp.eq.s32.totalorder %s17, 0
      %p168 = por %p166, %p167
      %p169 = scmp.le.s32.totalorder 1, %s11
      %p170 = scmp.lt.s32.totalorder %s11, 5
      %p171 = pnand %p169, %p170
      %p172 = pneg %p171
      // Predicated region
      $region9: #{pointnet_cls_forward.2} parent=5 // pred_check
        _
      $region10: #{pointnet_cls_forward.2} parent=5 // pred_check_branch
        %174 = sbr.rel (%p171) target = $region12
      $region11: #{pointnet_cls_forward.2} parent=5 // pred_region
        %s175 = ssub.s32 %s11, 1
        // Predicated region
        $region13: #{pointnet_cls_forward.2} parent=11 // pred_check
          %p176 = pneg %p72
        $region14: #{pointnet_cls_forward.2} parent=11 // pred_check_branch
          %178 = sbr.rel (%p176) target = $region16
        $region15: #{pointnet_cls_forward.2} parent=11 // pred_region
          _
        $region16: #{pointnet_cls_forward.2} parent=11 // pred_fallthru
          _
        // Predicated region
        $region17: #{pointnet_cls_forward.2} parent=11 // pred_check
          %p179 = pneg %p93
        $region18: #{pointnet_cls_forward.2} parent=11 // pred_check_branch
          %181 = sbr.rel (%p179) target = $region20
        $region19: #{pointnet_cls_forward.2} parent=11 // pred_region
          _
        $region20: #{pointnet_cls_forward.2} parent=11 // pred_fallthru
          _
        // Predicated region
        $region21: #{pointnet_cls_forward.2} parent=11 // pred_check
          %p182 = pneg %p114
        $region22: #{pointnet_cls_forward.2} parent=11 // pred_check_branch
          %184 = sbr.rel (%p182) target = $region24
        $region23: #{pointnet_cls_forward.2} parent=11 // pred_region
          _
        $region24: #{pointnet_cls_forward.2} parent=11 // pred_fallthru
          _
        // Predicated region
        $region25: #{pointnet_cls_forward.2} parent=11 // pred_check
          %p185 = pneg %p135
        $region26: #{pointnet_cls_forward.2} parent=11 // pred_check_branch
          %187 = sbr.rel (%p185) target = $region28
        $region27: #{pointnet_cls_forward.2} parent=11 // pred_region
          _
        $region28: #{pointnet_cls_forward.2} parent=11 // pred_fallthru
          _
      $region12: #{pointnet_cls_forward.2} parent=5 // pred_fallthru
        _
      %p188 = scmp.lt.s32.totalorder %s11, 4
      // Predicated region
      $region29: #{pointnet_cls_forward.2} parent=5 // pred_check
        %p189 = pneg %p188
      $region30: #{pointnet_cls_forward.2} parent=5 // pred_check_branch
        %191 = sbr.rel (%p189) target = $region32
      $region31: #{pointnet_cls_forward.2} parent=5 // pred_region
        // Predicated region
        $region33: #{pointnet_cls_forward.2} parent=31 // pred_check
          %p192 = pneg %p45
        $region34: #{pointnet_cls_forward.2} parent=31 // pred_check_branch
          %194 = sbr.rel (%p192) target = $region36
        $region35: #{pointnet_cls_forward.2} parent=31 // pred_region
          %p195 = scmp.lt.s32.totalorder %s18, 1
          %s196 = scalar_select %p195, %s18, 1
          %p197 = scmp.lt.s32.totalorder %s19, 1
          %s198 = scalar_select %p197, %s19, 1
          %s199 = smul.addr %s198, 8
          %s200 = smul.addr %s196, 16
          %s201 = sadd.s32 %s199, %s200
          %s202 = smul.addr %s201, 4
          %s203 = scalar_lea.vmem %s0, %s202
        $region36: #{pointnet_cls_forward.2} parent=31 // pred_fallthru
          _
      $region32: #{pointnet_cls_forward.2} parent=5 // pred_fallthru
        _
      %p204 = scmp.le.s32.totalorder 1, %s11
      %p205 = scmp.lt.s32.totalorder %s11, 5
      %p206 = pnand %p204, %p205
      %p207 = pneg %p206
      // Predicated region
      $region37: #{pointnet_cls_forward.2} parent=5 // pred_check
        _
      $region38: #{pointnet_cls_forward.2} parent=5 // pred_check_branch
        %209 = sbr.rel (%p206) target = $region40
      $region39: #{pointnet_cls_forward.2} parent=5 // pred_region
        %s210 = ssub.s32 %s11, 1
        %p211 = scmp.lt.s32.totalorder %s20, 1
        %s212 = scalar_select %p211, %s20, 1
        %p213 = scmp.lt.s32.totalorder %s21, 1
        %s214 = scalar_select %p213, %s21, 1
        %s215 = smul.addr %s214, 8
        %s216 = smul.addr %s212, 16
        %s217 = sadd.s32 %s215, %s216
        %s218 = smul.addr %s217, 4
        %s219 = scalar_lea.vmem %s0, %s218
        %p220 = pneg %p51
        %p221 = pneg %p48
        %p222 = pneg %p72
        %p223 = pneg %p69
        %p224 = pneg %p93
        %p225 = pneg %p90
        %p226 = pneg %p114
        %p227 = pneg %p111
        %p228 = pneg %p135
        %p229 = pneg %p132
        %p230 = pneg %p161
        %p231 = pneg %p158
        %s232 = sand.u32 %s148, 1
        %s233 = sand.u32 %s148, 1
        %s234 = smul.addr %s233, 256
        %s235 = scalar_lea.vmem [#allocation3], %s234
        %p236 = scmp.lt.s32.totalorder %s20, 1
        %s237 = scalar_select %p236, %s20, 1
        %p238 = scmp.lt.s32.totalorder %s21, 1
        %s239 = scalar_select %p238, %s21, 1
        %s240 = smul.addr %s239, 8
        %s241 = smul.addr %s237, 16
        %s242 = sadd.s32 %s240, %s241
        %s243 = smul.addr %s242, 4
        %s244 = scalar_lea.vmem %s0, %s243
        %s245 = smul.u32 8, %s20
        %p247 = scmp.eq.s32.totalorder %s21, 0
        // Predicated region
        $region41: #{pointnet_cls_forward.2} parent=39 // pred_check
          %p248 = pneg %p247
        $region42: #{pointnet_cls_forward.2} parent=39 // pred_check_branch
          %250 = sbr.rel (%p248) target = $region44
        $region43: #{pointnet_cls_forward.2} parent=39 // pred_region
          %251 = vst [vmem:[#allocation2] sm:$0xff] 0.0
          %252 = vst [vmem:[#allocation2 + $0x8] sm:$0xff] 0.0
          %253 = vst [vmem:[#allocation2 + $0x10] sm:$0xff] 0.0
          %254 = vst [vmem:[#allocation2 + $0x18] sm:$0xff] 0.0
          %255 = vst [vmem:[#allocation2 + $0x20] sm:$0xff] 0.0
          %256 = vst [vmem:[#allocation2 + $0x28] sm:$0xff] 0.0
          %257 = vst [vmem:[#allocation2 + $0x30] sm:$0xff] 0.0
          %258 = vst [vmem:[#allocation2 + $0x38] sm:$0xff] 0.0
          %259 = vst [vmem:[#allocation2 + $0x40] sm:$0xff] 0.0
          %260 = vst [vmem:[#allocation2 + $0x48] sm:$0xff] 0.0
          %261 = vst [vmem:[#allocation2 + $0x50] sm:$0xff] 0.0
          %262 = vst [vmem:[#allocation2 + $0x58] sm:$0xff] 0.0
          %263 = vst [vmem:[#allocation2 + $0x60] sm:$0xff] 0.0
          %264 = vst [vmem:[#allocation2 + $0x68] sm:$0xff] 0.0
          %265 = vst [vmem:[#allocation2 + $0x70] sm:$0xff] 0.0
          %266 = vst [vmem:[#allocation2 + $0x78] sm:$0xff] 0.0
          %267 = vst [vmem:[#allocation2 + $0x80] sm:$0xff] 0.0
          %268 = vst [vmem:[#allocation2 + $0x88] sm:$0xff] 0.0
          %269 = vst [vmem:[#allocation2 + $0x90] sm:$0xff] 0.0
          %270 = vst [vmem:[#allocation2 + $0x98] sm:$0xff] 0.0
          %271 = vst [vmem:[#allocation2 + $0xa0] sm:$0xff] 0.0
          %272 = vst [vmem:[#allocation2 + $0xa8] sm:$0xff] 0.0
          %273 = vst [vmem:[#allocation2 + $0xb0] sm:$0xff] 0.0
          %274 = vst [vmem:[#allocation2 + $0xb8] sm:$0xff] 0.0
          %275 = vst [vmem:[#allocation2 + $0xc0] sm:$0xff] 0.0
          %276 = vst [vmem:[#allocation2 + $0xc8] sm:$0xff] 0.0
          %277 = vst [vmem:[#allocation2 + $0xd0] sm:$0xff] 0.0
          %278 = vst [vmem:[#allocation2 + $0xd8] sm:$0xff] 0.0
          %279 = vst [vmem:[#allocation2 + $0xe0] sm:$0xff] 0.0
          %280 = vst [vmem:[#allocation2 + $0xe8] sm:$0xff] 0.0
          %281 = vst [vmem:[#allocation2 + $0xf0] sm:$0xff] 0.0
          %282 = vst [vmem:[#allocation2 + $0xf8] sm:$0xff] 0.0
          %283 = vst [vmem:[#allocation2 + $0x100] sm:$0xff] 0.0
          %284 = vst [vmem:[#allocation2 + $0x108] sm:$0xff] 0.0
          %285 = vst [vmem:[#allocation2 + $0x110] sm:$0xff] 0.0
          %286 = vst [vmem:[#allocation2 + $0x118] sm:$0xff] 0.0
          %287 = vst [vmem:[#allocation2 + $0x120] sm:$0xff] 0.0
          %288 = vst [vmem:[#allocation2 + $0x128] sm:$0xff] 0.0
          %289 = vst [vmem:[#allocation2 + $0x130] sm:$0xff] 0.0
          %290 = vst [vmem:[#allocation2 + $0x138] sm:$0xff] 0.0
          %291 = vst [vmem:[#allocation2 + $0x140] sm:$0xff] 0.0
          %292 = vst [vmem:[#allocation2 + $0x148] sm:$0xff] 0.0
          %293 = vst [vmem:[#allocation2 + $0x150] sm:$0xff] 0.0
          %294 = vst [vmem:[#allocation2 + $0x158] sm:$0xff] 0.0
          %295 = vst [vmem:[#allocation2 + $0x160] sm:$0xff] 0.0
          %296 = vst [vmem:[#allocation2 + $0x168] sm:$0xff] 0.0
          %297 = vst [vmem:[#allocation2 + $0x170] sm:$0xff] 0.0
          %298 = vst [vmem:[#allocation2 + $0x178] sm:$0xff] 0.0
          %299 = vst [vmem:[#allocation2 + $0x180] sm:$0xff] 0.0
          %300 = vst [vmem:[#allocation2 + $0x188] sm:$0xff] 0.0
          %301 = vst [vmem:[#allocation2 + $0x190] sm:$0xff] 0.0
          %302 = vst [vmem:[#allocation2 + $0x198] sm:$0xff] 0.0
          %303 = vst [vmem:[#allocation2 + $0x1a0] sm:$0xff] 0.0
          %304 = vst [vmem:[#allocation2 + $0x1a8] sm:$0xff] 0.0
          %305 = vst [vmem:[#allocation2 + $0x1b0] sm:$0xff] 0.0
          %306 = vst [vmem:[#allocation2 + $0x1b8] sm:$0xff] 0.0
          %307 = vst [vmem:[#allocation2 + $0x1c0] sm:$0xff] 0.0
          %308 = vst [vmem:[#allocation2 + $0x1c8] sm:$0xff] 0.0
          %309 = vst [vmem:[#allocation2 + $0x1d0] sm:$0xff] 0.0
          %310 = vst [vmem:[#allocation2 + $0x1d8] sm:$0xff] 0.0
          %311 = vst [vmem:[#allocation2 + $0x1e0] sm:$0xff] 0.0
          %312 = vst [vmem:[#allocation2 + $0x1e8] sm:$0xff] 0.0
          %313 = vst [vmem:[#allocation2 + $0x1f0] sm:$0xff] 0.0
          %314 = vst [vmem:[#allocation2 + $0x1f8] sm:$0xff] 0.0
        $region44: #{pointnet_cls_forward.2} parent=39 // pred_fallthru
          _
        %s315 = smul.u32 %s21, 8
        %s316 = smul.addr %s315, 4
        %s317 = scalar_lea.vmem %s1, %s316
        %v318 = vld [vmem:[%s317] sm:$0xf]
        %v319 = vld [vmem:[%s317 + $0x4] sm:$0xf]
        %v320 = vld [vmem:[%s317 + $0x8] sm:$0xf]
        %v321 = vld [vmem:[%s317 + $0xc] sm:$0xf]
        %v322 = vld [vmem:[%s317 + $0x10] sm:$0xf]
        %v323 = vld [vmem:[%s317 + $0x14] sm:$0xf]
        %v324 = vld [vmem:[%s317 + $0x18] sm:$0xf]
        %v325 = vld [vmem:[%s317 + $0x1c] sm:$0xf]
        %v326 = vld [vmem:[%s244] sm:$0xff]
        %v327 = vld [vmem:[%s244 + $0x8] sm:$0xff]
        %v328 = vld [vmem:[%s244 + $0x10] sm:$0xff]
        %v329 = vld [vmem:[%s244 + $0x18] sm:$0xff]
        %s330 = smul.u32 %s21, 64
        %s331 = scalar_lea.vmem %s2, %s330
        %v332 = vld [vmem:[%s331] sm:$0xff]
        %v333 = vld [vmem:[%s331 + $0x8] sm:$0xff]
        %v334 = vld [vmem:[%s331 + $0x10] sm:$0xff]
        %v335 = vld [vmem:[%s331 + $0x18] sm:$0xff]
        %v336 = vld [vmem:[%s331 + $0x20] sm:$0xff]
        %v337 = vld [vmem:[%s331 + $0x28] sm:$0xff]
        %v338 = vld [vmem:[%s331 + $0x30] sm:$0xff]
        %v339 = vld [vmem:[%s331 + $0x38] sm:$0xff]
        %341 = vset.pattern.permute.xlu0 0
        %342 = vperm.xlu0 %341, %v332
        %v343 = vpop.permute.xlu0 %342
        %346 = vset.pattern.permute.xlu0 0
        %347 = vperm.xlu0 %346, %v333
        %v348 = vpop.permute.xlu0 %347
        %351 = vset.pattern.permute.xlu0 0
        %352 = vperm.xlu0 %351, %v334
        %v353 = vpop.permute.xlu0 %352
        %356 = vset.pattern.permute.xlu0 0
        %357 = vperm.xlu0 %356, %v335
        %v358 = vpop.permute.xlu0 %357
        %361 = vset.pattern.permute.xlu0 0
        %362 = vperm.xlu0 %361, %v336
        %v363 = vpop.permute.xlu0 %362
        %366 = vset.pattern.permute.xlu0 0
        %367 = vperm.xlu0 %366, %v337
        %v368 = vpop.permute.xlu0 %367
        %371 = vset.pattern.permute.xlu0 0
        %372 = vperm.xlu0 %371, %v338
        %v373 = vpop.permute.xlu0 %372
        %376 = vset.pattern.permute.xlu0 0
        %377 = vperm.xlu0 %376, %v339
        %v378 = vpop.permute.xlu0 %377
        %v388 = vunpack.c.l.b16 %v318
        %v389 = vunpack.c.l.b16 %v319
        %v390 = vunpack.c.l.b16 %v320
        %v391 = vunpack.c.l.b16 %v321
        %v392 = vunpack.c.l.b16 %v322
        %v393 = vunpack.c.l.b16 %v323
        %v394 = vunpack.c.l.b16 %v324
        %v395 = vunpack.c.l.b16 %v325
        %v396 = vpack.c.b16 %v389, %v388
        %v397 = vpack.c.b16 %v391, %v390
        %v398 = vpack.c.b16 %v393, %v392
        %v399 = vpack.c.b16 %v395, %v394
        %v404 = vunpack.c.l.b16 %v326
        %v405 = vunpack.c.h.b16 %v326
        %v406 = vunpack.c.l.b16 %v327
        %v407 = vunpack.c.h.b16 %v327
        %v408 = vunpack.c.l.b16 %v328
        %v409 = vunpack.c.h.b16 %v328
        %v410 = vunpack.c.l.b16 %v329
        %v411 = vunpack.c.h.b16 %v329
        %v412 = vpack.c.b16 %v404, %v404
        %v413 = vpack.c.b16 %v405, %v405
        %v414 = vpack.c.b16 %v406, %v406
        %v415 = vpack.c.b16 %v407, %v407
        %v416 = vpack.c.b16 %v408, %v408
        %v417 = vpack.c.b16 %v409, %v409
        %v418 = vpack.c.b16 %v410, %v410
        %v419 = vpack.c.b16 %v411, %v411
        %vm420 = vcmask 64512
        %v422 = vsel %vm420, %v396, 0
        %v425 = vsel %vm420, %v397, 0
        %v428 = vsel %vm420, %v398, 0
        %v431 = vsel %vm420, %v399, 0
        %vm433 = vcmask 1043456
        %v435 = vsel %vm433, %v412, 0
        %v438 = vsel %vm433, %v413, 0
        %v441 = vsel %vm433, %v414, 0
        %v444 = vsel %vm433, %v415, 0
        %v447 = vsel %vm433, %v416, 0
        %v450 = vsel %vm433, %v417, 0
        %v453 = vsel %vm433, %v418, 0
        %v456 = vsel %vm433, %v419, 0
        %458 = vmatprep.subr.bf16.mxu0 %v438
        %459 = vmatpush1.bf16.msra.mxu0 %v435
        %460 = vmatprep.subr.bf16.mxu0 0
        %461 = vmatpush1.bf16.msra.mxu0 0
        %462 = vmatprep.subr.bf16.mxu0 0
        %463 = vmatpush1.bf16.msra.mxu0 0
        %464 = vmatprep.subr.bf16.mxu0 0
        %465 = vmatpush1.bf16.msra.mxu0 0
        %466 = vmatprep.subr.bf16.mxu0 0
        %467 = vmatpush1.bf16.msra.mxu0 0
        %468 = vmatprep.subr.bf16.mxu0 0
        %469 = vmatpush1.bf16.msra.mxu0 0
        %470 = vmatprep.subr.bf16.mxu0 0
        %471 = vmatpush1.bf16.msra.mxu0 0
        %472 = vmatprep.subr.bf16.mxu0 0
        %473 = vmatpush1.bf16.msra.mxu0 0
        %474 = vmatprep.subr.bf16.mxu0 0
        %475 = vmatpush1.bf16.msra.mxu0 0
        %476 = vmatprep.subr.bf16.mxu0 0
        %477 = vmatpush1.bf16.msra.mxu0 0
        %478 = vmatprep.subr.bf16.mxu0 0
        %479 = vmatpush1.bf16.msra.mxu0 0
        %480 = vmatprep.subr.bf16.mxu0 0
        %481 = vmatpush1.bf16.msra.mxu0 0
        %482 = vmatprep.subr.bf16.mxu0 0
        %483 = vmatpush1.bf16.msra.mxu0 0
        %484 = vmatprep.subr.bf16.mxu0 0
        %485 = vmatpush1.bf16.msra.mxu0 0
        %486 = vmatprep.subr.bf16.mxu0 0
        %487 = vmatpush1.bf16.msra.mxu0 0
        %488 = vmatprep.subr.bf16.mxu0 0
        %489 = vmatpush1.bf16.msra.mxu0 0
        %490 = vmatprep.mubr.bf16.mxu0 0
        %491 = vmatmul.mubr.bf16.gmra.mrb[0].mxu0 %v422
        %v492 = vpop.f32.mrb[0].mxu0
        %v493 = vadd.f32 %v343, %v492
        %v494 = vpop.f32.mrb[0].mxu0
        %v495 = vadd.f32 %v343, %v494
        %v496 = vpop.f32.mrb[0].mxu0
        %v497 = vadd.f32 %v348, %v496
        %v498 = vpop.f32.mrb[0].mxu0
        %v499 = vadd.f32 %v348, %v498
        %500 = vmatprep.mubr.bf16.mxu0 0
        %501 = vmatmul.mubr.bf16.gmra.mrb[0].mxu0 %v425
        %v502 = vpop.f32.mrb[0].mxu0
        %v503 = vadd.f32 %v353, %v502
        %v504 = vpop.f32.mrb[0].mxu0
        %v505 = vadd.f32 %v353, %v504
        %v506 = vpop.f32.mrb[0].mxu0
        %v507 = vadd.f32 %v358, %v506
        %v508 = vpop.f32.mrb[0].mxu0
        %v509 = vadd.f32 %v358, %v508
        %510 = vmatprep.mubr.bf16.mxu0 0
        %511 = vmatmul.mubr.bf16.gmra.mrb[0].mxu0 %v428
        %v512 = vpop.f32.mrb[0].mxu0
        %v513 = vadd.f32 %v363, %v512
        %v514 = vpop.f32.mrb[0].mxu0
        %v515 = vadd.f32 %v363, %v514
        %v516 = vpop.f32.mrb[0].mxu0
        %v517 = vadd.f32 %v368, %v516
        %v518 = vpop.f32.mrb[0].mxu0
        %v519 = vadd.f32 %v368, %v518
        %520 = vmatprep.mubr.bf16.mxu0 0
        %521 = vmatmul.mubr.bf16.gmra.mrb[0].mxu0 %v431
        %v522 = vpop.f32.mrb[0].mxu0
        %v523 = vadd.f32 %v373, %v522
        %v524 = vpop.f32.mrb[0].mxu0
        %v525 = vadd.f32 %v373, %v524
        %v526 = vpop.f32.mrb[0].mxu0
        %v527 = vadd.f32 %v378, %v526
        %v528 = vpop.f32.mrb[0].mxu0
        %v529 = vadd.f32 %v378, %v528
        %530 = vdwg.mxu0
        %531 = vmatprep.subr.bf16.mxu0 %v444
        %532 = vmatpush1.bf16.msra.mxu0 %v441
        %533 = vmatprep.subr.bf16.mxu0 0
        %534 = vmatpush1.bf16.msra.mxu0 0
        %535 = vmatprep.subr.bf16.mxu0 0
        %536 = vmatpush1.bf16.msra.mxu0 0
        %537 = vmatprep.subr.bf16.mxu0 0
        %538 = vmatpush1.bf16.msra.mxu0 0
        %539 = vmatprep.subr.bf16.mxu0 0
        %540 = vmatpush1.bf16.msra.mxu0 0
        %541 = vmatprep.subr.bf16.mxu0 0
        %542 = vmatpush1.bf16.msra.mxu0 0
        %543 = vmatprep.subr.bf16.mxu0 0
        %544 = vmatpush1.bf16.msra.mxu0 0
        %545 = vmatprep.subr.bf16.mxu0 0
        %546 = vmatpush1.bf16.msra.mxu0 0
        %547 = vmatprep.subr.bf16.mxu0 0
        %548 = vmatpush1.bf16.msra.mxu0 0
        %549 = vmatprep.subr.bf16.mxu0 0
        %550 = vmatpush1.bf16.msra.mxu0 0
        %551 = vmatprep.subr.bf16.mxu0 0
        %552 = vmatpush1.bf16.msra.mxu0 0
        %553 = vmatprep.subr.bf16.mxu0 0
        %554 = vmatpush1.bf16.msra.mxu0 0
        %555 = vmatprep.subr.bf16.mxu0 0
        %556 = vmatpush1.bf16.msra.mxu0 0
        %557 = vmatprep.subr.bf16.mxu0 0
        %558 = vmatpush1.bf16.msra.mxu0 0
        %559 = vmatprep.subr.bf16.mxu0 0
        %560 = vmatpush1.bf16.msra.mxu0 0
        %561 = vmatprep.subr.bf16.mxu0 0
        %562 = vmatpush1.bf16.msra.mxu0 0
        %563 = vmatprep.mubr.bf16.mxu0 0
        %564 = vmatmul.mubr.bf16.gmra.mrb[0].mxu0 %v422
        %v565 = vpop.f32.mrb[0].mxu0
        %v566 = vadd.f32 %v343, %v565
        %v567 = vpop.f32.mrb[0].mxu0
        %v568 = vadd.f32 %v343, %v567
        %v569 = vpop.f32.mrb[0].mxu0
        %v570 = vadd.f32 %v348, %v569
        %v571 = vpop.f32.mrb[0].mxu0
        %v572 = vadd.f32 %v348, %v571
        %573 = vmatprep.mubr.bf16.mxu0 0
        %574 = vmatmul.mubr.bf16.gmra.mrb[0].mxu0 %v425
        %v575 = vpop.f32.mrb[0].mxu0
        %v576 = vadd.f32 %v353, %v575
        %v577 = vpop.f32.mrb[0].mxu0
        %v578 = vadd.f32 %v353, %v577
        %v579 = vpop.f32.mrb[0].mxu0
        %v580 = vadd.f32 %v358, %v579
        %v581 = vpop.f32.mrb[0].mxu0
        %v582 = vadd.f32 %v358, %v581
        %583 = vmatprep.mubr.bf16.mxu0 0
        %584 = vmatmul.mubr.bf16.gmra.mrb[0].mxu0 %v428
        %v585 = vpop.f32.mrb[0].mxu0
        %v586 = vadd.f32 %v363, %v585
        %v587 = vpop.f32.mrb[0].mxu0
        %v588 = vadd.f32 %v363, %v587
        %v589 = vpop.f32.mrb[0].mxu0
        %v590 = vadd.f32 %v368, %v589
        %v591 = vpop.f32.mrb[0].mxu0
        %v592 = vadd.f32 %v368, %v591
        %593 = vmatprep.mubr.bf16.mxu0 0
        %594 = vmatmul.mubr.bf16.gmra.mrb[0].mxu0 %v431
        %v595 = vpop.f32.mrb[0].mxu0
        %v596 = vadd.f32 %v373, %v595
        %v597 = vpop.f32.mrb[0].mxu0
        %v598 = vadd.f32 %v373, %v597
        %v599 = vpop.f32.mrb[0].mxu0
        %v600 = vadd.f32 %v378, %v599
        %v601 = vpop.f32.mrb[0].mxu0
        %v602 = vadd.f32 %v378, %v601
        %603 = vdwg.mxu0
        %604 = vmatprep.subr.bf16.mxu0 %v450
        %605 = vmatpush1.bf16.msra.mxu0 %v447
        %606 = vmatprep.subr.bf16.mxu0 0
        %607 = vmatpush1.bf16.msra.mxu0 0
        %608 = vmatprep.subr.bf16.mxu0 0
        %609 = vmatpush1.bf16.msra.mxu0 0
        %610 = vmatprep.subr.bf16.mxu0 0
        %611 = vmatpush1.bf16.msra.mxu0 0
        %612 = vmatprep.subr.bf16.mxu0 0
        %613 = vmatpush1.bf16.msra.mxu0 0
        %614 = vmatprep.subr.bf16.mxu0 0
        %615 = vmatpush1.bf16.msra.mxu0 0
        %616 = vmatprep.subr.bf16.mxu0 0
        %617 = vmatpush1.bf16.msra.mxu0 0
        %618 = vmatprep.subr.bf16.mxu0 0
        %619 = vmatpush1.bf16.msra.mxu0 0
        %620 = vmatprep.subr.bf16.mxu0 0
        %621 = vmatpush1.bf16.msra.mxu0 0
        %622 = vmatprep.subr.bf16.mxu0 0
        %623 = vmatpush1.bf16.msra.mxu0 0
        %624 = vmatprep.subr.bf16.mxu0 0
        %625 = vmatpush1.bf16.msra.mxu0 0
        %626 = vmatprep.subr.bf16.mxu0 0
        %627 = vmatpush1.bf16.msra.mxu0 0
        %628 = vmatprep.subr.bf16.mxu0 0
        %629 = vmatpush1.bf16.msra.mxu0 0
        %630 = vmatprep.subr.bf16.mxu0 0
        %631 = vmatpush1.bf16.msra.mxu0 0
        %632 = vmatprep.subr.bf16.mxu0 0
        %633 = vmatpush1.bf16.msra.mxu0 0
        %634 = vmatprep.subr.bf16.mxu0 0
        %635 = vmatpush1.bf16.msra.mxu0 0
        %636 = vmatprep.mubr.bf16.mxu0 0
        %637 = vmatmul.mubr.bf16.gmra.mrb[0].mxu0 %v422
        %v638 = vpop.f32.mrb[0].mxu0
        %v639 = vadd.f32 %v343, %v638
        %v640 = vpop.f32.mrb[0].mxu0
        %v641 = vadd.f32 %v343, %v640
        %v642 = vpop.f32.mrb[0].mxu0
        %v643 = vadd.f32 %v348, %v642
        %v644 = vpop.f32.mrb[0].mxu0
        %v645 = vadd.f32 %v348, %v644
        %646 = vmatprep.mubr.bf16.mxu0 0
        %647 = vmatmul.mubr.bf16.gmra.mrb[0].mxu0 %v425
        %v648 = vpop.f32.mrb[0].mxu0
        %v649 = vadd.f32 %v353, %v648
        %v650 = vpop.f32.mrb[0].mxu0
        %v651 = vadd.f32 %v353, %v650
        %v652 = vpop.f32.mrb[0].mxu0
        %v653 = vadd.f32 %v358, %v652
        %v654 = vpop.f32.mrb[0].mxu0
        %v655 = vadd.f32 %v358, %v654
        %656 = vmatprep.mubr.bf16.mxu0 0
        %657 = vmatmul.mubr.bf16.gmra.mrb[0].mxu0 %v428
        %v658 = vpop.f32.mrb[0].mxu0
        %v659 = vadd.f32 %v363, %v658
        %v660 = vpop.f32.mrb[0].mxu0
        %v661 = vadd.f32 %v363, %v660
        %v662 = vpop.f32.mrb[0].mxu0
        %v663 = vadd.f32 %v368, %v662
        %v664 = vpop.f32.mrb[0].mxu0
        %v665 = vadd.f32 %v368, %v664
        %666 = vmatprep.mubr.bf16.mxu0 0
        %667 = vmatmul.mubr.bf16.gmra.mrb[0].mxu0 %v431
        %v668 = vpop.f32.mrb[0].mxu0
        %v669 = vadd.f32 %v373, %v668
        %v670 = vpop.f32.mrb[0].mxu0
        %v671 = vadd.f32 %v373, %v670
        %v672 = vpop.f32.mrb[0].mxu0
        %v673 = vadd.f32 %v378, %v672
        %v674 = vpop.f32.mrb[0].mxu0
        %v675 = vadd.f32 %v378, %v674
        %676 = vdwg.mxu0
        %677 = vmatprep.subr.bf16.mxu0 %v456
        %678 = vmatpush1.bf16.msra.mxu0 %v453
        %679 = vmatprep.subr.bf16.mxu0 0
        %680 = vmatpush1.bf16.msra.mxu0 0
        %681 = vmatprep.subr.bf16.mxu0 0
        %682 = vmatpush1.bf16.msra.mxu0 0
        %683 = vmatprep.subr.bf16.mxu0 0
        %684 = vmatpush1.bf16.msra.mxu0 0
        %685 = vmatprep.subr.bf16.mxu0 0
        %686 = vmatpush1.bf16.msra.mxu0 0
        %687 = vmatprep.subr.bf16.mxu0 0
        %688 = vmatpush1.bf16.msra.mxu0 0
        %689 = vmatprep.subr.bf16.mxu0 0
        %690 = vmatpush1.bf16.msra.mxu0 0
        %691 = vmatprep.subr.bf16.mxu0 0
        %692 = vmatpush1.bf16.msra.mxu0 0
        %693 = vmatprep.subr.bf16.mxu0 0
        %694 = vmatpush1.bf16.msra.mxu0 0
        %695 = vmatprep.subr.bf16.mxu0 0
        %696 = vmatpush1.bf16.msra.mxu0 0
        %697 = vmatprep.subr.bf16.mxu0 0
        %698 = vmatpush1.bf16.msra.mxu0 0
        %699 = vmatprep.subr.bf16.mxu0 0
        %700 = vmatpush1.bf16.msra.mxu0 0
        %701 = vmatprep.subr.bf16.mxu0 0
        %702 = vmatpush1.bf16.msra.mxu0 0
        %703 = vmatprep.subr.bf16.mxu0 0
        %704 = vmatpush1.bf16.msra.mxu0 0
        %705 = vmatprep.subr.bf16.mxu0 0
        %706 = vmatpush1.bf16.msra.mxu0 0
        %707 = vmatprep.subr.bf16.mxu0 0
        %708 = vmatpush1.bf16.msra.mxu0 0
        %709 = vmatprep.mubr.bf16.mxu0 0
        %710 = vmatmul.mubr.bf16.gmra.mrb[0].mxu0 %v422
        %v711 = vpop.f32.mrb[0].mxu0
        %v712 = vadd.f32 %v343, %v711
        %v713 = vpop.f32.mrb[0].mxu0
        %v714 = vadd.f32 %v343, %v713
        %v715 = vpop.f32.mrb[0].mxu0
        %v716 = vadd.f32 %v348, %v715
        %v717 = vpop.f32.mrb[0].mxu0
        %v718 = vadd.f32 %v348, %v717
        %719 = vmatprep.mubr.bf16.mxu0 0
        %720 = vmatmul.mubr.bf16.gmra.mrb[0].mxu0 %v425
        %v721 = vpop.f32.mrb[0].mxu0
        %v722 = vadd.f32 %v353, %v721
        %v723 = vpop.f32.mrb[0].mxu0
        %v724 = vadd.f32 %v353, %v723
        %v725 = vpop.f32.mrb[0].mxu0
        %v726 = vadd.f32 %v358, %v725
        %v727 = vpop.f32.mrb[0].mxu0
        %v728 = vadd.f32 %v358, %v727
        %729 = vmatprep.mubr.bf16.mxu0 0
        %730 = vmatmul.mubr.bf16.gmra.mrb[0].mxu0 %v428
        %v731 = vpop.f32.mrb[0].mxu0
        %v732 = vadd.f32 %v363, %v731
        %v733 = vpop.f32.mrb[0].mxu0
        %v734 = vadd.f32 %v363, %v733
        %v735 = vpop.f32.mrb[0].mxu0
        %v736 = vadd.f32 %v368, %v735
        %v737 = vpop.f32.mrb[0].mxu0
        %v738 = vadd.f32 %v368, %v737
        %739 = vmatprep.mubr.bf16.mxu0 0
        %740 = vmatmul.mubr.bf16.gmra.mrb[0].mxu0 %v431
        %v741 = vpop.f32.mrb[0].mxu0
        %v742 = vadd.f32 %v373, %v741
        %v743 = vpop.f32.mrb[0].mxu0
        %v744 = vadd.f32 %v373, %v743
        %v745 = vpop.f32.mrb[0].mxu0
        %v746 = vadd.f32 %v378, %v745
        %v747 = vpop.f32.mrb[0].mxu0
        %v748 = vadd.f32 %v378, %v747
        %749 = vdwg.mxu0
        %v750 = vmax.f32 %v493, 0.0
        %v751 = vmax.f32 %v495, 0.0
        %v752 = vmax.f32 %v566, 0.0
        %v753 = vmax.f32 %v568, 0.0
        %v754 = vmax.f32 %v639, 0.0
        %v755 = vmax.f32 %v641, 0.0
        %v756 = vmax.f32 %v712, 0.0
        %v757 = vmax.f32 %v714, 0.0
        %v758 = vmax.f32 %v497, 0.0
        %v759 = vmax.f32 %v499, 0.0
        %v760 = vmax.f32 %v570, 0.0
        %v761 = vmax.f32 %v572, 0.0
        %v762 = vmax.f32 %v643, 0.0
        %v763 = vmax.f32 %v645, 0.0
        %v764 = vmax.f32 %v716, 0.0
        %v765 = vmax.f32 %v718, 0.0
        %v766 = vmax.f32 %v503, 0.0
        %v767 = vmax.f32 %v505, 0.0
        %v768 = vmax.f32 %v576, 0.0
        %v769 = vmax.f32 %v578, 0.0
        %v770 = vmax.f32 %v649, 0.0
        %v771 = vmax.f32 %v651, 0.0
        %v772 = vmax.f32 %v722, 0.0
        %v773 = vmax.f32 %v724, 0.0
        %v774 = vmax.f32 %v507, 0.0
        %v775 = vmax.f32 %v509, 0.0
        %v776 = vmax.f32 %v580, 0.0
        %v777 = vmax.f32 %v582, 0.0
        %v778 = vmax.f32 %v653, 0.0
        %v779 = vmax.f32 %v655, 0.0
        %v780 = vmax.f32 %v726, 0.0
        %v781 = vmax.f32 %v728, 0.0
        %v782 = vmax.f32 %v513, 0.0
        %v783 = vmax.f32 %v515, 0.0
        %v784 = vmax.f32 %v586, 0.0
        %v785 = vmax.f32 %v588, 0.0
        %v786 = vmax.f32 %v659, 0.0
        %v787 = vmax.f32 %v661, 0.0
        %v788 = vmax.f32 %v732, 0.0
        %v789 = vmax.f32 %v734, 0.0
        %v790 = vmax.f32 %v517, 0.0
        %v791 = vmax.f32 %v519, 0.0
        %v792 = vmax.f32 %v590, 0.0
        %v793 = vmax.f32 %v592, 0.0
        %v794 = vmax.f32 %v663, 0.0
        %v795 = vmax.f32 %v665, 0.0
        %v796 = vmax.f32 %v736, 0.0
        %v797 = vmax.f32 %v738, 0.0
        %v798 = vmax.f32 %v523, 0.0
        %v799 = vmax.f32 %v525, 0.0
        %v800 = vmax.f32 %v596, 0.0
        %v801 = vmax.f32 %v598, 0.0
        %v802 = vmax.f32 %v669, 0.0
        %v803 = vmax.f32 %v671, 0.0
        %v804 = vmax.f32 %v742, 0.0
        %v805 = vmax.f32 %v744, 0.0
        %v806 = vmax.f32 %v527, 0.0
        %v807 = vmax.f32 %v529, 0.0
        %v808 = vmax.f32 %v600, 0.0
        %v809 = vmax.f32 %v602, 0.0
        %v810 = vmax.f32 %v673, 0.0
        %v811 = vmax.f32 %v675, 0.0
        %v812 = vmax.f32 %v746, 0.0
        %v813 = vmax.f32 %v748, 0.0
        %v814 = vld [vmem:[#allocation2] sm:$0xff]
        %v815 = vld [vmem:[#allocation2 + $0x8] sm:$0xff]
        %v816 = vld [vmem:[#allocation2 + $0x10] sm:$0xff]
        %v817 = vld [vmem:[#allocation2 + $0x18] sm:$0xff]
        %v818 = vld [vmem:[#allocation2 + $0x20] sm:$0xff]
        %v819 = vld [vmem:[#allocation2 + $0x28] sm:$0xff]
        %v820 = vld [vmem:[#allocation2 + $0x30] sm:$0xff]
        %v821 = vld [vmem:[#allocation2 + $0x38] sm:$0xff]
        %v822 = vld [vmem:[#allocation2 + $0x40] sm:$0xff]
        %v823 = vld [vmem:[#allocation2 + $0x48] sm:$0xff]
        %v824 = vld [vmem:[#allocation2 + $0x50] sm:$0xff]
        %v825 = vld [vmem:[#allocation2 + $0x58] sm:$0xff]
        %v826 = vld [vmem:[#allocation2 + $0x60] sm:$0xff]
        %v827 = vld [vmem:[#allocation2 + $0x68] sm:$0xff]
        %v828 = vld [vmem:[#allocation2 + $0x70] sm:$0xff]
        %v829 = vld [vmem:[#allocation2 + $0x78] sm:$0xff]
        %v830 = vld [vmem:[#allocation2 + $0x80] sm:$0xff]
        %v831 = vld [vmem:[#allocation2 + $0x88] sm:$0xff]
        %v832 = vld [vmem:[#allocation2 + $0x90] sm:$0xff]
        %v833 = vld [vmem:[#allocation2 + $0x98] sm:$0xff]
        %v834 = vld [vmem:[#allocation2 + $0xa0] sm:$0xff]
        %v835 = vld [vmem:[#allocation2 + $0xa8] sm:$0xff]
        %v836 = vld [vmem:[#allocation2 + $0xb0] sm:$0xff]
        %v837 = vld [vmem:[#allocation2 + $0xb8] sm:$0xff]
        %v838 = vld [vmem:[#allocation2 + $0xc0] sm:$0xff]
        %v839 = vld [vmem:[#allocation2 + $0xc8] sm:$0xff]
        %v840 = vld [vmem:[#allocation2 + $0xd0] sm:$0xff]
        %v841 = vld [vmem:[#allocation2 + $0xd8] sm:$0xff]
        %v842 = vld [vmem:[#allocation2 + $0xe0] sm:$0xff]
        %v843 = vld [vmem:[#allocation2 + $0xe8] sm:$0xff]
        %v844 = vld [vmem:[#allocation2 + $0xf0] sm:$0xff]
        %v845 = vld [vmem:[#allocation2 + $0xf8] sm:$0xff]
        %v846 = vld [vmem:[#allocation2 + $0x100] sm:$0xff]
        %v847 = vld [vmem:[#allocation2 + $0x108] sm:$0xff]
        %v848 = vld [vmem:[#allocation2 + $0x110] sm:$0xff]
        %v849 = vld [vmem:[#allocation2 + $0x118] sm:$0xff]
        %v850 = vld [vmem:[#allocation2 + $0x120] sm:$0xff]
        %v851 = vld [vmem:[#allocation2 + $0x128] sm:$0xff]
        %v852 = vld [vmem:[#allocation2 + $0x130] sm:$0xff]
        %v853 = vld [vmem:[#allocation2 + $0x138] sm:$0xff]
        %v854 = vld [vmem:[#allocation2 + $0x140] sm:$0xff]
        %v855 = vld [vmem:[#allocation2 + $0x148] sm:$0xff]
        %v856 = vld [vmem:[#allocation2 + $0x150] sm:$0xff]
        %v857 = vld [vmem:[#allocation2 + $0x158] sm:$0xff]
        %v858 = vld [vmem:[#allocation2 + $0x160] sm:$0xff]
        %v859 = vld [vmem:[#allocation2 + $0x168] sm:$0xff]
        %v860 = vld [vmem:[#allocation2 + $0x170] sm:$0xff]
        %v861 = vld [vmem:[#allocation2 + $0x178] sm:$0xff]
        %v862 = vld [vmem:[#allocation2 + $0x180] sm:$0xff]
        %v863 = vld [vmem:[#allocation2 + $0x188] sm:$0xff]
        %v864 = vld [vmem:[#allocation2 + $0x190] sm:$0xff]
        %v865 = vld [vmem:[#allocation2 + $0x198] sm:$0xff]
        %v866 = vld [vmem:[#allocation2 + $0x1a0] sm:$0xff]
        %v867 = vld [vmem:[#allocation2 + $0x1a8] sm:$0xff]
        %v868 = vld [vmem:[#allocation2 + $0x1b0] sm:$0xff]
        %v869 = vld [vmem:[#allocation2 + $0x1b8] sm:$0xff]
        %v870 = vld [vmem:[#allocation2 + $0x1c0] sm:$0xff]
        %v871 = vld [vmem:[#allocation2 + $0x1c8] sm:$0xff]
        %v872 = vld [vmem:[#allocation2 + $0x1d0] sm:$0xff]
        %v873 = vld [vmem:[#allocation2 + $0x1d8] sm:$0xff]
        %v874 = vld [vmem:[#allocation2 + $0x1e0] sm:$0xff]
        %v875 = vld [vmem:[#allocation2 + $0x1e8] sm:$0xff]
        %v876 = vld [vmem:[#allocation2 + $0x1f0] sm:$0xff]
        %v877 = vld [vmem:[#allocation2 + $0x1f8] sm:$0xff]
        %s878 = smul.addr %s315, 4
        %s879 = scalar_lea.vmem %s3, %s878
        %v880 = vld [vmem:[%s879] sm:$0xf]
        %v881 = vld [vmem:[%s879 + $0x4] sm:$0xf]
        %v882 = vld [vmem:[%s879 + $0x8] sm:$0xf]
        %v883 = vld [vmem:[%s879 + $0xc] sm:$0xf]
        %v884 = vld [vmem:[%s879 + $0x10] sm:$0xf]
        %v885 = vld [vmem:[%s879 + $0x14] sm:$0xf]
        %v886 = vld [vmem:[%s879 + $0x18] sm:$0xf]
        %v887 = vld [vmem:[%s879 + $0x1c] sm:$0xf]
        %v888 = vpack.c.bf16 %v758, %v750
        %v889 = vpack.c.bf16 %v759, %v751
        %v890 = vpack.c.bf16 %v760, %v752
        %v891 = vpack.c.bf16 %v761, %v753
        %v892 = vpack.c.bf16 %v762, %v754
        %v893 = vpack.c.bf16 %v763, %v755
        %v894 = vpack.c.bf16 %v764, %v756
        %v895 = vpack.c.bf16 %v765, %v757
        %v896 = vpack.c.bf16 %v774, %v766
        %v897 = vpack.c.bf16 %v775, %v767
        %v898 = vpack.c.bf16 %v776, %v768
        %v899 = vpack.c.bf16 %v777, %v769
        %v900 = vpack.c.bf16 %v778, %v770
        %v901 = vpack.c.bf16 %v779, %v771
        %v902 = vpack.c.bf16 %v780, %v772
        %v903 = vpack.c.bf16 %v781, %v773
        %v904 = vpack.c.bf16 %v790, %v782
        %v905 = vpack.c.bf16 %v791, %v783
        %v906 = vpack.c.bf16 %v792, %v784
        %v907 = vpack.c.bf16 %v793, %v785
        %v908 = vpack.c.bf16 %v794, %v786
        %v909 = vpack.c.bf16 %v795, %v787
        %v910 = vpack.c.bf16 %v796, %v788
        %v911 = vpack.c.bf16 %v797, %v789
        %v912 = vpack.c.bf16 %v806, %v798
        %v913 = vpack.c.bf16 %v807, %v799
        %v914 = vpack.c.bf16 %v808, %v800
        %v915 = vpack.c.bf16 %v809, %v801
        %v916 = vpack.c.bf16 %v810, %v802
        %v917 = vpack.c.bf16 %v811, %v803
        %v918 = vpack.c.bf16 %v812, %v804
        %v919 = vpack.c.bf16 %v813, %v805
        %v928 = vunpack.c.l.b16 %v880
        %v929 = vunpack.c.l.b16 %v881
        %v930 = vunpack.c.l.b16 %v882
        %v931 = vunpack.c.l.b16 %v883
        %v932 = vunpack.c.l.b16 %v884
        %v933 = vunpack.c.l.b16 %v885
        %v934 = vunpack.c.l.b16 %v886
        %v935 = vunpack.c.l.b16 %v887
        %v936 = vpack.c.b16 %v929, %v928
        %v937 = vpack.c.b16 %v931, %v930
        %v938 = vpack.c.b16 %v933, %v932
        %v939 = vpack.c.b16 %v935, %v934
        %vm940 = vcmask 523264
        %v942 = vsel %vm940, %v936, 0
        %v945 = vsel %vm940, %v937, 0
        %v948 = vsel %vm940, %v938, 0
        %v951 = vsel %vm940, %v939, 0
        %953 = vmatprep.subr.bf16.mxu0 %v889
        %954 = vmatpush1.bf16.msra.mxu0 %v888
        %955 = vmatprep.subr.bf16.mxu0 %v897
        %956 = vmatpush1.bf16.msra.mxu0 %v896
        %957 = vmatprep.subr.bf16.mxu0 %v905
        %958 = vmatpush1.bf16.msra.mxu0 %v904
        %959 = vmatprep.subr.bf16.mxu0 %v913
        %960 = vmatpush1.bf16.msra.mxu0 %v912
        %961 = vmatprep.subr.bf16.mxu0 0
        %962 = vmatpush1.bf16.msra.mxu0 0
        %963 = vmatprep.subr.bf16.mxu0 0
        %964 = vmatpush1.bf16.msra.mxu0 0
        %965 = vmatprep.subr.bf16.mxu0 0
        %966 = vmatpush1.bf16.msra.mxu0 0
        %967 = vmatprep.subr.bf16.mxu0 0
        %968 = vmatpush1.bf16.msra.mxu0 0
        %969 = vmatprep.subr.bf16.mxu0 0
        %970 = vmatpush1.bf16.msra.mxu0 0
        %971 = vmatprep.subr.bf16.mxu0 0
        %972 = vmatpush1.bf16.msra.mxu0 0
        %973 = vmatprep.subr.bf16.mxu0 0
        %974 = vmatpush1.bf16.msra.mxu0 0
        %975 = vmatprep.subr.bf16.mxu0 0
        %976 = vmatpush1.bf16.msra.mxu0 0
        %977 = vmatprep.subr.bf16.mxu0 0
        %978 = vmatpush1.bf16.msra.mxu0 0
        %979 = vmatprep.subr.bf16.mxu0 0
        %980 = vmatpush1.bf16.msra.mxu0 0
        %981 = vmatprep.subr.bf16.mxu0 0
        %982 = vmatpush1.bf16.msra.mxu0 0
        %983 = vmatprep.subr.bf16.mxu0 0
        %984 = vmatpush1.bf16.msra.mxu0 0
        %985 = vmatprep.mubr.bf16.mxu0 0
        %986 = vmatmul.mubr.bf16.gmra.mrb[0].mxu0 %v942
        %v987 = vpop.f32.mrb[0].mxu0
        %v988 = vadd.f32 0.0, %v987
        %v989 = vpop.f32.mrb[0].mxu0
        %v990 = vadd.f32 0.0, %v989
        %v991 = vpop.f32.mrb[0].mxu0
        %v992 = vadd.f32 0.0, %v991
        %v993 = vpop.f32.mrb[0].mxu0
        %v994 = vadd.f32 0.0, %v993
        %995 = vmatprep.mubr.bf16.mxu0 0
        %996 = vmatmul.mubr.bf16.gmra.mrb[0].mxu0 %v945
        %v997 = vpop.f32.mrb[0].mxu0
        %v998 = vadd.f32 0.0, %v997
        %v999 = vpop.f32.mrb[0].mxu0
        %v1000 = vadd.f32 0.0, %v999
        %v1001 = vpop.f32.mrb[0].mxu0
        %v1002 = vadd.f32 0.0, %v1001
        %v1003 = vpop.f32.mrb[0].mxu0
        %v1004 = vadd.f32 0.0, %v1003
        %1005 = vmatprep.mubr.bf16.mxu0 0
        %1006 = vmatmul.mubr.bf16.gmra.mrb[0].mxu0 %v948
        %v1007 = vpop.f32.mrb[0].mxu0
        %v1008 = vadd.f32 0.0, %v1007
        %v1009 = vpop.f32.mrb[0].mxu0
        %v1010 = vadd.f32 0.0, %v1009
        %v1011 = vpop.f32.mrb[0].mxu0
        %v1012 = vadd.f32 0.0, %v1011
        %v1013 = vpop.f32.mrb[0].mxu0
        %v1014 = vadd.f32 0.0, %v1013
        %1015 = vmatprep.mubr.bf16.mxu0 0
        %1016 = vmatmul.mubr.bf16.gmra.mrb[0].mxu0 %v951
        %v1017 = vpop.f32.mrb[0].mxu0
        %v1018 = vadd.f32 0.0, %v1017
        %v1019 = vpop.f32.mrb[0].mxu0
        %v1020 = vadd.f32 0.0, %v1019
        %v1021 = vpop.f32.mrb[0].mxu0
        %v1022 = vadd.f32 0.0, %v1021
        %v1023 = vpop.f32.mrb[0].mxu0
        %v1024 = vadd.f32 0.0, %v1023
        %1025 = vdwg.mxu0
        %1026 = vmatprep.subr.bf16.mxu0 %v891
        %1027 = vmatpush1.bf16.msra.mxu0 %v890
        %1028 = vmatprep.subr.bf16.mxu0 %v899
        %1029 = vmatpush1.bf16.msra.mxu0 %v898
        %1030 = vmatprep.subr.bf16.mxu0 %v907
        %1031 = vmatpush1.bf16.msra.mxu0 %v906
        %1032 = vmatprep.subr.bf16.mxu0 %v915
        %1033 = vmatpush1.bf16.msra.mxu0 %v914
        %1034 = vmatprep.subr.bf16.mxu0 0
        %1035 = vmatpush1.bf16.msra.mxu0 0
        %1036 = vmatprep.subr.bf16.mxu0 0
        %1037 = vmatpush1.bf16.msra.mxu0 0
        %1038 = vmatprep.subr.bf16.mxu0 0
        %1039 = vmatpush1.bf16.msra.mxu0 0
        %1040 = vmatprep.subr.bf16.mxu0 0
        %1041 = vmatpush1.bf16.msra.mxu0 0
        %1042 = vmatprep.subr.bf16.mxu0 0
        %1043 = vmatpush1.bf16.msra.mxu0 0
        %1044 = vmatprep.subr.bf16.mxu0 0
        %1045 = vmatpush1.bf16.msra.mxu0 0
        %1046 = vmatprep.subr.bf16.mxu0 0
        %1047 = vmatpush1.bf16.msra.mxu0 0
        %1048 = vmatprep.subr.bf16.mxu0 0
        %1049 = vmatpush1.bf16.msra.mxu0 0
        %1050 = vmatprep.subr.bf16.mxu0 0
        %1051 = vmatpush1.bf16.msra.mxu0 0
        %1052 = vmatprep.subr.bf16.mxu0 0
        %1053 = vmatpush1.bf16.msra.mxu0 0
        %1054 = vmatprep.subr.bf16.mxu0 0
        %1055 = vmatpush1.bf16.msra.mxu0 0
        %1056 = vmatprep.subr.bf16.mxu0 0
        %1057 = vmatpush1.bf16.msra.mxu0 0
        %1058 = vmatprep.mubr.bf16.mxu0 0
        %1059 = vmatmul.mubr.bf16.gmra.mrb[0].mxu0 %v942
        %v1060 = vpop.f32.mrb[0].mxu0
        %v1061 = vadd.f32 0.0, %v1060
        %v1062 = vpop.f32.mrb[0].mxu0
        %v1063 = vadd.f32 0.0, %v1062
        %v1064 = vpop.f32.mrb[0].mxu0
        %v1065 = vadd.f32 0.0, %v1064
        %v1066 = vpop.f32.mrb[0].mxu0
        %v1067 = vadd.f32 0.0, %v1066
        %1068 = vmatprep.mubr.bf16.mxu0 0
        %1069 = vmatmul.mubr.bf16.gmra.mrb[0].mxu0 %v945
        %v1070 = vpop.f32.mrb[0].mxu0
        %v1071 = vadd.f32 0.0, %v1070
        %v1072 = vpop.f32.mrb[0].mxu0
        %v1073 = vadd.f32 0.0, %v1072
        %v1074 = vpop.f32.mrb[0].mxu0
        %v1075 = vadd.f32 0.0, %v1074
        %v1076 = vpop.f32.mrb[0].mxu0
        %v1077 = vadd.f32 0.0, %v1076
        %1078 = vmatprep.mubr.bf16.mxu0 0
        %1079 = vmatmul.mubr.bf16.gmra.mrb[0].mxu0 %v948
        %v1080 = vpop.f32.mrb[0].mxu0
        %v1081 = vadd.f32 0.0, %v1080
        %v1082 = vpop.f32.mrb[0].mxu0
        %v1083 = vadd.f32 0.0, %v1082
        %v1084 = vpop.f32.mrb[0].mxu0
        %v1085 = vadd.f32 0.0, %v1084
        %v1086 = vpop.f32.mrb[0].mxu0
        %v1087 = vadd.f32 0.0, %v1086
        %1088 = vmatprep.mubr.bf16.mxu0 0
        %1089 = vmatmul.mubr.bf16.gmra.mrb[0].mxu0 %v951
        %v1090 = vpop.f32.mrb[0].mxu0
        %v1091 = vadd.f32 0.0, %v1090
        %v1092 = vpop.f32.mrb[0].mxu0
        %v1093 = vadd.f32 0.0, %v1092
        %v1094 = vpop.f32.mrb[0].mxu0
        %v1095 = vadd.f32 0.0, %v1094
        %v1096 = vpop.f32.mrb[0].mxu0
        %v1097 = vadd.f32 0.0, %v1096
        %1098 = vdwg.mxu0
        %1099 = vmatprep.subr.bf16.mxu0 %v893
        %1100 = vmatpush1.bf16.msra.mxu0 %v892
        %1101 = vmatprep.subr.bf16.mxu0 %v901
        %1102 = vmatpush1.bf16.msra.mxu0 %v900
        %1103 = vmatprep.subr.bf16.mxu0 %v909
        %1104 = vmatpush1.bf16.msra.mxu0 %v908
        %1105 = vmatprep.subr.bf16.mxu0 %v917
        %1106 = vmatpush1.bf16.msra.mxu0 %v916
        %1107 = vmatprep.subr.bf16.mxu0 0
        %1108 = vmatpush1.bf16.msra.mxu0 0
        %1109 = vmatprep.subr.bf16.mxu0 0
        %1110 = vmatpush1.bf16.msra.mxu0 0
        %1111 = vmatprep.subr.bf16.mxu0 0
        %1112 = vmatpush1.bf16.msra.mxu0 0
        %1113 = vmatprep.subr.bf16.mxu0 0
        %1114 = vmatpush1.bf16.msra.mxu0 0
        %1115 = vmatprep.subr.bf16.mxu0 0
        %1116 = vmatpush1.bf16.msra.mxu0 0
        %1117 = vmatprep.subr.bf16.mxu0 0
        %1118 = vmatpush1.bf16.msra.mxu0 0
        %1119 = vmatprep.subr.bf16.mxu0 0
        %1120 = vmatpush1.bf16.msra.mxu0 0
        %1121 = vmatprep.subr.bf16.mxu0 0
        %1122 = vmatpush1.bf16.msra.mxu0 0
        %1123 = vmatprep.subr.bf16.mxu0 0
        %1124 = vmatpush1.bf16.msra.mxu0 0
        %1125 = vmatprep.subr.bf16.mxu0 0
        %1126 = vmatpush1.bf16.msra.mxu0 0
        %1127 = vmatprep.subr.bf16.mxu0 0
        %1128 = vmatpush1.bf16.msra.mxu0 0
        %1129 = vmatprep.subr.bf16.mxu0 0
        %1130 = vmatpush1.bf16.msra.mxu0 0
        %1131 = vmatprep.mubr.bf16.mxu0 0
        %1132 = vmatmul.mubr.bf16.gmra.mrb[0].mxu0 %v942
        %v1133 = vpop.f32.mrb[0].mxu0
        %v1134 = vadd.f32 0.0, %v1133
        %v1135 = vpop.f32.mrb[0].mxu0
        %v1136 = vadd.f32 0.0, %v1135
        %v1137 = vpop.f32.mrb[0].mxu0
        %v1138 = vadd.f32 0.0, %v1137
        %v1139 = vpop.f32.mrb[0].mxu0
        %v1140 = vadd.f32 0.0, %v1139
        %1141 = vmatprep.mubr.bf16.mxu0 0
        %1142 = vmatmul.mubr.bf16.gmra.mrb[0].mxu0 %v945
        %v1143 = vpop.f32.mrb[0].mxu0
        %v1144 = vadd.f32 0.0, %v1143
        %v1145 = vpop.f32.mrb[0].mxu0
        %v1146 = vadd.f32 0.0, %v1145
        %v1147 = vpop.f32.mrb[0].mxu0
        %v1148 = vadd.f32 0.0, %v1147
        %v1149 = vpop.f32.mrb[0].mxu0
        %v1150 = vadd.f32 0.0, %v1149
        %1151 = vmatprep.mubr.bf16.mxu0 0
        %1152 = vmatmul.mubr.bf16.gmra.mrb[0].mxu0 %v948
        %v1153 = vpop.f32.mrb[0].mxu0
        %v1154 = vadd.f32 0.0, %v1153
        %v1155 = vpop.f32.mrb[0].mxu0
        %v1156 = vadd.f32 0.0, %v1155
        %v1157 = vpop.f32.mrb[0].mxu0
        %v1158 = vadd.f32 0.0, %v1157
        %v1159 = vpop.f32.mrb[0].mxu0
        %v1160 = vadd.f32 0.0, %v1159
        %1161 = vmatprep.mubr.bf16.mxu0 0
        %1162 = vmatmul.mubr.bf16.gmra.mrb[0].mxu0 %v951
        %v1163 = vpop.f32.mrb[0].mxu0
        %v1164 = vadd.f32 0.0, %v1163
        %v1165 = vpop.f32.mrb[0].mxu0
        %v1166 = vadd.f32 0.0, %v1165
        %v1167 = vpop.f32.mrb[0].mxu0
        %v1168 = vadd.f32 0.0, %v1167
        %v1169 = vpop.f32.mrb[0].mxu0
        %v1170 = vadd.f32 0.0, %v1169
        %1171 = vdwg.mxu0
        %1172 = vmatprep.subr.bf16.mxu0 %v895
        %1173 = vmatpush1.bf16.msra.mxu0 %v894
        %1174 = vmatprep.subr.bf16.mxu0 %v903
        %1175 = vmatpush1.bf16.msra.mxu0 %v902
        %1176 = vmatprep.subr.bf16.mxu0 %v911
        %1177 = vmatpush1.bf16.msra.mxu0 %v910
        %1178 = vmatprep.subr.bf16.mxu0 %v919
        %1179 = vmatpush1.bf16.msra.mxu0 %v918
        %1180 = vmatprep.subr.bf16.mxu0 0
        %1181 = vmatpush1.bf16.msra.mxu0 0
        %1182 = vmatprep.subr.bf16.mxu0 0
        %1183 = vmatpush1.bf16.msra.mxu0 0
        %1184 = vmatprep.subr.bf16.mxu0 0
        %1185 = vmatpush1.bf16.msra.mxu0 0
        %1186 = vmatprep.subr.bf16.mxu0 0
        %1187 = vmatpush1.bf16.msra.mxu0 0
        %1188 = vmatprep.subr.bf16.mxu0 0
        %1189 = vmatpush1.bf16.msra.mxu0 0
        %1190 = vmatprep.subr.bf16.mxu0 0
        %1191 = vmatpush1.bf16.msra.mxu0 0
        %1192 = vmatprep.subr.bf16.mxu0 0
        %1193 = vmatpush1.bf16.msra.mxu0 0
        %1194 = vmatprep.subr.bf16.mxu0 0
        %1195 = vmatpush1.bf16.msra.mxu0 0
        %1196 = vmatprep.subr.bf16.mxu0 0
        %1197 = vmatpush1.bf16.msra.mxu0 0
        %1198 = vmatprep.subr.bf16.mxu0 0
        %1199 = vmatpush1.bf16.msra.mxu0 0
        %1200 = vmatprep.subr.bf16.mxu0 0
        %1201 = vmatpush1.bf16.msra.mxu0 0
        %1202 = vmatprep.subr.bf16.mxu0 0
        %1203 = vmatpush1.bf16.msra.mxu0 0
        %1204 = vmatprep.mubr.bf16.mxu0 0
        %1205 = vmatmul.mubr.bf16.gmra.mrb[0].mxu0 %v942
        %v1206 = vpop.f32.mrb[0].mxu0
        %v1207 = vadd.f32 0.0, %v1206
        %v1208 = vpop.f32.mrb[0].mxu0
        %v1209 = vadd.f32 0.0, %v1208
        %v1210 = vpop.f32.mrb[0].mxu0
        %v1211 = vadd.f32 0.0, %v1210
        %v1212 = vpop.f32.mrb[0].mxu0
        %v1213 = vadd.f32 0.0, %v1212
        %1214 = vmatprep.mubr.bf16.mxu0 0
        %1215 = vmatmul.mubr.bf16.gmra.mrb[0].mxu0 %v945
        %v1216 = vpop.f32.mrb[0].mxu0
        %v1217 = vadd.f32 0.0, %v1216
        %v1218 = vpop.f32.mrb[0].mxu0
        %v1219 = vadd.f32 0.0, %v1218
        %v1220 = vpop.f32.mrb[0].mxu0
        %v1221 = vadd.f32 0.0, %v1220
        %v1222 = vpop.f32.mrb[0].mxu0
        %v1223 = vadd.f32 0.0, %v1222
        %1224 = vmatprep.mubr.bf16.mxu0 0
        %1225 = vmatmul.mubr.bf16.gmra.mrb[0].mxu0 %v948
        %v1226 = vpop.f32.mrb[0].mxu0
        %v1227 = vadd.f32 0.0, %v1226
        %v1228 = vpop.f32.mrb[0].mxu0
        %v1229 = vadd.f32 0.0, %v1228
        %v1230 = vpop.f32.mrb[0].mxu0
        %v1231 = vadd.f32 0.0, %v1230
        %v1232 = vpop.f32.mrb[0].mxu0
        %v1233 = vadd.f32 0.0, %v1232
        %1234 = vmatprep.mubr.bf16.mxu0 0
        %1235 = vmatmul.mubr.bf16.gmra.mrb[0].mxu0 %v951
        %v1236 = vpop.f32.mrb[0].mxu0
        %v1237 = vadd.f32 0.0, %v1236
        %v1238 = vpop.f32.mrb[0].mxu0
        %v1239 = vadd.f32 0.0, %v1238
        %v1240 = vpop.f32.mrb[0].mxu0
        %v1241 = vadd.f32 0.0, %v1240
        %v1242 = vpop.f32.mrb[0].mxu0
        %v1243 = vadd.f32 0.0, %v1242
        %1244 = vdwg.mxu0
        %v1245 = vadd.f32 %v814, %v988
        %v1246 = vadd.f32 %v815, %v990
        %v1247 = vadd.f32 %v816, %v1061
        %v1248 = vadd.f32 %v817, %v1063
        %v1249 = vadd.f32 %v818, %v1134
        %v1250 = vadd.f32 %v819, %v1136
        %v1251 = vadd.f32 %v820, %v1207
        %v1252 = vadd.f32 %v821, %v1209
        %v1253 = vadd.f32 %v822, %v992
        %v1254 = vadd.f32 %v823, %v994
        %v1255 = vadd.f32 %v824, %v1065
        %v1256 = vadd.f32 %v825, %v1067
        %v1257 = vadd.f32 %v826, %v1138
        %v1258 = vadd.f32 %v827, %v1140
        %v1259 = vadd.f32 %v828, %v1211
        %v1260 = vadd.f32 %v829, %v1213
        %v1261 = vadd.f32 %v830, %v998
        %v1262 = vadd.f32 %v831, %v1000
        %v1263 = vadd.f32 %v832, %v1071
        %v1264 = vadd.f32 %v833, %v1073
        %v1265 = vadd.f32 %v834, %v1144
        %v1266 = vadd.f32 %v835, %v1146
        %v1267 = vadd.f32 %v836, %v1217
        %v1268 = vadd.f32 %v837, %v1219
        %v1269 = vadd.f32 %v838, %v1002
        %v1270 = vadd.f32 %v839, %v1004
        %v1271 = vadd.f32 %v840, %v1075
        %v1272 = vadd.f32 %v841, %v1077
        %v1273 = vadd.f32 %v842, %v1148
        %v1274 = vadd.f32 %v843, %v1150
        %v1275 = vadd.f32 %v844, %v1221
        %v1276 = vadd.f32 %v845, %v1223
        %v1277 = vadd.f32 %v846, %v1008
        %v1278 = vadd.f32 %v847, %v1010
        %v1279 = vadd.f32 %v848, %v1081
        %v1280 = vadd.f32 %v849, %v1083
        %v1281 = vadd.f32 %v850, %v1154
        %v1282 = vadd.f32 %v851, %v1156
        %v1283 = vadd.f32 %v852, %v1227
        %v1284 = vadd.f32 %v853, %v1229
        %v1285 = vadd.f32 %v854, %v1012
        %v1286 = vadd.f32 %v855, %v1014
        %v1287 = vadd.f32 %v856, %v1085
        %v1288 = vadd.f32 %v857, %v1087
        %v1289 = vadd.f32 %v858, %v1158
        %v1290 = vadd.f32 %v859, %v1160
        %v1291 = vadd.f32 %v860, %v1231
        %v1292 = vadd.f32 %v861, %v1233
        %v1293 = vadd.f32 %v862, %v1018
        %v1294 = vadd.f32 %v863, %v1020
        %v1295 = vadd.f32 %v864, %v1091
        %v1296 = vadd.f32 %v865, %v1093
        %v1297 = vadd.f32 %v866, %v1164
        %v1298 = vadd.f32 %v867, %v1166
        %v1299 = vadd.f32 %v868, %v1237
        %v1300 = vadd.f32 %v869, %v1239
        %v1301 = vadd.f32 %v870, %v1022
        %v1302 = vadd.f32 %v871, %v1024
        %v1303 = vadd.f32 %v872, %v1095
        %v1304 = vadd.f32 %v873, %v1097
        %v1305 = vadd.f32 %v874, %v1168
        %v1306 = vadd.f32 %v875, %v1170
        %v1307 = vadd.f32 %v876, %v1241
        %v1308 = vadd.f32 %v877, %v1243
        %1309 = vst [vmem:[#allocation2] sm:$0xff] %v1245
        %1310 = vst [vmem:[#allocation2 + $0x8] sm:$0xff] %v1246
        %1311 = vst [vmem:[#allocation2 + $0x10] sm:$0xff] %v1247
        %1312 = vst [vmem:[#allocation2 + $0x18] sm:$0xff] %v1248
        %1313 = vst [vmem:[#allocation2 + $0x20] sm:$0xff] %v1249
        %1314 = vst [vmem:[#allocation2 + $0x28] sm:$0xff] %v1250
        %1315 = vst [vmem:[#allocation2 + $0x30] sm:$0xff] %v1251
        %1316 = vst [vmem:[#allocation2 + $0x38] sm:$0xff] %v1252
        %1317 = vst [vmem:[#allocation2 + $0x40] sm:$0xff] %v1253
        %1318 = vst [vmem:[#allocation2 + $0x48] sm:$0xff] %v1254
        %1319 = vst [vmem:[#allocation2 + $0x50] sm:$0xff] %v1255
        %1320 = vst [vmem:[#allocation2 + $0x58] sm:$0xff] %v1256
        %1321 = vst [vmem:[#allocation2 + $0x60] sm:$0xff] %v1257
        %1322 = vst [vmem:[#allocation2 + $0x68] sm:$0xff] %v1258
        %1323 = vst [vmem:[#allocation2 + $0x70] sm:$0xff] %v1259
        %1324 = vst [vmem:[#allocation2 + $0x78] sm:$0xff] %v1260
        %1325 = vst [vmem:[#allocation2 + $0x80] sm:$0xff] %v1261
        %1326 = vst [vmem:[#allocation2 + $0x88] sm:$0xff] %v1262
        %1327 = vst [vmem:[#allocation2 + $0x90] sm:$0xff] %v1263
        %1328 = vst [vmem:[#allocation2 + $0x98] sm:$0xff] %v1264
        %1329 = vst [vmem:[#allocation2 + $0xa0] sm:$0xff] %v1265
        %1330 = vst [vmem:[#allocation2 + $0xa8] sm:$0xff] %v1266
        %1331 = vst [vmem:[#allocation2 + $0xb0] sm:$0xff] %v1267
        %1332 = vst [vmem:[#allocation2 + $0xb8] sm:$0xff] %v1268
        %1333 = vst [vmem:[#allocation2 + $0xc0] sm:$0xff] %v1269
        %1334 = vst [vmem:[#allocation2 + $0xc8] sm:$0xff] %v1270
        %1335 = vst [vmem:[#allocation2 + $0xd0] sm:$0xff] %v1271
        %1336 = vst [vmem:[#allocation2 + $0xd8] sm:$0xff] %v1272
        %1337 = vst [vmem:[#allocation2 + $0xe0] sm:$0xff] %v1273
        %1338 = vst [vmem:[#allocation2 + $0xe8] sm:$0xff] %v1274
        %1339 = vst [vmem:[#allocation2 + $0xf0] sm:$0xff] %v1275
        %1340 = vst [vmem:[#allocation2 + $0xf8] sm:$0xff] %v1276
        %1341 = vst [vmem:[#allocation2 + $0x100] sm:$0xff] %v1277
        %1342 = vst [vmem:[#allocation2 + $0x108] sm:$0xff] %v1278
        %1343 = vst [vmem:[#allocation2 + $0x110] sm:$0xff] %v1279
        %1344 = vst [vmem:[#allocation2 + $0x118] sm:$0xff] %v1280
        %1345 = vst [vmem:[#allocation2 + $0x120] sm:$0xff] %v1281
        %1346 = vst [vmem:[#allocation2 + $0x128] sm:$0xff] %v1282
        %1347 = vst [vmem:[#allocation2 + $0x130] sm:$0xff] %v1283
        %1348 = vst [vmem:[#allocation2 + $0x138] sm:$0xff] %v1284
        %1349 = vst [vmem:[#allocation2 + $0x140] sm:$0xff] %v1285
        %1350 = vst [vmem:[#allocation2 + $0x148] sm:$0xff] %v1286
        %1351 = vst [vmem:[#allocation2 + $0x150] sm:$0xff] %v1287
        %1352 = vst [vmem:[#allocation2 + $0x158] sm:$0xff] %v1288
        %1353 = vst [vmem:[#allocation2 + $0x160] sm:$0xff] %v1289
        %1354 = vst [vmem:[#allocation2 + $0x168] sm:$0xff] %v1290
        %1355 = vst [vmem:[#allocation2 + $0x170] sm:$0xff] %v1291
        %1356 = vst [vmem:[#allocation2 + $0x178] sm:$0xff] %v1292
        %1357 = vst [vmem:[#allocation2 + $0x180] sm:$0xff] %v1293
        %1358 = vst [vmem:[#allocation2 + $0x188] sm:$0xff] %v1294
        %1359 = vst [vmem:[#allocation2 + $0x190] sm:$0xff] %v1295
        %1360 = vst [vmem:[#allocation2 + $0x198] sm:$0xff] %v1296
        %1361 = vst [vmem:[#allocation2 + $0x1a0] sm:$0xff] %v1297
        %1362 = vst [vmem:[#allocation2 + $0x1a8] sm:$0xff] %v1298
        %1363 = vst [vmem:[#allocation2 + $0x1b0] sm:$0xff] %v1299
        %1364 = vst [vmem:[#allocation2 + $0x1b8] sm:$0xff] %v1300
        %1365 = vst [vmem:[#allocation2 + $0x1c0] sm:$0xff] %v1301
        %1366 = vst [vmem:[#allocation2 + $0x1c8] sm:$0xff] %v1302
        %1367 = vst [vmem:[#allocation2 + $0x1d0] sm:$0xff] %v1303
        %1368 = vst [vmem:[#allocation2 + $0x1d8] sm:$0xff] %v1304
        %1369 = vst [vmem:[#allocation2 + $0x1e0] sm:$0xff] %v1305
        %1370 = vst [vmem:[#allocation2 + $0x1e8] sm:$0xff] %v1306
        %1371 = vst [vmem:[#allocation2 + $0x1f0] sm:$0xff] %v1307
        %1372 = vst [vmem:[#allocation2 + $0x1f8] sm:$0xff] %v1308
        %p1373 = scmp.eq.s32.totalorder %s21, 1
        // Predicated region
        $region45: #{pointnet_cls_forward.2} parent=39 // pred_check
          %p1374 = pneg %p1373
        $region46: #{pointnet_cls_forward.2} parent=39 // pred_check_branch
          %1376 = sbr.rel (%p1374) target = $region48
        $region47: #{pointnet_cls_forward.2} parent=39 // pred_region
          %v1377 = vld [vmem:[#allocation2] sm:$0xff]
          %v1378 = vld [vmem:[#allocation2 + $0x8] sm:$0xff]
          %v1379 = vld [vmem:[#allocation2 + $0x10] sm:$0xff]
          %v1380 = vld [vmem:[#allocation2 + $0x18] sm:$0xff]
          %v1381 = vld [vmem:[#allocation2 + $0x20] sm:$0xff]
          %v1382 = vld [vmem:[#allocation2 + $0x28] sm:$0xff]
          %v1383 = vld [vmem:[#allocation2 + $0x30] sm:$0xff]
          %v1384 = vld [vmem:[#allocation2 + $0x38] sm:$0xff]
          %v1385 = vld [vmem:[#allocation2 + $0x40] sm:$0xff]
          %v1386 = vld [vmem:[#allocation2 + $0x48] sm:$0xff]
          %v1387 = vld [vmem:[#allocation2 + $0x50] sm:$0xff]
          %v1388 = vld [vmem:[#allocation2 + $0x58] sm:$0xff]
          %v1389 = vld [vmem:[#allocation2 + $0x60] sm:$0xff]
          %v1390 = vld [vmem:[#allocation2 + $0x68] sm:$0xff]
          %v1391 = vld [vmem:[#allocation2 + $0x70] sm:$0xff]
          %v1392 = vld [vmem:[#allocation2 + $0x78] sm:$0xff]
          %v1393 = vld [vmem:[#allocation2 + $0x80] sm:$0xff]
          %v1394 = vld [vmem:[#allocation2 + $0x88] sm:$0xff]
          %v1395 = vld [vmem:[#allocation2 + $0x90] sm:$0xff]
          %v1396 = vld [vmem:[#allocation2 + $0x98] sm:$0xff]
          %v1397 = vld [vmem:[#allocation2 + $0xa0] sm:$0xff]
          %v1398 = vld [vmem:[#allocation2 + $0xa8] sm:$0xff]
          %v1399 = vld [vmem:[#allocation2 + $0xb0] sm:$0xff]
          %v1400 = vld [vmem:[#allocation2 + $0xb8] sm:$0xff]
          %v1401 = vld [vmem:[#allocation2 + $0xc0] sm:$0xff]
          %v1402 = vld [vmem:[#allocation2 + $0xc8] sm:$0xff]
          %v1403 = vld [vmem:[#allocation2 + $0xd0] sm:$0xff]
          %v1404 = vld [vmem:[#allocation2 + $0xd8] sm:$0xff]
          %v1405 = vld [vmem:[#allocation2 + $0xe0] sm:$0xff]
          %v1406 = vld [vmem:[#allocation2 + $0xe8] sm:$0xff]
          %v1407 = vld [vmem:[#allocation2 + $0xf0] sm:$0xff]
          %v1408 = vld [vmem:[#allocation2 + $0xf8] sm:$0xff]
          %v1409 = vld [vmem:[#allocation2 + $0x100] sm:$0xff]
          %v1410 = vld [vmem:[#allocation2 + $0x108] sm:$0xff]
          %v1411 = vld [vmem:[#allocation2 + $0x110] sm:$0xff]
          %v1412 = vld [vmem:[#allocation2 + $0x118] sm:$0xff]
          %v1413 = vld [vmem:[#allocation2 + $0x120] sm:$0xff]
          %v1414 = vld [vmem:[#allocation2 + $0x128] sm:$0xff]
          %v1415 = vld [vmem:[#allocation2 + $0x130] sm:$0xff]
          %v1416 = vld [vmem:[#allocation2 + $0x138] sm:$0xff]
          %v1417 = vld [vmem:[#allocation2 + $0x140] sm:$0xff]
          %v1418 = vld [vmem:[#allocation2 + $0x148] sm:$0xff]
          %v1419 = vld [vmem:[#allocation2 + $0x150] sm:$0xff]
          %v1420 = vld [vmem:[#allocation2 + $0x158] sm:$0xff]
          %v1421 = vld [vmem:[#allocation2 + $0x160] sm:$0xff]
          %v1422 = vld [vmem:[#allocation2 + $0x168] sm:$0xff]
          %v1423 = vld [vmem:[#allocation2 + $0x170] sm:$0xff]
          %v1424 = vld [vmem:[#allocation2 + $0x178] sm:$0xff]
          %v1425 = vld [vmem:[#allocation2 + $0x180] sm:$0xff]
          %v1426 = vld [vmem:[#allocation2 + $0x188] sm:$0xff]
          %v1427 = vld [vmem:[#allocation2 + $0x190] sm:$0xff]
          %v1428 = vld [vmem:[#allocation2 + $0x198] sm:$0xff]
          %v1429 = vld [vmem:[#allocation2 + $0x1a0] sm:$0xff]
          %v1430 = vld [vmem:[#allocation2 + $0x1a8] sm:$0xff]
          %v1431 = vld [vmem:[#allocation2 + $0x1b0] sm:$0xff]
          %v1432 = vld [vmem:[#allocation2 + $0x1b8] sm:$0xff]
          %v1433 = vld [vmem:[#allocation2 + $0x1c0] sm:$0xff]
          %v1434 = vld [vmem:[#allocation2 + $0x1c8] sm:$0xff]
          %v1435 = vld [vmem:[#allocation2 + $0x1d0] sm:$0xff]
          %v1436 = vld [vmem:[#allocation2 + $0x1d8] sm:$0xff]
          %v1437 = vld [vmem:[#allocation2 + $0x1e0] sm:$0xff]
          %v1438 = vld [vmem:[#allocation2 + $0x1e8] sm:$0xff]
          %v1439 = vld [vmem:[#allocation2 + $0x1f0] sm:$0xff]
          %v1440 = vld [vmem:[#allocation2 + $0x1f8] sm:$0xff]
          %v1441 = vld [vmem:[%s4] sm:$0xff]
          %v1442 = vld [vmem:[%s4 + $0x8] sm:$0xff]
          %v1443 = vld [vmem:[%s4 + $0x10] sm:$0xff]
          %v1444 = vld [vmem:[%s4 + $0x18] sm:$0xff]
          %v1445 = vld [vmem:[%s4 + $0x20] sm:$0xff]
          %v1446 = vld [vmem:[%s4 + $0x28] sm:$0xff]
          %v1447 = vld [vmem:[%s4 + $0x30] sm:$0xff]
          %v1448 = vld [vmem:[%s4 + $0x38] sm:$0xff]
          %1450 = vset.pattern.permute.xlu0 0
          %1451 = vperm.xlu0 %1450, %v1441
          %v1452 = vpop.permute.xlu0 %1451
          %1455 = vset.pattern.permute.xlu0 0
          %1456 = vperm.xlu0 %1455, %v1442
          %v1457 = vpop.permute.xlu0 %1456
          %1460 = vset.pattern.permute.xlu0 0
          %1461 = vperm.xlu0 %1460, %v1443
          %v1462 = vpop.permute.xlu0 %1461
          %1465 = vset.pattern.permute.xlu0 0
          %1466 = vperm.xlu0 %1465, %v1444
          %v1467 = vpop.permute.xlu0 %1466
          %1470 = vset.pattern.permute.xlu0 0
          %1471 = vperm.xlu0 %1470, %v1445
          %v1472 = vpop.permute.xlu0 %1471
          %1475 = vset.pattern.permute.xlu0 0
          %1476 = vperm.xlu0 %1475, %v1446
          %v1477 = vpop.permute.xlu0 %1476
          %1480 = vset.pattern.permute.xlu0 0
          %1481 = vperm.xlu0 %1480, %v1447
          %v1482 = vpop.permute.xlu0 %1481
          %1485 = vset.pattern.permute.xlu0 0
          %1486 = vperm.xlu0 %1485, %v1448
          %v1487 = vpop.permute.xlu0 %1486
          %v1489 = vadd.f32 %v1377, %v1452
          %v1490 = vadd.f32 %v1378, %v1452
          %v1491 = vadd.f32 %v1379, %v1452
          %v1492 = vadd.f32 %v1380, %v1452
          %v1493 = vadd.f32 %v1381, %v1452
          %v1494 = vadd.f32 %v1382, %v1452
          %v1495 = vadd.f32 %v1383, %v1452
          %v1496 = vadd.f32 %v1384, %v1452
          %v1497 = vadd.f32 %v1385, %v1457
          %v1498 = vadd.f32 %v1386, %v1457
          %v1499 = vadd.f32 %v1387, %v1457
          %v1500 = vadd.f32 %v1388, %v1457
          %v1501 = vadd.f32 %v1389, %v1457
          %v1502 = vadd.f32 %v1390, %v1457
          %v1503 = vadd.f32 %v1391, %v1457
          %v1504 = vadd.f32 %v1392, %v1457
          %v1505 = vadd.f32 %v1393, %v1462
          %v1506 = vadd.f32 %v1394, %v1462
          %v1507 = vadd.f32 %v1395, %v1462
          %v1508 = vadd.f32 %v1396, %v1462
          %v1509 = vadd.f32 %v1397, %v1462
          %v1510 = vadd.f32 %v1398, %v1462
          %v1511 = vadd.f32 %v1399, %v1462
          %v1512 = vadd.f32 %v1400, %v1462
          %v1513 = vadd.f32 %v1401, %v1467
          %v1514 = vadd.f32 %v1402, %v1467
          %v1515 = vadd.f32 %v1403, %v1467
          %v1516 = vadd.f32 %v1404, %v1467
          %v1517 = vadd.f32 %v1405, %v1467
          %v1518 = vadd.f32 %v1406, %v1467
          %v1519 = vadd.f32 %v1407, %v1467
          %v1520 = vadd.f32 %v1408, %v1467
          %v1521 = vadd.f32 %v1409, %v1472
          %v1522 = vadd.f32 %v1410, %v1472
          %v1523 = vadd.f32 %v1411, %v1472
          %v1524 = vadd.f32 %v1412, %v1472
          %v1525 = vadd.f32 %v1413, %v1472
          %v1526 = vadd.f32 %v1414, %v1472
          %v1527 = vadd.f32 %v1415, %v1472
          %v1528 = vadd.f32 %v1416, %v1472
          %v1529 = vadd.f32 %v1417, %v1477
          %v1530 = vadd.f32 %v1418, %v1477
          %v1531 = vadd.f32 %v1419, %v1477
          %v1532 = vadd.f32 %v1420, %v1477
          %v1533 = vadd.f32 %v1421, %v1477
          %v1534 = vadd.f32 %v1422, %v1477
          %v1535 = vadd.f32 %v1423, %v1477
          %v1536 = vadd.f32 %v1424, %v1477
          %v1537 = vadd.f32 %v1425, %v1482
          %v1538 = vadd.f32 %v1426, %v1482
          %v1539 = vadd.f32 %v1427, %v1482
          %v1540 = vadd.f32 %v1428, %v1482
          %v1541 = vadd.f32 %v1429, %v1482
          %v1542 = vadd.f32 %v1430, %v1482
          %v1543 = vadd.f32 %v1431, %v1482
          %v1544 = vadd.f32 %v1432, %v1482
          %v1545 = vadd.f32 %v1433, %v1487
          %v1546 = vadd.f32 %v1434, %v1487
          %v1547 = vadd.f32 %v1435, %v1487
          %v1548 = vadd.f32 %v1436, %v1487
          %v1549 = vadd.f32 %v1437, %v1487
          %v1550 = vadd.f32 %v1438, %v1487
          %v1551 = vadd.f32 %v1439, %v1487
          %v1552 = vadd.f32 %v1440, %v1487
          %v1553 = vmax.f32 %v1489, 0.0
          %v1554 = vmax.f32 %v1490, 0.0
          %v1555 = vmax.f32 %v1491, 0.0
          %v1556 = vmax.f32 %v1492, 0.0
          %v1557 = vmax.f32 %v1493, 0.0
          %v1558 = vmax.f32 %v1494, 0.0
          %v1559 = vmax.f32 %v1495, 0.0
          %v1560 = vmax.f32 %v1496, 0.0
          %v1561 = vmax.f32 %v1497, 0.0
          %v1562 = vmax.f32 %v1498, 0.0
          %v1563 = vmax.f32 %v1499, 0.0
          %v1564 = vmax.f32 %v1500, 0.0
          %v1565 = vmax.f32 %v1501, 0.0
          %v1566 = vmax.f32 %v1502, 0.0
          %v1567 = vmax.f32 %v1503, 0.0
          %v1568 = vmax.f32 %v1504, 0.0
          %v1569 = vmax.f32 %v1505, 0.0
          %v1570 = vmax.f32 %v1506, 0.0
          %v1571 = vmax.f32 %v1507, 0.0
          %v1572 = vmax.f32 %v1508, 0.0
          %v1573 = vmax.f32 %v1509, 0.0
          %v1574 = vmax.f32 %v1510, 0.0
          %v1575 = vmax.f32 %v1511, 0.0
          %v1576 = vmax.f32 %v1512, 0.0
          %v1577 = vmax.f32 %v1513, 0.0
          %v1578 = vmax.f32 %v1514, 0.0
          %v1579 = vmax.f32 %v1515, 0.0
          %v1580 = vmax.f32 %v1516, 0.0
          %v1581 = vmax.f32 %v1517, 0.0
          %v1582 = vmax.f32 %v1518, 0.0
          %v1583 = vmax.f32 %v1519, 0.0
          %v1584 = vmax.f32 %v1520, 0.0
          %v1585 = vmax.f32 %v1521, 0.0
          %v1586 = vmax.f32 %v1522, 0.0
          %v1587 = vmax.f32 %v1523, 0.0
          %v1588 = vmax.f32 %v1524, 0.0
          %v1589 = vmax.f32 %v1525, 0.0
          %v1590 = vmax.f32 %v1526, 0.0
          %v1591 = vmax.f32 %v1527, 0.0
          %v1592 = vmax.f32 %v1528, 0.0
          %v1593 = vmax.f32 %v1529, 0.0
          %v1594 = vmax.f32 %v1530, 0.0
          %v1595 = vmax.f32 %v1531, 0.0
          %v1596 = vmax.f32 %v1532, 0.0
          %v1597 = vmax.f32 %v1533, 0.0
          %v1598 = vmax.f32 %v1534, 0.0
          %v1599 = vmax.f32 %v1535, 0.0
          %v1600 = vmax.f32 %v1536, 0.0
          %v1601 = vmax.f32 %v1537, 0.0
          %v1602 = vmax.f32 %v1538, 0.0
          %v1603 = vmax.f32 %v1539, 0.0
          %v1604 = vmax.f32 %v1540, 0.0
          %v1605 = vmax.f32 %v1541, 0.0
          %v1606 = vmax.f32 %v1542, 0.0
          %v1607 = vmax.f32 %v1543, 0.0
          %v1608 = vmax.f32 %v1544, 0.0
          %v1609 = vmax.f32 %v1545, 0.0
          %v1610 = vmax.f32 %v1546, 0.0
          %v1611 = vmax.f32 %v1547, 0.0
          %v1612 = vmax.f32 %v1548, 0.0
          %v1613 = vmax.f32 %v1549, 0.0
          %v1614 = vmax.f32 %v1550, 0.0
          %v1615 = vmax.f32 %v1551, 0.0
          %v1616 = vmax.f32 %v1552, 0.0
          %v1617 = vpack.c.bf16 %v1561, %v1553
          %v1618 = vpack.c.bf16 %v1562, %v1554
          %v1619 = vpack.c.bf16 %v1563, %v1555
          %v1620 = vpack.c.bf16 %v1564, %v1556
          %v1621 = vpack.c.bf16 %v1565, %v1557
          %v1622 = vpack.c.bf16 %v1566, %v1558
          %v1623 = vpack.c.bf16 %v1567, %v1559
          %v1624 = vpack.c.bf16 %v1568, %v1560
          %v1625 = vpack.c.bf16 %v1577, %v1569
          %v1626 = vpack.c.bf16 %v1578, %v1570
          %v1627 = vpack.c.bf16 %v1579, %v1571
          %v1628 = vpack.c.bf16 %v1580, %v1572
          %v1629 = vpack.c.bf16 %v1581, %v1573
          %v1630 = vpack.c.bf16 %v1582, %v1574
          %v1631 = vpack.c.bf16 %v1583, %v1575
          %v1632 = vpack.c.bf16 %v1584, %v1576
          %v1633 = vpack.c.bf16 %v1593, %v1585
          %v1634 = vpack.c.bf16 %v1594, %v1586
          %v1635 = vpack.c.bf16 %v1595, %v1587
          %v1636 = vpack.c.bf16 %v1596, %v1588
          %v1637 = vpack.c.bf16 %v1597, %v1589
          %v1638 = vpack.c.bf16 %v1598, %v1590
          %v1639 = vpack.c.bf16 %v1599, %v1591
          %v1640 = vpack.c.bf16 %v1600, %v1592
          %v1641 = vpack.c.bf16 %v1609, %v1601
          %v1642 = vpack.c.bf16 %v1610, %v1602
          %v1643 = vpack.c.bf16 %v1611, %v1603
          %v1644 = vpack.c.bf16 %v1612, %v1604
          %v1645 = vpack.c.bf16 %v1613, %v1605
          %v1646 = vpack.c.bf16 %v1614, %v1606
          %v1647 = vpack.c.bf16 %v1615, %v1607
          %v1648 = vpack.c.bf16 %v1616, %v1608
          %v1681 = vunpack.c.l.b16 %v1617
          %v1682 = vunpack.c.l.b16 %v1618
          %v1683 = vunpack.c.l.b16 %v1619
          %v1684 = vunpack.c.l.b16 %v1620
          %v1685 = vunpack.c.l.b16 %v1621
          %v1686 = vunpack.c.l.b16 %v1622
          %v1687 = vunpack.c.l.b16 %v1623
          %v1688 = vunpack.c.l.b16 %v1624
          %v1689 = vunpack.c.h.b16 %v1617
          %v1690 = vunpack.c.h.b16 %v1618
          %v1691 = vunpack.c.h.b16 %v1619
          %v1692 = vunpack.c.h.b16 %v1620
          %v1693 = vunpack.c.h.b16 %v1621
          %v1694 = vunpack.c.h.b16 %v1622
          %v1695 = vunpack.c.h.b16 %v1623
          %v1696 = vunpack.c.h.b16 %v1624
          %v1697 = vunpack.c.l.b16 %v1625
          %v1698 = vunpack.c.l.b16 %v1626
          %v1699 = vunpack.c.l.b16 %v1627
          %v1700 = vunpack.c.l.b16 %v1628
          %v1701 = vunpack.c.l.b16 %v1629
          %v1702 = vunpack.c.l.b16 %v1630
          %v1703 = vunpack.c.l.b16 %v1631
          %v1704 = vunpack.c.l.b16 %v1632
          %v1705 = vunpack.c.h.b16 %v1625
          %v1706 = vunpack.c.h.b16 %v1626
          %v1707 = vunpack.c.h.b16 %v1627
          %v1708 = vunpack.c.h.b16 %v1628
          %v1709 = vunpack.c.h.b16 %v1629
          %v1710 = vunpack.c.h.b16 %v1630
          %v1711 = vunpack.c.h.b16 %v1631
          %v1712 = vunpack.c.h.b16 %v1632
          %v1713 = vunpack.c.l.b16 %v1633
          %v1714 = vunpack.c.l.b16 %v1634
          %v1715 = vunpack.c.l.b16 %v1635
          %v1716 = vunpack.c.l.b16 %v1636
          %v1717 = vunpack.c.l.b16 %v1637
          %v1718 = vunpack.c.l.b16 %v1638
          %v1719 = vunpack.c.l.b16 %v1639
          %v1720 = vunpack.c.l.b16 %v1640
          %v1721 = vunpack.c.h.b16 %v1633
          %v1722 = vunpack.c.h.b16 %v1634
          %v1723 = vunpack.c.h.b16 %v1635
          %v1724 = vunpack.c.h.b16 %v1636
          %v1725 = vunpack.c.h.b16 %v1637
          %v1726 = vunpack.c.h.b16 %v1638
          %v1727 = vunpack.c.h.b16 %v1639
          %v1728 = vunpack.c.h.b16 %v1640
          %v1729 = vunpack.c.l.b16 %v1641
          %v1730 = vunpack.c.l.b16 %v1642
          %v1731 = vunpack.c.l.b16 %v1643
          %v1732 = vunpack.c.l.b16 %v1644
          %v1733 = vunpack.c.l.b16 %v1645
          %v1734 = vunpack.c.l.b16 %v1646
          %v1735 = vunpack.c.l.b16 %v1647
          %v1736 = vunpack.c.l.b16 %v1648
          %v1737 = vunpack.c.h.b16 %v1641
          %v1738 = vunpack.c.h.b16 %v1642
          %v1739 = vunpack.c.h.b16 %v1643
          %v1740 = vunpack.c.h.b16 %v1644
          %v1741 = vunpack.c.h.b16 %v1645
          %v1742 = vunpack.c.h.b16 %v1646
          %v1743 = vunpack.c.h.b16 %v1647
          %v1744 = vunpack.c.h.b16 %v1648
          %v1745 = vpack.c.b16 %v1682, %v1681
          %v1746 = vpack.c.b16 %v1684, %v1683
          %v1747 = vpack.c.b16 %v1686, %v1685
          %v1748 = vpack.c.b16 %v1688, %v1687
          %v1749 = vpack.c.b16 %v1690, %v1689
          %v1750 = vpack.c.b16 %v1692, %v1691
          %v1751 = vpack.c.b16 %v1694, %v1693
          %v1752 = vpack.c.b16 %v1696, %v1695
          %v1753 = vpack.c.b16 %v1698, %v1697
          %v1754 = vpack.c.b16 %v1700, %v1699
          %v1755 = vpack.c.b16 %v1702, %v1701
          %v1756 = vpack.c.b16 %v1704, %v1703
          %v1757 = vpack.c.b16 %v1706, %v1705
          %v1758 = vpack.c.b16 %v1708, %v1707
          %v1759 = vpack.c.b16 %v1710, %v1709
          %v1760 = vpack.c.b16 %v1712, %v1711
          %v1761 = vpack.c.b16 %v1714, %v1713
          %v1762 = vpack.c.b16 %v1716, %v1715
          %v1763 = vpack.c.b16 %v1718, %v1717
          %v1764 = vpack.c.b16 %v1720, %v1719
          %v1765 = vpack.c.b16 %v1722, %v1721
          %v1766 = vpack.c.b16 %v1724, %v1723
          %v1767 = vpack.c.b16 %v1726, %v1725
          %v1768 = vpack.c.b16 %v1728, %v1727
          %v1769 = vpack.c.b16 %v1730, %v1729
          %v1770 = vpack.c.b16 %v1732, %v1731
          %v1771 = vpack.c.b16 %v1734, %v1733
          %v1772 = vpack.c.b16 %v1736, %v1735
          %v1773 = vpack.c.b16 %v1738, %v1737
          %v1774 = vpack.c.b16 %v1740, %v1739
          %v1775 = vpack.c.b16 %v1742, %v1741
          %v1776 = vpack.c.b16 %v1744, %v1743
          %1809 = vst [vmem:[%s235] sm:$0xff] %v1745
          %1810 = vst [vmem:[%s235 + $0x8] sm:$0xff] %v1746
          %1811 = vst [vmem:[%s235 + $0x10] sm:$0xff] %v1747
          %1812 = vst [vmem:[%s235 + $0x18] sm:$0xff] %v1748
          %1813 = vst [vmem:[%s235 + $0x20] sm:$0xff] %v1749
          %1814 = vst [vmem:[%s235 + $0x28] sm:$0xff] %v1750
          %1815 = vst [vmem:[%s235 + $0x30] sm:$0xff] %v1751
          %1816 = vst [vmem:[%s235 + $0x38] sm:$0xff] %v1752
          %1817 = vst [vmem:[%s235 + $0x40] sm:$0xff] %v1753
          %1818 = vst [vmem:[%s235 + $0x48] sm:$0xff] %v1754
          %1819 = vst [vmem:[%s235 + $0x50] sm:$0xff] %v1755
          %1820 = vst [vmem:[%s235 + $0x58] sm:$0xff] %v1756
          %1821 = vst [vmem:[%s235 + $0x60] sm:$0xff] %v1757
          %1822 = vst [vmem:[%s235 + $0x68] sm:$0xff] %v1758
          %1823 = vst [vmem:[%s235 + $0x70] sm:$0xff] %v1759
          %1824 = vst [vmem:[%s235 + $0x78] sm:$0xff] %v1760
          %1825 = vst [vmem:[%s235 + $0x80] sm:$0xff] %v1761
          %1826 = vst [vmem:[%s235 + $0x88] sm:$0xff] %v1762
          %1827 = vst [vmem:[%s235 + $0x90] sm:$0xff] %v1763
          %1828 = vst [vmem:[%s235 + $0x98] sm:$0xff] %v1764
          %1829 = vst [vmem:[%s235 + $0xa0] sm:$0xff] %v1765
          %1830 = vst [vmem:[%s235 + $0xa8] sm:$0xff] %v1766
          %1831 = vst [vmem:[%s235 + $0xb0] sm:$0xff] %v1767
          %1832 = vst [vmem:[%s235 + $0xb8] sm:$0xff] %v1768
          %1833 = vst [vmem:[%s235 + $0xc0] sm:$0xff] %v1769
          %1834 = vst [vmem:[%s235 + $0xc8] sm:$0xff] %v1770
          %1835 = vst [vmem:[%s235 + $0xd0] sm:$0xff] %v1771
          %1836 = vst [vmem:[%s235 + $0xd8] sm:$0xff] %v1772
          %1837 = vst [vmem:[%s235 + $0xe0] sm:$0xff] %v1773
          %1838 = vst [vmem:[%s235 + $0xe8] sm:$0xff] %v1774
          %1839 = vst [vmem:[%s235 + $0xf0] sm:$0xff] %v1775
          %1840 = vst [vmem:[%s235 + $0xf8] sm:$0xff] %v1776
        $region48: #{pointnet_cls_forward.2} parent=39 // pred_fallthru
          _
        %s1841 = sand.u32 %s148, 1
        %s1842 = sand.u32 %s148, 1
        %s1843 = smul.addr %s1842, 256
        %s1844 = scalar_lea.vmem [#allocation3], %s1843
        // Predicated region
        $region49: #{pointnet_cls_forward.2} parent=39 // pred_check
          %p1845 = pneg %p158
        $region50: #{pointnet_cls_forward.2} parent=39 // pred_check_branch
          %1847 = sbr.rel (%p1845) target = $region52
        $region51: #{pointnet_cls_forward.2} parent=39 // pred_region
          %s1848 = smul.u32 8, %s20
          %s1849 = smul.addr %s1848, 4
          %s1850 = scalar_lea.vmem %s5, %s1849
          // Predicated region
          $region53: #{pointnet_cls_forward.2} parent=51 // pred_check
            _
          $region54: #{pointnet_cls_forward.2} parent=51 // pred_check_branch
            %1852 = sbr.rel (0) target = $region56
          $region55: #{pointnet_cls_forward.2} parent=51 // pred_region
            // Predicated region
            $region57: #{pointnet_cls_forward.2} parent=55 // pred_check
              _
            $region58: #{pointnet_cls_forward.2} parent=55 // pred_check_branch
              %1854 = sbr.rel (0) target = $region60
            $region59: #{pointnet_cls_forward.2} parent=55 // pred_region
              loop: start=0, step=1, limit=1
              $region61: #{pointnet_cls_forward.2} parent=59 // loop_pre_header
                _
              $region62: #{pointnet_cls_forward.2} parent=59 // loop_header
                %s1856 = sphi 0, %s1860
                %p1857 = scmp.ge.s32.totalorder %s1856, 1
                %s1861 = sphi %s1844, %s1844
                %s1862 = sphi %s1850, %s1850
              $region63: #{pointnet_cls_forward.2} parent=59 // loop_header_branch
                %1859 = sbr.rel (%p1857) target = $region67
              $region64: #{pointnet_cls_forward.2} parent=59 // loop_body
                %v1863 = vld [vmem:[%s1861] sm:$0xff]
                %1864 = vst [vmem:[%s1862] sm:$0xff] %v1863
                %v1865 = vld [vmem:[%s1861 + $0x8] sm:$0xff]
                %1866 = vst [vmem:[%s1862 + $0x8] sm:$0xff] %v1865
                %v1867 = vld [vmem:[%s1861 + $0x10] sm:$0xff]
                %1868 = vst [vmem:[%s1862 + $0x10] sm:$0xff] %v1867
                %v1869 = vld [vmem:[%s1861 + $0x18] sm:$0xff]
                %1870 = vst [vmem:[%s1862 + $0x18] sm:$0xff] %v1869
                %v1871 = vld [vmem:[%s1861 + $0x20] sm:$0xff]
                %1872 = vst [vmem:[%s1862 + $0x40] sm:$0xff] %v1871
                %v1873 = vld [vmem:[%s1861 + $0x28] sm:$0xff]
                %1874 = vst [vmem:[%s1862 + $0x48] sm:$0xff] %v1873
                %v1875 = vld [vmem:[%s1861 + $0x30] sm:$0xff]
                %1876 = vst [vmem:[%s1862 + $0x50] sm:$0xff] %v1875
                %v1877 = vld [vmem:[%s1861 + $0x38] sm:$0xff]
                %1878 = vst [vmem:[%s1862 + $0x58] sm:$0xff] %v1877
                %v1879 = vld [vmem:[%s1861 + $0x40] sm:$0xff]
                %1880 = vst [vmem:[%s1862 + $0x80] sm:$0xff] %v1879
                %v1881 = vld [vmem:[%s1861 + $0x48] sm:$0xff]
                %1882 = vst [vmem:[%s1862 + $0x88] sm:$0xff] %v1881
                %v1883 = vld [vmem:[%s1861 + $0x50] sm:$0xff]
                %1884 = vst [vmem:[%s1862 + $0x90] sm:$0xff] %v1883
                %v1885 = vld [vmem:[%s1861 + $0x58] sm:$0xff]
                %1886 = vst [vmem:[%s1862 + $0x98] sm:$0xff] %v1885
                %v1887 = vld [vmem:[%s1861 + $0x60] sm:$0xff]
                %1888 = vst [vmem:[%s1862 + $0xc0] sm:$0xff] %v1887
                %v1889 = vld [vmem:[%s1861 + $0x68] sm:$0xff]
                %1890 = vst [vmem:[%s1862 + $0xc8] sm:$0xff] %v1889
                %v1891 = vld [vmem:[%s1861 + $0x70] sm:$0xff]
                %1892 = vst [vmem:[%s1862 + $0xd0] sm:$0xff] %v1891
                %v1893 = vld [vmem:[%s1861 + $0x78] sm:$0xff]
                %1894 = vst [vmem:[%s1862 + $0xd8] sm:$0xff] %v1893
                %v1895 = vld [vmem:[%s1861 + $0x80] sm:$0xff]
                %1896 = vst [vmem:[%s1862 + $0x100] sm:$0xff] %v1895
                %v1897 = vld [vmem:[%s1861 + $0x88] sm:$0xff]
                %1898 = vst [vmem:[%s1862 + $0x108] sm:$0xff] %v1897
                %v1899 = vld [vmem:[%s1861 + $0x90] sm:$0xff]
                %1900 = vst [vmem:[%s1862 + $0x110] sm:$0xff] %v1899
                %v1901 = vld [vmem:[%s1861 + $0x98] sm:$0xff]
                %1902 = vst [vmem:[%s1862 + $0x118] sm:$0xff] %v1901
                %v1903 = vld [vmem:[%s1861 + $0xa0] sm:$0xff]
                %1904 = vst [vmem:[%s1862 + $0x140] sm:$0xff] %v1903
                %v1905 = vld [vmem:[%s1861 + $0xa8] sm:$0xff]
                %1906 = vst [vmem:[%s1862 + $0x148] sm:$0xff] %v1905
                %v1907 = vld [vmem:[%s1861 + $0xb0] sm:$0xff]
                %1908 = vst [vmem:[%s1862 + $0x150] sm:$0xff] %v1907
                %v1909 = vld [vmem:[%s1861 + $0xb8] sm:$0xff]
                %1910 = vst [vmem:[%s1862 + $0x158] sm:$0xff] %v1909
                %v1911 = vld [vmem:[%s1861 + $0xc0] sm:$0xff]
                %1912 = vst [vmem:[%s1862 + $0x180] sm:$0xff] %v1911
                %v1913 = vld [vmem:[%s1861 + $0xc8] sm:$0xff]
                %1914 = vst [vmem:[%s1862 + $0x188] sm:$0xff] %v1913
                %v1915 = vld [vmem:[%s1861 + $0xd0] sm:$0xff]
                %1916 = vst [vmem:[%s1862 + $0x190] sm:$0xff] %v1915
                %v1917 = vld [vmem:[%s1861 + $0xd8] sm:$0xff]
                %1918 = vst [vmem:[%s1862 + $0x198] sm:$0xff] %v1917
                %v1919 = vld [vmem:[%s1861 + $0xe0] sm:$0xff]
                %1920 = vst [vmem:[%s1862 + $0x1c0] sm:$0xff] %v1919
                %v1921 = vld [vmem:[%s1861 + $0xe8] sm:$0xff]
                %1922 = vst [vmem:[%s1862 + $0x1c8] sm:$0xff] %v1921
                %v1923 = vld [vmem:[%s1861 + $0xf0] sm:$0xff]
                %1924 = vst [vmem:[%s1862 + $0x1d0] sm:$0xff] %v1923
                %v1925 = vld [vmem:[%s1861 + $0xf8] sm:$0xff]
                %1926 = vst [vmem:[%s1862 + $0x1d8] sm:$0xff] %v1925
              $region65: #{pointnet_cls_forward.2} parent=59 // loop_footer
                %s1860 = sadd.s32 1, %s1856
              $region66: #{pointnet_cls_forward.2} parent=59 // loop_footer_branch
                %1855 = sbr.rel target = $region62
              $region67: #{pointnet_cls_forward.2} parent=59 // loop_exit
                _
            $region60: #{pointnet_cls_forward.2} parent=55 // pred_fallthru
              _
            // Predicated region
            $region68: #{pointnet_cls_forward.2} parent=55 // pred_check
              _
            $region69: #{pointnet_cls_forward.2} parent=55 // pred_check_branch
              %1928 = sbr.rel target = $region71
            $region70: #{pointnet_cls_forward.2} parent=55 // pred_region
              _
            $region71: #{pointnet_cls_forward.2} parent=55 // pred_fallthru
              _
          $region56: #{pointnet_cls_forward.2} parent=51 // pred_fallthru
            _
          %1929 = vnop
        $region52: #{pointnet_cls_forward.2} parent=39 // pred_fallthru
          _
      $region40: #{pointnet_cls_forward.2} parent=5 // pred_fallthru
        _
      %p1930 = scmp.le.s32.totalorder 2, %s11
      // Predicated region
      $region72: #{pointnet_cls_forward.2} parent=5 // pred_check
        %p1931 = pneg %p1930
      $region73: #{pointnet_cls_forward.2} parent=5 // pred_check_branch
        %1933 = sbr.rel (%p1931) target = $region75
      $region74: #{pointnet_cls_forward.2} parent=5 // pred_region
        %s1934 = ssub.s32 %s11, 2
        // Predicated region
        $region76: #{pointnet_cls_forward.2} parent=74 // pred_check
          %p1935 = pneg %p164
        $region77: #{pointnet_cls_forward.2} parent=74 // pred_check_branch
          %1937 = sbr.rel (%p1935) target = $region79
        $region78: #{pointnet_cls_forward.2} parent=74 // pred_region
          %s1938 = sand.u32 %s149, 1
          %s1939 = sand.u32 %s149, 1
          %s1940 = smul.addr %s1939, 256
          %s1941 = scalar_lea.vmem [#allocation3], %s1940
        $region79: #{pointnet_cls_forward.2} parent=74 // pred_fallthru
          _
      $region75: #{pointnet_cls_forward.2} parent=5 // pred_fallthru
        _
    $region6: #{pointnet_cls_forward.2} parent=1 // loop_footer
      %s15 = sadd.s32 1, %s11
    $region7: #{pointnet_cls_forward.2} parent=1 // loop_footer_branch
      %10 = sbr.rel target = $region3
    $region8: #{pointnet_cls_forward.2} parent=1 // loop_exit
      _

// kernel: pointnet_cls_forward.3
$region0: #{pointnet_cls_forward.3}
  #allocation0 [shape = 'u32[]', space=smem, size = 0x4, offset = 0x4, fixed_abs, tag = 'smem constant byte address 0x4 - core index']
  #allocation1 [shape = 'u32[144,128]{1,0:T(1,128)}', space=vmem, size = 0x12000, scoped, tag = 'internal scratch']
  %s0 = inlined_call_operand.vmem [shape: bf16[64,2048], index: 0, kind: input, shape index: {}]
  %s1 = inlined_call_operand.vmem [shape: bf16[1024,512], index: 1, kind: input, shape index: {}]
  %s2 = inlined_call_operand.vmem [shape: f32[1,512], index: 2, kind: input, shape index: {}]
  %s3 = inlined_call_operand.hbm [shape: bf16[512,256], index: 3, kind: input, shape index: {}]
  %s4 = inlined_call_operand.vmem [shape: f32[1,256], index: 4, kind: input, shape index: {}]
  %s5 = inlined_call_operand.vmem [shape: bf16[256,2], index: 5, kind: input, shape index: {}]
  %s6 = inlined_call_operand.vmem [shape: f32[1,2], index: 6, kind: input, shape index: {}]
  %s7 = inlined_call_operand.vmem [shape: f32[64,4], index: 7, kind: output, shape index: {}]
  %s8 = sld [smem:[#allocation0]]
  $region65: #{pointnet_cls_forward.3} parent=0
    _
  %s10 = ssub.s32 1, %s8
  %s11 = scalar_select 0, %s10, %s8
  $region1: #{pointnet_cls_forward.3} parent=0
    #allocation2 [shape = 'u8[262144]{0}', space=vmem, size = 0x40000, scoped, tag = 'input window, operand 3, single buffered']
    #allocation3 [shape = 's32[2]{0}', space=sflag, size = 0x8, scoped, tag = 'scoped memory for pointnet_cls_forward.3']
    %12 = vsyncpa [#allocation3], 0
    loop: start=0, step=1, limit=6
    $region2: #{pointnet_cls_forward.3} parent=1 // loop_pre_header
      _
    $region3: #{pointnet_cls_forward.3} parent=1 // loop_header
      %s14 = sphi 0, %s18
      %p15 = scmp.ge.s32.totalorder %s14, 6
      %s24 = sphi 0, %s26
      %s27 = sphi 0, %s24
      %s28 = sphi 0, %s27
      %s44 = sphi 0, %s28
      %s48 = sphi 0, %s48
      %s50 = sphi 0, %s48
      %s51 = sphi 0, %s50
      %s65 = sphi 0, %s51
      %s69 = sphi 0, %s69
      %s71 = sphi 0, %s69
      %s72 = sphi 0, %s71
      %s86 = sphi 0, %s72
      %s90 = sphi 0, %s90
      %s92 = sphi 0, %s90
      %s93 = sphi 0, %s92
      %s107 = sphi 0, %s93
      %s111 = sphi 0, %s111
      %s113 = sphi 0, %s111
      %s114 = sphi 0, %s113
      %s128 = sphi 0, %s114
      %s132 = sphi 0, %s132
      %s134 = sphi 0, %s132
      %s135 = sphi 0, %s134
      %s149 = sphi 0, %s135
      %s153 = sphi 0, %s153
      %s155 = sphi 0, %s153
      %s156 = sphi 0, %s155
      %s170 = sphi 0, %s156
      %s176 = sphi 0, %s178
      %s179 = sphi 0, %s176
      %s180 = sphi 0, %s179
      %s196 = sphi 0, %s180
    $region4: #{pointnet_cls_forward.3} parent=1 // loop_header_branch
      %17 = sbr.rel (%p15) target = $region8
    $region5: #{pointnet_cls_forward.3} parent=1 // loop_body
      %s19 = ssub.s32 %s14, 1
      %s20 = ssub.s32 %s14, 2
      %s21 = sadd.s32 %s14, 1
      %s22 = ssub.s32 %s14, %s21
      %p23 = scmp.eq.s32.totalorder %s22, 0
      %s25 = sadd.s32 %s24, 1
      %s26 = scalar_select %p23, %s24, %s25
      %p29 = pneg %p23
      %p30 = scmp.eq.s32.totalorder %s14, 3
      %p31 = por %p29, %p30
      %p32 = scmp.ne.s32.totalorder %s24, %s27
      %p33 = scmp.eq.s32.totalorder %s14, 0
      %p34 = por %p32, %p33
      %p35 = scmp.ne.s32.totalorder %s24, %s27
      %p36 = scmp.eq.s32.totalorder %s19, 3
      %p37 = por %p35, %p36
      %p38 = scmp.ne.s32.totalorder %s27, %s28
      %p39 = scmp.eq.s32.totalorder %s19, 0
      %p40 = por %p38, %p39
      %p41 = scmp.ne.s32.totalorder %s27, %s28
      %p42 = scmp.eq.s32.totalorder %s20, 3
      %p43 = por %p41, %p42
      %p45 = scmp.ne.s32.totalorder %s28, %s44
      %p46 = scmp.eq.s32.totalorder %s20, 0
      %p47 = por %p45, %p46
      %s49 = sadd.s32 %s48, 1
      %p52 = scmp.eq.s32.totalorder %s14, 3
      %p53 = scmp.ne.s32.totalorder %s48, %s50
      %p54 = scmp.eq.s32.totalorder %s14, 0
      %p55 = por %p53, %p54
      %p56 = scmp.ne.s32.totalorder %s48, %s50
      %p57 = scmp.eq.s32.totalorder %s19, 3
      %p58 = por %p56, %p57
      %p59 = scmp.ne.s32.totalorder %s50, %s51
      %p60 = scmp.eq.s32.totalorder %s19, 0
      %p61 = por %p59, %p60
      %p62 = scmp.ne.s32.totalorder %s50, %s51
      %p63 = scmp.eq.s32.totalorder %s20, 3
      %p64 = por %p62, %p63
      %p66 = scmp.ne.s32.totalorder %s51, %s65
      %p67 = scmp.eq.s32.totalorder %s20, 0
      %p68 = por %p66, %p67
      %s70 = sadd.s32 %s69, 1
      %p73 = scmp.eq.s32.totalorder %s14, 3
      %p74 = scmp.ne.s32.totalorder %s69, %s71
      %p75 = scmp.eq.s32.totalorder %s14, 0
      %p76 = por %p74, %p75
      %p77 = scmp.ne.s32.totalorder %s69, %s71
      %p78 = scmp.eq.s32.totalorder %s19, 3
      %p79 = por %p77, %p78
      %p80 = scmp.ne.s32.totalorder %s71, %s72
      %p81 = scmp.eq.s32.totalorder %s19, 0
      %p82 = por %p80, %p81
      %p83 = scmp.ne.s32.totalorder %s71, %s72
      %p84 = scmp.eq.s32.totalorder %s20, 3
      %p85 = por %p83, %p84
      %p87 = scmp.ne.s32.totalorder %s72, %s86
      %p88 = scmp.eq.s32.totalorder %s20, 0
      %p89 = por %p87, %p88
      %s91 = sadd.s32 %s90, 1
      %p94 = scmp.eq.s32.totalorder %s14, 3
      %p95 = scmp.ne.s32.totalorder %s90, %s92
      %p96 = scmp.eq.s32.totalorder %s14, 0
      %p97 = por %p95, %p96
      %p98 = scmp.ne.s32.totalorder %s90, %s92
      %p99 = scmp.eq.s32.totalorder %s19, 3
      %p100 = por %p98, %p99
      %p101 = scmp.ne.s32.totalorder %s92, %s93
      %p102 = scmp.eq.s32.totalorder %s19, 0
      %p103 = por %p101, %p102
      %p104 = scmp.ne.s32.totalorder %s92, %s93
      %p105 = scmp.eq.s32.totalorder %s20, 3
      %p106 = por %p104, %p105
      %p108 = scmp.ne.s32.totalorder %s93, %s107
      %p109 = scmp.eq.s32.totalorder %s20, 0
      %p110 = por %p108, %p109
      %s112 = sadd.s32 %s111, 1
      %p115 = scmp.eq.s32.totalorder %s14, 3
      %p116 = scmp.ne.s32.totalorder %s111, %s113
      %p117 = scmp.eq.s32.totalorder %s14, 0
      %p118 = por %p116, %p117
      %p119 = scmp.ne.s32.totalorder %s111, %s113
      %p120 = scmp.eq.s32.totalorder %s19, 3
      %p121 = por %p119, %p120
      %p122 = scmp.ne.s32.totalorder %s113, %s114
      %p123 = scmp.eq.s32.totalorder %s19, 0
      %p124 = por %p122, %p123
      %p125 = scmp.ne.s32.totalorder %s113, %s114
      %p126 = scmp.eq.s32.totalorder %s20, 3
      %p127 = por %p125, %p126
      %p129 = scmp.ne.s32.totalorder %s114, %s128
      %p130 = scmp.eq.s32.totalorder %s20, 0
      %p131 = por %p129, %p130
      %s133 = sadd.s32 %s132, 1
      %p136 = scmp.eq.s32.totalorder %s14, 3
      %p137 = scmp.ne.s32.totalorder %s132, %s134
      %p138 = scmp.eq.s32.totalorder %s14, 0
      %p139 = por %p137, %p138
      %p140 = scmp.ne.s32.totalorder %s132, %s134
      %p141 = scmp.eq.s32.totalorder %s19, 3
      %p142 = por %p140, %p141
      %p143 = scmp.ne.s32.totalorder %s134, %s135
      %p144 = scmp.eq.s32.totalorder %s19, 0
      %p145 = por %p143, %p144
      %p146 = scmp.ne.s32.totalorder %s134, %s135
      %p147 = scmp.eq.s32.totalorder %s20, 3
      %p148 = por %p146, %p147
      %p150 = scmp.ne.s32.totalorder %s135, %s149
      %p151 = scmp.eq.s32.totalorder %s20, 0
      %p152 = por %p150, %p151
      %s154 = sadd.s32 %s153, 1
      %p157 = scmp.eq.s32.totalorder %s14, 3
      %p158 = scmp.ne.s32.totalorder %s153, %s155
      %p159 = scmp.eq.s32.totalorder %s14, 0
      %p160 = por %p158, %p159
      %p161 = scmp.ne.s32.totalorder %s153, %s155
      %p162 = scmp.eq.s32.totalorder %s19, 3
      %p163 = por %p161, %p162
      %p164 = scmp.ne.s32.totalorder %s155, %s156
      %p165 = scmp.eq.s32.totalorder %s19, 0
      %p166 = por %p164, %p165
      %p167 = scmp.ne.s32.totalorder %s155, %s156
      %p168 = scmp.eq.s32.totalorder %s20, 3
      %p169 = por %p167, %p168
      %p171 = scmp.ne.s32.totalorder %s156, %s170
      %p172 = scmp.eq.s32.totalorder %s20, 0
      %p173 = por %p171, %p172
      %s174 = ssub.s32 %s14, %s21
      %p175 = scmp.eq.s32.totalorder %s174, 0
      %s177 = sadd.s32 %s176, 1
      %s178 = scalar_select %p175, %s176, %s177
      %p181 = pneg %p175
      %p182 = scmp.eq.s32.totalorder %s14, 3
      %p183 = por %p181, %p182
      %p184 = scmp.ne.s32.totalorder %s176, %s179
      %p185 = scmp.eq.s32.totalorder %s14, 0
      %p186 = por %p184, %p185
      %p187 = scmp.ne.s32.totalorder %s176, %s179
      %p188 = scmp.eq.s32.totalorder %s19, 3
      %p189 = por %p187, %p188
      %p190 = scmp.ne.s32.totalorder %s179, %s180
      %p191 = scmp.eq.s32.totalorder %s19, 0
      %p192 = por %p190, %p191
      %p193 = scmp.ne.s32.totalorder %s179, %s180
      %p194 = scmp.eq.s32.totalorder %s20, 3
      %p195 = por %p193, %p194
      %p197 = scmp.ne.s32.totalorder %s180, %s196
      %p198 = scmp.eq.s32.totalorder %s20, 0
      %p199 = por %p197, %p198
      %p200 = scmp.le.s32.totalorder 1, %s14
      %p201 = scmp.lt.s32.totalorder %s14, 5
      %p202 = pnand %p200, %p201
      %p203 = pneg %p202
      // Predicated region
      $region9: #{pointnet_cls_forward.3} parent=5 // pred_check
        _
      $region10: #{pointnet_cls_forward.3} parent=5 // pred_check_branch
        %205 = sbr.rel (%p202) target = $region12
      $region11: #{pointnet_cls_forward.3} parent=5 // pred_region
        %s206 = ssub.s32 %s14, 1
        // Predicated region
        $region13: #{pointnet_cls_forward.3} parent=11 // pred_check
          %p207 = pneg %p61
        $region14: #{pointnet_cls_forward.3} parent=11 // pred_check_branch
          %209 = sbr.rel (%p207) target = $region16
        $region15: #{pointnet_cls_forward.3} parent=11 // pred_region
          _
        $region16: #{pointnet_cls_forward.3} parent=11 // pred_fallthru
          _
        // Predicated region
        $region17: #{pointnet_cls_forward.3} parent=11 // pred_check
          %p210 = pneg %p82
        $region18: #{pointnet_cls_forward.3} parent=11 // pred_check_branch
          %212 = sbr.rel (%p210) target = $region20
        $region19: #{pointnet_cls_forward.3} parent=11 // pred_region
          _
        $region20: #{pointnet_cls_forward.3} parent=11 // pred_fallthru
          _
        // Predicated region
        $region21: #{pointnet_cls_forward.3} parent=11 // pred_check
          %p213 = pneg %p103
        $region22: #{pointnet_cls_forward.3} parent=11 // pred_check_branch
          %215 = sbr.rel (%p213) target = $region24
        $region23: #{pointnet_cls_forward.3} parent=11 // pred_region
          %s217 = ssub.s32 8192, 8192
          %218 = vsyncadd [#allocation3], %s217
          %s219 = sshll.u32 [#allocation2], 4
          %s220 = int_to_ptr.vmem [resolvable:$true] %s219
          %225 = dma.hbm_to_vmem [thread:$0]  %s3, 8192, %s220, [#allocation3], 128, 128, 8
        $region24: #{pointnet_cls_forward.3} parent=11 // pred_fallthru
          _
        // Predicated region
        $region25: #{pointnet_cls_forward.3} parent=11 // pred_check
          %p226 = pneg %p124
        $region26: #{pointnet_cls_forward.3} parent=11 // pred_check_branch
          %228 = sbr.rel (%p226) target = $region28
        $region27: #{pointnet_cls_forward.3} parent=11 // pred_region
          _
        $region28: #{pointnet_cls_forward.3} parent=11 // pred_fallthru
          _
        // Predicated region
        $region29: #{pointnet_cls_forward.3} parent=11 // pred_check
          %p229 = pneg %p145
        $region30: #{pointnet_cls_forward.3} parent=11 // pred_check_branch
          %231 = sbr.rel (%p229) target = $region32
        $region31: #{pointnet_cls_forward.3} parent=11 // pred_region
          _
        $region32: #{pointnet_cls_forward.3} parent=11 // pred_fallthru
          _
        // Predicated region
        $region33: #{pointnet_cls_forward.3} parent=11 // pred_check
          %p232 = pneg %p166
        $region34: #{pointnet_cls_forward.3} parent=11 // pred_check_branch
          %234 = sbr.rel (%p232) target = $region36
        $region35: #{pointnet_cls_forward.3} parent=11 // pred_region
          _
        $region36: #{pointnet_cls_forward.3} parent=11 // pred_fallthru
          _
      $region12: #{pointnet_cls_forward.3} parent=5 // pred_fallthru
        _
      %p235 = scmp.lt.s32.totalorder %s14, 4
      // Predicated region
      $region37: #{pointnet_cls_forward.3} parent=5 // pred_check
        %p236 = pneg %p235
      $region38: #{pointnet_cls_forward.3} parent=5 // pred_check_branch
        %238 = sbr.rel (%p236) target = $region40
      $region39: #{pointnet_cls_forward.3} parent=5 // pred_region
        // Predicated region
        $region41: #{pointnet_cls_forward.3} parent=39 // pred_check
          %p239 = pneg %p34
        $region42: #{pointnet_cls_forward.3} parent=39 // pred_check_branch
          %241 = sbr.rel (%p239) target = $region44
        $region43: #{pointnet_cls_forward.3} parent=39 // pred_region
          %s242 = smul.u32 2, %s14
          %p243 = scmp.lt.s32.totalorder %s242, 7
          %s244 = scalar_select %p243, %s242, 7
          %s245 = smul.addr %s244, 16
          %s246 = smul.addr %s245, 4
          %s247 = scalar_lea.vmem %s0, %s246
          %s248 = smul.u32 2, %s14
        $region44: #{pointnet_cls_forward.3} parent=39 // pred_fallthru
          _
      $region40: #{pointnet_cls_forward.3} parent=5 // pred_fallthru
        _
      %p249 = scmp.le.s32.totalorder 1, %s14
      %p250 = scmp.lt.s32.totalorder %s14, 5
      %p251 = pnand %p249, %p250
      %p252 = pneg %p251
      // Predicated region
      $region45: #{pointnet_cls_forward.3} parent=5 // pred_check
        _
      $region46: #{pointnet_cls_forward.3} parent=5 // pred_check_branch
        %254 = sbr.rel (%p251) target = $region48
      $region47: #{pointnet_cls_forward.3} parent=5 // pred_region
        %s255 = ssub.s32 %s14, 1
        // Predicated region
        $region49: #{pointnet_cls_forward.3} parent=47 // pred_check
          %p256 = pneg %p103
        $region50: #{pointnet_cls_forward.3} parent=47 // pred_check_branch
          %258 = sbr.rel (%p256) target = $region52
        $region51: #{pointnet_cls_forward.3} parent=47 // pred_region
          %259 = dma.done [#allocation3], 8192
        $region52: #{pointnet_cls_forward.3} parent=47 // pred_fallthru
          _
        %s260 = smul.u32 2, %s19
        %p261 = scmp.lt.s32.totalorder %s260, 7
        %s262 = scalar_select %p261, %s260, 7
        %s263 = smul.addr %s262, 16
        %s264 = smul.addr %s263, 4
        %s265 = scalar_lea.vmem %s0, %s264
        %p266 = pneg %p40
        %p267 = pneg %p37
        %p268 = pneg %p61
        %p269 = pneg %p58
        %p270 = pneg %p82
        %p271 = pneg %p79
        %p272 = pneg %p103
        %p273 = pneg %p100
        %p274 = pneg %p124
        %p275 = pneg %p121
        %p276 = pneg %p145
        %p277 = pneg %p142
        %p278 = pneg %p166
        %p279 = pneg %p163
        %p280 = pneg %p192
        %p281 = pneg %p189
        %s282 = smul.u32 2, %s19
        %p283 = scmp.lt.s32.totalorder %s282, 7
        %s284 = scalar_select %p283, %s282, 7
        %s285 = smul.addr %s284, 8
        %s286 = scalar_lea.vmem %s7, %s285
        %s287 = smul.u32 2, %s19
        %p288 = scmp.lt.s32.totalorder %s287, 7
        %s289 = scalar_select %p288, %s287, 7
        %s290 = smul.addr %s289, 16
        %s291 = smul.addr %s290, 4
        %s292 = scalar_lea.vmem %s0, %s291
        %s293 = smul.u32 2, %s19
        %s294 = smul.u32 2, %s19
        %p295 = scmp.lt.s32.totalorder %s294, 7
        %s296 = scalar_select %p295, %s294, 7
        %s297 = smul.addr %s296, 8
        %s298 = scalar_lea.vmem %s7, %s297
        %s299 = smul.u32 2, %s19
        %v301 = vld [vmem:[%s292] sm:$0xff]
        %v302 = vld [vmem:[%s292 + $0x8] sm:$0xff]
        %v303 = vld [vmem:[%s292 + $0x10] sm:$0xff]
        %v304 = vld [vmem:[%s292 + $0x18] sm:$0xff]
        %v305 = vld [vmem:[%s292 + $0x40] sm:$0xff]
        %v306 = vld [vmem:[%s292 + $0x48] sm:$0xff]
        %v307 = vld [vmem:[%s292 + $0x50] sm:$0xff]
        %v308 = vld [vmem:[%s292 + $0x58] sm:$0xff]
        %v309 = vld [vmem:[%s1] sm:$0xff]
        %v310 = vld [vmem:[%s1 + $0x8] sm:$0xff]
        %v311 = vld [vmem:[%s1 + $0x10] sm:$0xff]
        %v312 = vld [vmem:[%s1 + $0x18] sm:$0xff]
        %v313 = vld [vmem:[%s1 + $0x20] sm:$0xff]
        %v314 = vld [vmem:[%s1 + $0x28] sm:$0xff]
        %v315 = vld [vmem:[%s1 + $0x30] sm:$0xff]
        %v316 = vld [vmem:[%s1 + $0x38] sm:$0xff]
        %v317 = vld [vmem:[%s1 + $0x40] sm:$0xff]
        %v318 = vld [vmem:[%s1 + $0x48] sm:$0xff]
        %v319 = vld [vmem:[%s1 + $0x50] sm:$0xff]
        %v320 = vld [vmem:[%s1 + $0x58] sm:$0xff]
        %v321 = vld [vmem:[%s1 + $0x60] sm:$0xff]
        %v322 = vld [vmem:[%s1 + $0x68] sm:$0xff]
        %v323 = vld [vmem:[%s1 + $0x70] sm:$0xff]
        %v324 = vld [vmem:[%s1 + $0x78] sm:$0xff]
        %v325 = vld [vmem:[%s1 + $0x80] sm:$0xff]
        %v326 = vld [vmem:[%s1 + $0x88] sm:$0xff]
        %v327 = vld [vmem:[%s1 + $0x90] sm:$0xff]
        %v328 = vld [vmem:[%s1 + $0x98] sm:$0xff]
        %v329 = vld [vmem:[%s1 + $0xa0] sm:$0xff]
        %v330 = vld [vmem:[%s1 + $0xa8] sm:$0xff]
        %v331 = vld [vmem:[%s1 + $0xb0] sm:$0xff]
        %v332 = vld [vmem:[%s1 + $0xb8] sm:$0xff]
        %v333 = vld [vmem:[%s1 + $0xc0] sm:$0xff]
        %v334 = vld [vmem:[%s1 + $0xc8] sm:$0xff]
        %v335 = vld [vmem:[%s1 + $0xd0] sm:$0xff]
        %v336 = vld [vmem:[%s1 + $0xd8] sm:$0xff]
        %v337 = vld [vmem:[%s1 + $0xe0] sm:$0xff]
        %v338 = vld [vmem:[%s1 + $0xe8] sm:$0xff]
        %v339 = vld [vmem:[%s1 + $0xf0] sm:$0xff]
        %v340 = vld [vmem:[%s1 + $0xf8] sm:$0xff]
        %v341 = vld [vmem:[%s1 + $0x100] sm:$0xff]
        %v342 = vld [vmem:[%s1 + $0x108] sm:$0xff]
        %v343 = vld [vmem:[%s1 + $0x110] sm:$0xff]
        %v344 = vld [vmem:[%s1 + $0x118] sm:$0xff]
        %v345 = vld [vmem:[%s1 + $0x120] sm:$0xff]
        %v346 = vld [vmem:[%s1 + $0x128] sm:$0xff]
        %v347 = vld [vmem:[%s1 + $0x130] sm:$0xff]
        %v348 = vld [vmem:[%s1 + $0x138] sm:$0xff]
        %v349 = vld [vmem:[%s1 + $0x140] sm:$0xff]
        %v350 = vld [vmem:[%s1 + $0x148] sm:$0xff]
        %v351 = vld [vmem:[%s1 + $0x150] sm:$0xff]
        %v352 = vld [vmem:[%s1 + $0x158] sm:$0xff]
        %v353 = vld [vmem:[%s1 + $0x160] sm:$0xff]
        %v354 = vld [vmem:[%s1 + $0x168] sm:$0xff]
        %v355 = vld [vmem:[%s1 + $0x170] sm:$0xff]
        %v356 = vld [vmem:[%s1 + $0x178] sm:$0xff]
        %v357 = vld [vmem:[%s1 + $0x180] sm:$0xff]
        %v358 = vld [vmem:[%s1 + $0x188] sm:$0xff]
        %v359 = vld [vmem:[%s1 + $0x190] sm:$0xff]
        %v360 = vld [vmem:[%s1 + $0x198] sm:$0xff]
        %v361 = vld [vmem:[%s1 + $0x1a0] sm:$0xff]
        %v362 = vld [vmem:[%s1 + $0x1a8] sm:$0xff]
        %v363 = vld [vmem:[%s1 + $0x1b0] sm:$0xff]
        %v364 = vld [vmem:[%s1 + $0x1b8] sm:$0xff]
        %v365 = vld [vmem:[%s1 + $0x1c0] sm:$0xff]
        %v366 = vld [vmem:[%s1 + $0x1c8] sm:$0xff]
        %v367 = vld [vmem:[%s1 + $0x1d0] sm:$0xff]
        %v368 = vld [vmem:[%s1 + $0x1d8] sm:$0xff]
        %v369 = vld [vmem:[%s1 + $0x1e0] sm:$0xff]
        %v370 = vld [vmem:[%s1 + $0x1e8] sm:$0xff]
        %v371 = vld [vmem:[%s1 + $0x1f0] sm:$0xff]
        %v372 = vld [vmem:[%s1 + $0x1f8] sm:$0xff]
        %v373 = vld [vmem:[%s1 + $0x200] sm:$0xff]
        %v374 = vld [vmem:[%s1 + $0x208] sm:$0xff]
        %v375 = vld [vmem:[%s1 + $0x210] sm:$0xff]
        %v376 = vld [vmem:[%s1 + $0x218] sm:$0xff]
        %v377 = vld [vmem:[%s1 + $0x220] sm:$0xff]
        %v378 = vld [vmem:[%s1 + $0x228] sm:$0xff]
        %v379 = vld [vmem:[%s1 + $0x230] sm:$0xff]
        %v380 = vld [vmem:[%s1 + $0x238] sm:$0xff]
        %v381 = vld [vmem:[%s1 + $0x240] sm:$0xff]
        %v382 = vld [vmem:[%s1 + $0x248] sm:$0xff]
        %v383 = vld [vmem:[%s1 + $0x250] sm:$0xff]
        %v384 = vld [vmem:[%s1 + $0x258] sm:$0xff]
        %v385 = vld [vmem:[%s1 + $0x260] sm:$0xff]
        %v386 = vld [vmem:[%s1 + $0x268] sm:$0xff]
        %v387 = vld [vmem:[%s1 + $0x270] sm:$0xff]
        %v388 = vld [vmem:[%s1 + $0x278] sm:$0xff]
        %v389 = vld [vmem:[%s1 + $0x280] sm:$0xff]
        %v390 = vld [vmem:[%s1 + $0x288] sm:$0xff]
        %v391 = vld [vmem:[%s1 + $0x290] sm:$0xff]
        %v392 = vld [vmem:[%s1 + $0x298] sm:$0xff]
        %v393 = vld [vmem:[%s1 + $0x2a0] sm:$0xff]
        %v394 = vld [vmem:[%s1 + $0x2a8] sm:$0xff]
        %v395 = vld [vmem:[%s1 + $0x2b0] sm:$0xff]
        %v396 = vld [vmem:[%s1 + $0x2b8] sm:$0xff]
        %v397 = vld [vmem:[%s1 + $0x2c0] sm:$0xff]
        %v398 = vld [vmem:[%s1 + $0x2c8] sm:$0xff]
        %v399 = vld [vmem:[%s1 + $0x2d0] sm:$0xff]
        %v400 = vld [vmem:[%s1 + $0x2d8] sm:$0xff]
        %v401 = vld [vmem:[%s1 + $0x2e0] sm:$0xff]
        %v402 = vld [vmem:[%s1 + $0x2e8] sm:$0xff]
        %v403 = vld [vmem:[%s1 + $0x2f0] sm:$0xff]
        %v404 = vld [vmem:[%s1 + $0x2f8] sm:$0xff]
        %v405 = vld [vmem:[%s1 + $0x300] sm:$0xff]
        %v406 = vld [vmem:[%s1 + $0x308] sm:$0xff]
        %v407 = vld [vmem:[%s1 + $0x310] sm:$0xff]
        %v408 = vld [vmem:[%s1 + $0x318] sm:$0xff]
        %v409 = vld [vmem:[%s1 + $0x320] sm:$0xff]
        %v410 = vld [vmem:[%s1 + $0x328] sm:$0xff]
        %v411 = vld [vmem:[%s1 + $0x330] sm:$0xff]
        %v412 = vld [vmem:[%s1 + $0x338] sm:$0xff]
        %v413 = vld [vmem:[%s1 + $0x340] sm:$0xff]
        %v414 = vld [vmem:[%s1 + $0x348] sm:$0xff]
        %v415 = vld [vmem:[%s1 + $0x350] sm:$0xff]
        %v416 = vld [vmem:[%s1 + $0x358] sm:$0xff]
        %v417 = vld [vmem:[%s1 + $0x360] sm:$0xff]
        %v418 = vld [vmem:[%s1 + $0x368] sm:$0xff]
        %v419 = vld [vmem:[%s1 + $0x370] sm:$0xff]
        %v420 = vld [vmem:[%s1 + $0x378] sm:$0xff]
        %v421 = vld [vmem:[%s1 + $0x380] sm:$0xff]
        %v422 = vld [vmem:[%s1 + $0x388] sm:$0xff]
        %v423 = vld [vmem:[%s1 + $0x390] sm:$0xff]
        %v424 = vld [vmem:[%s1 + $0x398] sm:$0xff]
        %v425 = vld [vmem:[%s1 + $0x3a0] sm:$0xff]
        %v426 = vld [vmem:[%s1 + $0x3a8] sm:$0xff]
        %v427 = vld [vmem:[%s1 + $0x3b0] sm:$0xff]
        %v428 = vld [vmem:[%s1 + $0x3b8] sm:$0xff]
        %v429 = vld [vmem:[%s1 + $0x3c0] sm:$0xff]
        %v430 = vld [vmem:[%s1 + $0x3c8] sm:$0xff]
        %v431 = vld [vmem:[%s1 + $0x3d0] sm:$0xff]
        %v432 = vld [vmem:[%s1 + $0x3d8] sm:$0xff]
        %v433 = vld [vmem:[%s1 + $0x3e0] sm:$0xff]
        %v434 = vld [vmem:[%s1 + $0x3e8] sm:$0xff]
        %v435 = vld [vmem:[%s1 + $0x3f0] sm:$0xff]
        %v436 = vld [vmem:[%s1 + $0x3f8] sm:$0xff]
        %v437 = vld [vmem:[%s1 + $0x400] sm:$0xff]
        %v438 = vld [vmem:[%s1 + $0x408] sm:$0xff]
        %v439 = vld [vmem:[%s1 + $0x410] sm:$0xff]
        %v440 = vld [vmem:[%s1 + $0x418] sm:$0xff]
        %v441 = vld [vmem:[%s1 + $0x420] sm:$0xff]
        %v442 = vld [vmem:[%s1 + $0x428] sm:$0xff]
        %v443 = vld [vmem:[%s1 + $0x430] sm:$0xff]
        %v444 = vld [vmem:[%s1 + $0x438] sm:$0xff]
        %v445 = vld [vmem:[%s1 + $0x440] sm:$0xff]
        %v446 = vld [vmem:[%s1 + $0x448] sm:$0xff]
        %v447 = vld [vmem:[%s1 + $0x450] sm:$0xff]
        %v448 = vld [vmem:[%s1 + $0x458] sm:$0xff]
        %v449 = vld [vmem:[%s1 + $0x460] sm:$0xff]
        %v450 = vld [vmem:[%s1 + $0x468] sm:$0xff]
        %v451 = vld [vmem:[%s1 + $0x470] sm:$0xff]
        %v452 = vld [vmem:[%s1 + $0x478] sm:$0xff]
        %v453 = vld [vmem:[%s1 + $0x480] sm:$0xff]
        %v454 = vld [vmem:[%s1 + $0x488] sm:$0xff]
        %v455 = vld [vmem:[%s1 + $0x490] sm:$0xff]
        %v456 = vld [vmem:[%s1 + $0x498] sm:$0xff]
        %v457 = vld [vmem:[%s1 + $0x4a0] sm:$0xff]
        %v458 = vld [vmem:[%s1 + $0x4a8] sm:$0xff]
        %v459 = vld [vmem:[%s1 + $0x4b0] sm:$0xff]
        %v460 = vld [vmem:[%s1 + $0x4b8] sm:$0xff]
        %v461 = vld [vmem:[%s1 + $0x4c0] sm:$0xff]
        %v462 = vld [vmem:[%s1 + $0x4c8] sm:$0xff]
        %v463 = vld [vmem:[%s1 + $0x4d0] sm:$0xff]
        %v464 = vld [vmem:[%s1 + $0x4d8] sm:$0xff]
        %v465 = vld [vmem:[%s1 + $0x4e0] sm:$0xff]
        %v466 = vld [vmem:[%s1 + $0x4e8] sm:$0xff]
        %v467 = vld [vmem:[%s1 + $0x4f0] sm:$0xff]
        %v468 = vld [vmem:[%s1 + $0x4f8] sm:$0xff]
        %v469 = vld [vmem:[%s1 + $0x500] sm:$0xff]
        %v470 = vld [vmem:[%s1 + $0x508] sm:$0xff]
        %v471 = vld [vmem:[%s1 + $0x510] sm:$0xff]
        %v472 = vld [vmem:[%s1 + $0x518] sm:$0xff]
        %v473 = vld [vmem:[%s1 + $0x520] sm:$0xff]
        %v474 = vld [vmem:[%s1 + $0x528] sm:$0xff]
        %v475 = vld [vmem:[%s1 + $0x530] sm:$0xff]
        %v476 = vld [vmem:[%s1 + $0x538] sm:$0xff]
        %v477 = vld [vmem:[%s1 + $0x540] sm:$0xff]
        %v478 = vld [vmem:[%s1 + $0x548] sm:$0xff]
        %v479 = vld [vmem:[%s1 + $0x550] sm:$0xff]
        %v480 = vld [vmem:[%s1 + $0x558] sm:$0xff]
        %v481 = vld [vmem:[%s1 + $0x560] sm:$0xff]
        %v482 = vld [vmem:[%s1 + $0x568] sm:$0xff]
        %v483 = vld [vmem:[%s1 + $0x570] sm:$0xff]
        %v484 = vld [vmem:[%s1 + $0x578] sm:$0xff]
        %v485 = vld [vmem:[%s1 + $0x580] sm:$0xff]
        %v486 = vld [vmem:[%s1 + $0x588] sm:$0xff]
        %v487 = vld [vmem:[%s1 + $0x590] sm:$0xff]
        %v488 = vld [vmem:[%s1 + $0x598] sm:$0xff]
        %v489 = vld [vmem:[%s1 + $0x5a0] sm:$0xff]
        %v490 = vld [vmem:[%s1 + $0x5a8] sm:$0xff]
        %v491 = vld [vmem:[%s1 + $0x5b0] sm:$0xff]
        %v492 = vld [vmem:[%s1 + $0x5b8] sm:$0xff]
        %v493 = vld [vmem:[%s1 + $0x5c0] sm:$0xff]
        %v494 = vld [vmem:[%s1 + $0x5c8] sm:$0xff]
        %v495 = vld [vmem:[%s1 + $0x5d0] sm:$0xff]
        %v496 = vld [vmem:[%s1 + $0x5d8] sm:$0xff]
        %v497 = vld [vmem:[%s1 + $0x5e0] sm:$0xff]
        %v498 = vld [vmem:[%s1 + $0x5e8] sm:$0xff]
        %v499 = vld [vmem:[%s1 + $0x5f0] sm:$0xff]
        %v500 = vld [vmem:[%s1 + $0x5f8] sm:$0xff]
        %v501 = vld [vmem:[%s1 + $0x600] sm:$0xff]
        %v502 = vld [vmem:[%s1 + $0x608] sm:$0xff]
        %v503 = vld [vmem:[%s1 + $0x610] sm:$0xff]
        %v504 = vld [vmem:[%s1 + $0x618] sm:$0xff]
        %v505 = vld [vmem:[%s1 + $0x620] sm:$0xff]
        %v506 = vld [vmem:[%s1 + $0x628] sm:$0xff]
        %v507 = vld [vmem:[%s1 + $0x630] sm:$0xff]
        %v508 = vld [vmem:[%s1 + $0x638] sm:$0xff]
        %v509 = vld [vmem:[%s1 + $0x640] sm:$0xff]
        %v510 = vld [vmem:[%s1 + $0x648] sm:$0xff]
        %v511 = vld [vmem:[%s1 + $0x650] sm:$0xff]
        %v512 = vld [vmem:[%s1 + $0x658] sm:$0xff]
        %v513 = vld [vmem:[%s1 + $0x660] sm:$0xff]
        %v514 = vld [vmem:[%s1 + $0x668] sm:$0xff]
        %v515 = vld [vmem:[%s1 + $0x670] sm:$0xff]
        %v516 = vld [vmem:[%s1 + $0x678] sm:$0xff]
        %v517 = vld [vmem:[%s1 + $0x680] sm:$0xff]
        %v518 = vld [vmem:[%s1 + $0x688] sm:$0xff]
        %v519 = vld [vmem:[%s1 + $0x690] sm:$0xff]
        %v520 = vld [vmem:[%s1 + $0x698] sm:$0xff]
        %v521 = vld [vmem:[%s1 + $0x6a0] sm:$0xff]
        %v522 = vld [vmem:[%s1 + $0x6a8] sm:$0xff]
        %v523 = vld [vmem:[%s1 + $0x6b0] sm:$0xff]
        %v524 = vld [vmem:[%s1 + $0x6b8] sm:$0xff]
        %v525 = vld [vmem:[%s1 + $0x6c0] sm:$0xff]
        %v526 = vld [vmem:[%s1 + $0x6c8] sm:$0xff]
        %v527 = vld [vmem:[%s1 + $0x6d0] sm:$0xff]
        %v528 = vld [vmem:[%s1 + $0x6d8] sm:$0xff]
        %v529 = vld [vmem:[%s1 + $0x6e0] sm:$0xff]
        %v530 = vld [vmem:[%s1 + $0x6e8] sm:$0xff]
        %v531 = vld [vmem:[%s1 + $0x6f0] sm:$0xff]
        %v532 = vld [vmem:[%s1 + $0x6f8] sm:$0xff]
        %v533 = vld [vmem:[%s1 + $0x700] sm:$0xff]
        %v534 = vld [vmem:[%s1 + $0x708] sm:$0xff]
        %v535 = vld [vmem:[%s1 + $0x710] sm:$0xff]
        %v536 = vld [vmem:[%s1 + $0x718] sm:$0xff]
        %v537 = vld [vmem:[%s1 + $0x720] sm:$0xff]
        %v538 = vld [vmem:[%s1 + $0x728] sm:$0xff]
        %v539 = vld [vmem:[%s1 + $0x730] sm:$0xff]
        %v540 = vld [vmem:[%s1 + $0x738] sm:$0xff]
        %v541 = vld [vmem:[%s1 + $0x740] sm:$0xff]
        %v542 = vld [vmem:[%s1 + $0x748] sm:$0xff]
        %v543 = vld [vmem:[%s1 + $0x750] sm:$0xff]
        %v544 = vld [vmem:[%s1 + $0x758] sm:$0xff]
        %v545 = vld [vmem:[%s1 + $0x760] sm:$0xff]
        %v546 = vld [vmem:[%s1 + $0x768] sm:$0xff]
        %v547 = vld [vmem:[%s1 + $0x770] sm:$0xff]
        %v548 = vld [vmem:[%s1 + $0x778] sm:$0xff]
        %v549 = vld [vmem:[%s1 + $0x780] sm:$0xff]
        %v550 = vld [vmem:[%s1 + $0x788] sm:$0xff]
        %v551 = vld [vmem:[%s1 + $0x790] sm:$0xff]
        %v552 = vld [vmem:[%s1 + $0x798] sm:$0xff]
        %v553 = vld [vmem:[%s1 + $0x7a0] sm:$0xff]
        %v554 = vld [vmem:[%s1 + $0x7a8] sm:$0xff]
        %v555 = vld [vmem:[%s1 + $0x7b0] sm:$0xff]
        %v556 = vld [vmem:[%s1 + $0x7b8] sm:$0xff]
        %v557 = vld [vmem:[%s1 + $0x7c0] sm:$0xff]
        %v558 = vld [vmem:[%s1 + $0x7c8] sm:$0xff]
        %v559 = vld [vmem:[%s1 + $0x7d0] sm:$0xff]
        %v560 = vld [vmem:[%s1 + $0x7d8] sm:$0xff]
        %v561 = vld [vmem:[%s1 + $0x7e0] sm:$0xff]
        %v562 = vld [vmem:[%s1 + $0x7e8] sm:$0xff]
        %v563 = vld [vmem:[%s1 + $0x7f0] sm:$0xff]
        %v564 = vld [vmem:[%s1 + $0x7f8] sm:$0xff]
        %v565 = vld [vmem:[%s2] sm:$0xf]
        %v567 = vlaneseq
        %v568 = vshrl.u32 %v567, 7
        %v569 = vsub.s32 0, %v568
        %v570 = vrot.slane %v565, %v569
        %v571 = vlaneseq
        %v572 = vshrl.u32 %v571, 7
        %v573 = vsub.s32 1, %v572
        %v574 = vrot.slane %v565, %v573
        %v575 = vlaneseq
        %v576 = vshrl.u32 %v575, 7
        %v577 = vsub.s32 2, %v576
        %v578 = vrot.slane %v565, %v577
        %v579 = vlaneseq
        %v580 = vshrl.u32 %v579, 7
        %v581 = vsub.s32 3, %v580
        %v582 = vrot.slane %v565, %v581
        %v595 = vunpack.c.l.b16 %v301
        %v596 = vunpack.c.h.b16 %v301
        %v597 = vunpack.c.l.b16 %v302
        %v598 = vunpack.c.h.b16 %v302
        %v599 = vunpack.c.l.b16 %v303
        %v600 = vunpack.c.h.b16 %v303
        %v601 = vunpack.c.l.b16 %v304
        %v602 = vunpack.c.h.b16 %v304
        %v603 = vunpack.c.l.b16 %v305
        %v604 = vunpack.c.h.b16 %v305
        %v605 = vunpack.c.l.b16 %v306
        %v606 = vunpack.c.h.b16 %v306
        %v607 = vunpack.c.l.b16 %v307
        %v608 = vunpack.c.h.b16 %v307
        %v609 = vunpack.c.l.b16 %v308
        %v610 = vunpack.c.h.b16 %v308
        %v611 = vpack.c.b16 %v603, %v595
        %v612 = vpack.c.b16 %v604, %v596
        %v613 = vpack.c.b16 %v605, %v597
        %v614 = vpack.c.b16 %v606, %v598
        %v615 = vpack.c.b16 %v607, %v599
        %v616 = vpack.c.b16 %v608, %v600
        %v617 = vpack.c.b16 %v609, %v601
        %v618 = vpack.c.b16 %v610, %v602
        %v883 = vunpack.c.l.b16 %v309
        %v884 = vunpack.c.h.b16 %v309
        %v885 = vunpack.c.l.b16 %v310
        %v886 = vunpack.c.h.b16 %v310
        %v887 = vunpack.c.l.b16 %v311
        %v888 = vunpack.c.h.b16 %v311
        %v889 = vunpack.c.l.b16 %v312
        %v890 = vunpack.c.h.b16 %v312
        %v891 = vunpack.c.l.b16 %v313
        %v892 = vunpack.c.h.b16 %v313
        %v893 = vunpack.c.l.b16 %v314
        %v894 = vunpack.c.h.b16 %v314
        %v895 = vunpack.c.l.b16 %v315
        %v896 = vunpack.c.h.b16 %v315
        %v897 = vunpack.c.l.b16 %v316
        %v898 = vunpack.c.h.b16 %v316
        %v899 = vunpack.c.l.b16 %v317
        %v900 = vunpack.c.h.b16 %v317
        %v901 = vunpack.c.l.b16 %v318
        %v902 = vunpack.c.h.b16 %v318
        %v903 = vunpack.c.l.b16 %v319
        %v904 = vunpack.c.h.b16 %v319
        %v905 = vunpack.c.l.b16 %v320
        %v906 = vunpack.c.h.b16 %v320
        %v907 = vunpack.c.l.b16 %v321
        %v908 = vunpack.c.h.b16 %v321
        %v909 = vunpack.c.l.b16 %v322
        %v910 = vunpack.c.h.b16 %v322
        %v911 = vunpack.c.l.b16 %v323
        %v912 = vunpack.c.h.b16 %v323
        %v913 = vunpack.c.l.b16 %v324
        %v914 = vunpack.c.h.b16 %v324
        %v915 = vunpack.c.l.b16 %v325
        %v916 = vunpack.c.h.b16 %v325
        %v917 = vunpack.c.l.b16 %v326
        %v918 = vunpack.c.h.b16 %v326
        %v919 = vunpack.c.l.b16 %v327
        %v920 = vunpack.c.h.b16 %v327
        %v921 = vunpack.c.l.b16 %v328
        %v922 = vunpack.c.h.b16 %v328
        %v923 = vunpack.c.l.b16 %v329
        %v924 = vunpack.c.h.b16 %v329
        %v925 = vunpack.c.l.b16 %v330
        %v926 = vunpack.c.h.b16 %v330
        %v927 = vunpack.c.l.b16 %v331
        %v928 = vunpack.c.h.b16 %v331
        %v929 = vunpack.c.l.b16 %v332
        %v930 = vunpack.c.h.b16 %v332
        %v931 = vunpack.c.l.b16 %v333
        %v932 = vunpack.c.h.b16 %v333
        %v933 = vunpack.c.l.b16 %v334
        %v934 = vunpack.c.h.b16 %v334
        %v935 = vunpack.c.l.b16 %v335
        %v936 = vunpack.c.h.b16 %v335
        %v937 = vunpack.c.l.b16 %v336
        %v938 = vunpack.c.h.b16 %v336
        %v939 = vunpack.c.l.b16 %v337
        %v940 = vunpack.c.h.b16 %v337
        %v941 = vunpack.c.l.b16 %v338
        %v942 = vunpack.c.h.b16 %v338
        %v943 = vunpack.c.l.b16 %v339
        %v944 = vunpack.c.h.b16 %v339
        %v945 = vunpack.c.l.b16 %v340
        %v946 = vunpack.c.h.b16 %v340
        %v947 = vunpack.c.l.b16 %v341
        %v948 = vunpack.c.h.b16 %v341
        %v949 = vunpack.c.l.b16 %v342
        %v950 = vunpack.c.h.b16 %v342
        %v951 = vunpack.c.l.b16 %v343
        %v952 = vunpack.c.h.b16 %v343
        %v953 = vunpack.c.l.b16 %v344
        %v954 = vunpack.c.h.b16 %v344
        %v955 = vunpack.c.l.b16 %v345
        %v956 = vunpack.c.h.b16 %v345
        %v957 = vunpack.c.l.b16 %v346
        %v958 = vunpack.c.h.b16 %v346
        %v959 = vunpack.c.l.b16 %v347
        %v960 = vunpack.c.h.b16 %v347
        %v961 = vunpack.c.l.b16 %v348
        %v962 = vunpack.c.h.b16 %v348
        %v963 = vunpack.c.l.b16 %v349
        %v964 = vunpack.c.h.b16 %v349
        %v965 = vunpack.c.l.b16 %v350
        %v966 = vunpack.c.h.b16 %v350
        %v967 = vunpack.c.l.b16 %v351
        %v968 = vunpack.c.h.b16 %v351
        %v969 = vunpack.c.l.b16 %v352
        %v970 = vunpack.c.h.b16 %v352
        %v971 = vunpack.c.l.b16 %v353
        %v972 = vunpack.c.h.b16 %v353
        %v973 = vunpack.c.l.b16 %v354
        %v974 = vunpack.c.h.b16 %v354
        %v975 = vunpack.c.l.b16 %v355
        %v976 = vunpack.c.h.b16 %v355
        %v977 = vunpack.c.l.b16 %v356
        %v978 = vunpack.c.h.b16 %v356
        %v979 = vunpack.c.l.b16 %v357
        %v980 = vunpack.c.h.b16 %v357
        %v981 = vunpack.c.l.b16 %v358
        %v982 = vunpack.c.h.b16 %v358
        %v983 = vunpack.c.l.b16 %v359
        %v984 = vunpack.c.h.b16 %v359
        %v985 = vunpack.c.l.b16 %v360
        %v986 = vunpack.c.h.b16 %v360
        %v987 = vunpack.c.l.b16 %v361
        %v988 = vunpack.c.h.b16 %v361
        %v989 = vunpack.c.l.b16 %v362
        %v990 = vunpack.c.h.b16 %v362
        %v991 = vunpack.c.l.b16 %v363
        %v992 = vunpack.c.h.b16 %v363
        %v993 = vunpack.c.l.b16 %v364
        %v994 = vunpack.c.h.b16 %v364
        %v995 = vunpack.c.l.b16 %v365
        %v996 = vunpack.c.h.b16 %v365
        %v997 = vunpack.c.l.b16 %v366
        %v998 = vunpack.c.h.b16 %v366
        %v999 = vunpack.c.l.b16 %v367
        %v1000 = vunpack.c.h.b16 %v367
        %v1001 = vunpack.c.l.b16 %v368
        %v1002 = vunpack.c.h.b16 %v368
        %v1003 = vunpack.c.l.b16 %v369
        %v1004 = vunpack.c.h.b16 %v369
        %v1005 = vunpack.c.l.b16 %v370
        %v1006 = vunpack.c.h.b16 %v370
        %v1007 = vunpack.c.l.b16 %v371
        %v1008 = vunpack.c.h.b16 %v371
        %v1009 = vunpack.c.l.b16 %v372
        %v1010 = vunpack.c.h.b16 %v372
        %v1011 = vunpack.c.l.b16 %v373
        %v1012 = vunpack.c.h.b16 %v373
        %v1013 = vunpack.c.l.b16 %v374
        %v1014 = vunpack.c.h.b16 %v374
        %v1015 = vunpack.c.l.b16 %v375
        %v1016 = vunpack.c.h.b16 %v375
        %v1017 = vunpack.c.l.b16 %v376
        %v1018 = vunpack.c.h.b16 %v376
        %v1019 = vunpack.c.l.b16 %v377
        %v1020 = vunpack.c.h.b16 %v377
        %v1021 = vunpack.c.l.b16 %v378
        %v1022 = vunpack.c.h.b16 %v378
        %v1023 = vunpack.c.l.b16 %v379
        %v1024 = vunpack.c.h.b16 %v379
        %v1025 = vunpack.c.l.b16 %v380
        %v1026 = vunpack.c.h.b16 %v380
        %v1027 = vunpack.c.l.b16 %v381
        %v1028 = vunpack.c.h.b16 %v381
        %v1029 = vunpack.c.l.b16 %v382
        %v1030 = vunpack.c.h.b16 %v382
        %v1031 = vunpack.c.l.b16 %v383
        %v1032 = vunpack.c.h.b16 %v383
        %v1033 = vunpack.c.l.b16 %v384
        %v1034 = vunpack.c.h.b16 %v384
        %v1035 = vunpack.c.l.b16 %v385
        %v1036 = vunpack.c.h.b16 %v385
        %v1037 = vunpack.c.l.b16 %v386
        %v1038 = vunpack.c.h.b16 %v386
        %v1039 = vunpack.c.l.b16 %v387
        %v1040 = vunpack.c.h.b16 %v387
        %v1041 = vunpack.c.l.b16 %v388
        %v1042 = vunpack.c.h.b16 %v388
        %v1043 = vunpack.c.l.b16 %v389
        %v1044 = vunpack.c.h.b16 %v389
        %v1045 = vunpack.c.l.b16 %v390
        %v1046 = vunpack.c.h.b16 %v390
        %v1047 = vunpack.c.l.b16 %v391
        %v1048 = vunpack.c.h.b16 %v391
        %v1049 = vunpack.c.l.b16 %v392
        %v1050 = vunpack.c.h.b16 %v392
        %v1051 = vunpack.c.l.b16 %v393
        %v1052 = vunpack.c.h.b16 %v393
        %v1053 = vunpack.c.l.b16 %v394
        %v1054 = vunpack.c.h.b16 %v394
        %v1055 = vunpack.c.l.b16 %v395
        %v1056 = vunpack.c.h.b16 %v395
        %v1057 = vunpack.c.l.b16 %v396
        %v1058 = vunpack.c.h.b16 %v396
        %v1059 = vunpack.c.l.b16 %v397
        %v1060 = vunpack.c.h.b16 %v397
        %v1061 = vunpack.c.l.b16 %v398
        %v1062 = vunpack.c.h.b16 %v398
        %v1063 = vunpack.c.l.b16 %v399
        %v1064 = vunpack.c.h.b16 %v399
        %v1065 = vunpack.c.l.b16 %v400
        %v1066 = vunpack.c.h.b16 %v400
        %v1067 = vunpack.c.l.b16 %v401
        %v1068 = vunpack.c.h.b16 %v401
        %v1069 = vunpack.c.l.b16 %v402
        %v1070 = vunpack.c.h.b16 %v402
        %v1071 = vunpack.c.l.b16 %v403
        %v1072 = vunpack.c.h.b16 %v403
        %v1073 = vunpack.c.l.b16 %v404
        %v1074 = vunpack.c.h.b16 %v404
        %v1075 = vunpack.c.l.b16 %v405
        %v1076 = vunpack.c.h.b16 %v405
        %v1077 = vunpack.c.l.b16 %v406
        %v1078 = vunpack.c.h.b16 %v406
        %v1079 = vunpack.c.l.b16 %v407
        %v1080 = vunpack.c.h.b16 %v407
        %v1081 = vunpack.c.l.b16 %v408
        %v1082 = vunpack.c.h.b16 %v408
        %v1083 = vunpack.c.l.b16 %v409
        %v1084 = vunpack.c.h.b16 %v409
        %v1085 = vunpack.c.l.b16 %v410
        %v1086 = vunpack.c.h.b16 %v410
        %v1087 = vunpack.c.l.b16 %v411
        %v1088 = vunpack.c.h.b16 %v411
        %v1089 = vunpack.c.l.b16 %v412
        %v1090 = vunpack.c.h.b16 %v412
        %v1091 = vunpack.c.l.b16 %v413
        %v1092 = vunpack.c.h.b16 %v413
        %v1093 = vunpack.c.l.b16 %v414
        %v1094 = vunpack.c.h.b16 %v414
        %v1095 = vunpack.c.l.b16 %v415
        %v1096 = vunpack.c.h.b16 %v415
        %v1097 = vunpack.c.l.b16 %v416
        %v1098 = vunpack.c.h.b16 %v416
        %v1099 = vunpack.c.l.b16 %v417
        %v1100 = vunpack.c.h.b16 %v417
        %v1101 = vunpack.c.l.b16 %v418
        %v1102 = vunpack.c.h.b16 %v418
        %v1103 = vunpack.c.l.b16 %v419
        %v1104 = vunpack.c.h.b16 %v419
        %v1105 = vunpack.c.l.b16 %v420
        %v1106 = vunpack.c.h.b16 %v420
        %v1107 = vunpack.c.l.b16 %v421
        %v1108 = vunpack.c.h.b16 %v421
        %v1109 = vunpack.c.l.b16 %v422
        %v1110 = vunpack.c.h.b16 %v422
        %v1111 = vunpack.c.l.b16 %v423
        %v1112 = vunpack.c.h.b16 %v423
        %v1113 = vunpack.c.l.b16 %v424
        %v1114 = vunpack.c.h.b16 %v424
        %v1115 = vunpack.c.l.b16 %v425
        %v1116 = vunpack.c.h.b16 %v425
        %v1117 = vunpack.c.l.b16 %v426
        %v1118 = vunpack.c.h.b16 %v426
        %v1119 = vunpack.c.l.b16 %v427
        %v1120 = vunpack.c.h.b16 %v427
        %v1121 = vunpack.c.l.b16 %v428
        %v1122 = vunpack.c.h.b16 %v428
        %v1123 = vunpack.c.l.b16 %v429
        %v1124 = vunpack.c.h.b16 %v429
        %v1125 = vunpack.c.l.b16 %v430
        %v1126 = vunpack.c.h.b16 %v430
        %v1127 = vunpack.c.l.b16 %v431
        %v1128 = vunpack.c.h.b16 %v431
        %v1129 = vunpack.c.l.b16 %v432
        %v1130 = vunpack.c.h.b16 %v432
        %v1131 = vunpack.c.l.b16 %v433
        %v1132 = vunpack.c.h.b16 %v433
        %v1133 = vunpack.c.l.b16 %v434
        %v1134 = vunpack.c.h.b16 %v434
        %v1135 = vunpack.c.l.b16 %v435
        %v1136 = vunpack.c.h.b16 %v435
        %v1137 = vunpack.c.l.b16 %v436
        %v1138 = vunpack.c.h.b16 %v436
        %v1139 = vunpack.c.l.b16 %v437
        %v1140 = vunpack.c.h.b16 %v437
        %v1141 = vunpack.c.l.b16 %v438
        %v1142 = vunpack.c.h.b16 %v438
        %v1143 = vunpack.c.l.b16 %v439
        %v1144 = vunpack.c.h.b16 %v439
        %v1145 = vunpack.c.l.b16 %v440
        %v1146 = vunpack.c.h.b16 %v440
        %v1147 = vunpack.c.l.b16 %v441
        %v1148 = vunpack.c.h.b16 %v441
        %v1149 = vunpack.c.l.b16 %v442
        %v1150 = vunpack.c.h.b16 %v442
        %v1151 = vunpack.c.l.b16 %v443
        %v1152 = vunpack.c.h.b16 %v443
        %v1153 = vunpack.c.l.b16 %v444
        %v1154 = vunpack.c.h.b16 %v444
        %v1155 = vunpack.c.l.b16 %v445
        %v1156 = vunpack.c.h.b16 %v445
        %v1157 = vunpack.c.l.b16 %v446
        %v1158 = vunpack.c.h.b16 %v446
        %v1159 = vunpack.c.l.b16 %v447
        %v1160 = vunpack.c.h.b16 %v447
        %v1161 = vunpack.c.l.b16 %v448
        %v1162 = vunpack.c.h.b16 %v448
        %v1163 = vunpack.c.l.b16 %v449
        %v1164 = vunpack.c.h.b16 %v449
        %v1165 = vunpack.c.l.b16 %v450
        %v1166 = vunpack.c.h.b16 %v450
        %v1167 = vunpack.c.l.b16 %v451
        %v1168 = vunpack.c.h.b16 %v451
        %v1169 = vunpack.c.l.b16 %v452
        %v1170 = vunpack.c.h.b16 %v452
        %v1171 = vunpack.c.l.b16 %v453
        %v1172 = vunpack.c.h.b16 %v453
        %v1173 = vunpack.c.l.b16 %v454
        %v1174 = vunpack.c.h.b16 %v454
        %v1175 = vunpack.c.l.b16 %v455
        %v1176 = vunpack.c.h.b16 %v455
        %v1177 = vunpack.c.l.b16 %v456
        %v1178 = vunpack.c.h.b16 %v456
        %v1179 = vunpack.c.l.b16 %v457
        %v1180 = vunpack.c.h.b16 %v457
        %v1181 = vunpack.c.l.b16 %v458
        %v1182 = vunpack.c.h.b16 %v458
        %v1183 = vunpack.c.l.b16 %v459
        %v1184 = vunpack.c.h.b16 %v459
        %v1185 = vunpack.c.l.b16 %v460
        %v1186 = vunpack.c.h.b16 %v460
        %v1187 = vunpack.c.l.b16 %v461
        %v1188 = vunpack.c.h.b16 %v461
        %v1189 = vunpack.c.l.b16 %v462
        %v1190 = vunpack.c.h.b16 %v462
        %v1191 = vunpack.c.l.b16 %v463
        %v1192 = vunpack.c.h.b16 %v463
        %v1193 = vunpack.c.l.b16 %v464
        %v1194 = vunpack.c.h.b16 %v464
        %v1195 = vunpack.c.l.b16 %v465
        %v1196 = vunpack.c.h.b16 %v465
        %v1197 = vunpack.c.l.b16 %v466
        %v1198 = vunpack.c.h.b16 %v466
        %v1199 = vunpack.c.l.b16 %v467
        %v1200 = vunpack.c.h.b16 %v467
        %v1201 = vunpack.c.l.b16 %v468
        %v1202 = vunpack.c.h.b16 %v468
        %v1203 = vunpack.c.l.b16 %v469
        %v1204 = vunpack.c.h.b16 %v469
        %v1205 = vunpack.c.l.b16 %v470
        %v1206 = vunpack.c.h.b16 %v470
        %v1207 = vunpack.c.l.b16 %v471
        %v1208 = vunpack.c.h.b16 %v471
        %v1209 = vunpack.c.l.b16 %v472
        %v1210 = vunpack.c.h.b16 %v472
        %v1211 = vunpack.c.l.b16 %v473
        %v1212 = vunpack.c.h.b16 %v473
        %v1213 = vunpack.c.l.b16 %v474
        %v1214 = vunpack.c.h.b16 %v474
        %v1215 = vunpack.c.l.b16 %v475
        %v1216 = vunpack.c.h.b16 %v475
        %v1217 = vunpack.c.l.b16 %v476
        %v1218 = vunpack.c.h.b16 %v476
        %v1219 = vunpack.c.l.b16 %v477
        %v1220 = vunpack.c.h.b16 %v477
        %v1221 = vunpack.c.l.b16 %v478
        %v1222 = vunpack.c.h.b16 %v478
        %v1223 = vunpack.c.l.b16 %v479
        %v1224 = vunpack.c.h.b16 %v479
        %v1225 = vunpack.c.l.b16 %v480
        %v1226 = vunpack.c.h.b16 %v480
        %v1227 = vunpack.c.l.b16 %v481
        %v1228 = vunpack.c.h.b16 %v481
        %v1229 = vunpack.c.l.b16 %v482
        %v1230 = vunpack.c.h.b16 %v482
        %v1231 = vunpack.c.l.b16 %v483
        %v1232 = vunpack.c.h.b16 %v483
        %v1233 = vunpack.c.l.b16 %v484
        %v1234 = vunpack.c.h.b16 %v484
        %v1235 = vunpack.c.l.b16 %v485
        %v1236 = vunpack.c.h.b16 %v485
        %v1237 = vunpack.c.l.b16 %v486
        %v1238 = vunpack.c.h.b16 %v486
        %v1239 = vunpack.c.l.b16 %v487
        %v1240 = vunpack.c.h.b16 %v487
        %v1241 = vunpack.c.l.b16 %v488
        %v1242 = vunpack.c.h.b16 %v488
        %v1243 = vunpack.c.l.b16 %v489
        %v1244 = vunpack.c.h.b16 %v489
        %v1245 = vunpack.c.l.b16 %v490
        %v1246 = vunpack.c.h.b16 %v490
        %v1247 = vunpack.c.l.b16 %v491
        %v1248 = vunpack.c.h.b16 %v491
        %v1249 = vunpack.c.l.b16 %v492
        %v1250 = vunpack.c.h.b16 %v492
        %v1251 = vunpack.c.l.b16 %v493
        %v1252 = vunpack.c.h.b16 %v493
        %v1253 = vunpack.c.l.b16 %v494
        %v1254 = vunpack.c.h.b16 %v494
        %v1255 = vunpack.c.l.b16 %v495
        %v1256 = vunpack.c.h.b16 %v495
        %v1257 = vunpack.c.l.b16 %v496
        %v1258 = vunpack.c.h.b16 %v496
        %v1259 = vunpack.c.l.b16 %v497
        %v1260 = vunpack.c.h.b16 %v497
        %v1261 = vunpack.c.l.b16 %v498
        %v1262 = vunpack.c.h.b16 %v498
        %v1263 = vunpack.c.l.b16 %v499
        %v1264 = vunpack.c.h.b16 %v499
        %v1265 = vunpack.c.l.b16 %v500
        %v1266 = vunpack.c.h.b16 %v500
        %v1267 = vunpack.c.l.b16 %v501
        %v1268 = vunpack.c.h.b16 %v501
        %v1269 = vunpack.c.l.b16 %v502
        %v1270 = vunpack.c.h.b16 %v502
        %v1271 = vunpack.c.l.b16 %v503
        %v1272 = vunpack.c.h.b16 %v503
        %v1273 = vunpack.c.l.b16 %v504
        %v1274 = vunpack.c.h.b16 %v504
        %v1275 = vunpack.c.l.b16 %v505
        %v1276 = vunpack.c.h.b16 %v505
        %v1277 = vunpack.c.l.b16 %v506
        %v1278 = vunpack.c.h.b16 %v506
        %v1279 = vunpack.c.l.b16 %v507
        %v1280 = vunpack.c.h.b16 %v507
        %v1281 = vunpack.c.l.b16 %v508
        %v1282 = vunpack.c.h.b16 %v508
        %v1283 = vunpack.c.l.b16 %v509
        %v1284 = vunpack.c.h.b16 %v509
        %v1285 = vunpack.c.l.b16 %v510
        %v1286 = vunpack.c.h.b16 %v510
        %v1287 = vunpack.c.l.b16 %v511
        %v1288 = vunpack.c.h.b16 %v511
        %v1289 = vunpack.c.l.b16 %v512
        %v1290 = vunpack.c.h.b16 %v512
        %v1291 = vunpack.c.l.b16 %v513
        %v1292 = vunpack.c.h.b16 %v513
        %v1293 = vunpack.c.l.b16 %v514
        %v1294 = vunpack.c.h.b16 %v514
        %v1295 = vunpack.c.l.b16 %v515
        %v1296 = vunpack.c.h.b16 %v515
        %v1297 = vunpack.c.l.b16 %v516
        %v1298 = vunpack.c.h.b16 %v516
        %v1299 = vunpack.c.l.b16 %v517
        %v1300 = vunpack.c.h.b16 %v517
        %v1301 = vunpack.c.l.b16 %v518
        %v1302 = vunpack.c.h.b16 %v518
        %v1303 = vunpack.c.l.b16 %v519
        %v1304 = vunpack.c.h.b16 %v519
        %v1305 = vunpack.c.l.b16 %v520
        %v1306 = vunpack.c.h.b16 %v520
        %v1307 = vunpack.c.l.b16 %v521
        %v1308 = vunpack.c.h.b16 %v521
        %v1309 = vunpack.c.l.b16 %v522
        %v1310 = vunpack.c.h.b16 %v522
        %v1311 = vunpack.c.l.b16 %v523
        %v1312 = vunpack.c.h.b16 %v523
        %v1313 = vunpack.c.l.b16 %v524
        %v1314 = vunpack.c.h.b16 %v524
        %v1315 = vunpack.c.l.b16 %v525
        %v1316 = vunpack.c.h.b16 %v525
        %v1317 = vunpack.c.l.b16 %v526
        %v1318 = vunpack.c.h.b16 %v526
        %v1319 = vunpack.c.l.b16 %v527
        %v1320 = vunpack.c.h.b16 %v527
        %v1321 = vunpack.c.l.b16 %v528
        %v1322 = vunpack.c.h.b16 %v528
        %v1323 = vunpack.c.l.b16 %v529
        %v1324 = vunpack.c.h.b16 %v529
        %v1325 = vunpack.c.l.b16 %v530
        %v1326 = vunpack.c.h.b16 %v530
        %v1327 = vunpack.c.l.b16 %v531
        %v1328 = vunpack.c.h.b16 %v531
        %v1329 = vunpack.c.l.b16 %v532
        %v1330 = vunpack.c.h.b16 %v532
        %v1331 = vunpack.c.l.b16 %v533
        %v1332 = vunpack.c.h.b16 %v533
        %v1333 = vunpack.c.l.b16 %v534
        %v1334 = vunpack.c.h.b16 %v534
        %v1335 = vunpack.c.l.b16 %v535
        %v1336 = vunpack.c.h.b16 %v535
        %v1337 = vunpack.c.l.b16 %v536
        %v1338 = vunpack.c.h.b16 %v536
        %v1339 = vunpack.c.l.b16 %v537
        %v1340 = vunpack.c.h.b16 %v537
        %v1341 = vunpack.c.l.b16 %v538
        %v1342 = vunpack.c.h.b16 %v538
        %v1343 = vunpack.c.l.b16 %v539
        %v1344 = vunpack.c.h.b16 %v539
        %v1345 = vunpack.c.l.b16 %v540
        %v1346 = vunpack.c.h.b16 %v540
        %v1347 = vunpack.c.l.b16 %v541
        %v1348 = vunpack.c.h.b16 %v541
        %v1349 = vunpack.c.l.b16 %v542
        %v1350 = vunpack.c.h.b16 %v542
        %v1351 = vunpack.c.l.b16 %v543
        %v1352 = vunpack.c.h.b16 %v543
        %v1353 = vunpack.c.l.b16 %v544
        %v1354 = vunpack.c.h.b16 %v544
        %v1355 = vunpack.c.l.b16 %v545
        %v1356 = vunpack.c.h.b16 %v545
        %v1357 = vunpack.c.l.b16 %v546
        %v1358 = vunpack.c.h.b16 %v546
        %v1359 = vunpack.c.l.b16 %v547
        %v1360 = vunpack.c.h.b16 %v547
        %v1361 = vunpack.c.l.b16 %v548
        %v1362 = vunpack.c.h.b16 %v548
        %v1363 = vunpack.c.l.b16 %v549
        %v1364 = vunpack.c.h.b16 %v549
        %v1365 = vunpack.c.l.b16 %v550
        %v1366 = vunpack.c.h.b16 %v550
        %v1367 = vunpack.c.l.b16 %v551
        %v1368 = vunpack.c.h.b16 %v551
        %v1369 = vunpack.c.l.b16 %v552
        %v1370 = vunpack.c.h.b16 %v552
        %v1371 = vunpack.c.l.b16 %v553
        %v1372 = vunpack.c.h.b16 %v553
        %v1373 = vunpack.c.l.b16 %v554
        %v1374 = vunpack.c.h.b16 %v554
        %v1375 = vunpack.c.l.b16 %v555
        %v1376 = vunpack.c.h.b16 %v555
        %v1377 = vunpack.c.l.b16 %v556
        %v1378 = vunpack.c.h.b16 %v556
        %v1379 = vunpack.c.l.b16 %v557
        %v1380 = vunpack.c.h.b16 %v557
        %v1381 = vunpack.c.l.b16 %v558
        %v1382 = vunpack.c.h.b16 %v558
        %v1383 = vunpack.c.l.b16 %v559
        %v1384 = vunpack.c.h.b16 %v559
        %v1385 = vunpack.c.l.b16 %v560
        %v1386 = vunpack.c.h.b16 %v560
        %v1387 = vunpack.c.l.b16 %v561
        %v1388 = vunpack.c.h.b16 %v561
        %v1389 = vunpack.c.l.b16 %v562
        %v1390 = vunpack.c.h.b16 %v562
        %v1391 = vunpack.c.l.b16 %v563
        %v1392 = vunpack.c.h.b16 %v563
        %v1393 = vunpack.c.l.b16 %v564
        %v1394 = vunpack.c.h.b16 %v564
        %v1395 = vpack.c.b16 %v887, %v883
        %v1396 = vpack.c.b16 %v888, %v884
        %v1397 = vpack.c.b16 %v889, %v885
        %v1398 = vpack.c.b16 %v890, %v886
        %v1399 = vpack.c.b16 %v895, %v891
        %v1400 = vpack.c.b16 %v896, %v892
        %v1401 = vpack.c.b16 %v897, %v893
        %v1402 = vpack.c.b16 %v898, %v894
        %v1403 = vpack.c.b16 %v903, %v899
        %v1404 = vpack.c.b16 %v904, %v900
        %v1405 = vpack.c.b16 %v905, %v901
        %v1406 = vpack.c.b16 %v906, %v902
        %v1407 = vpack.c.b16 %v911, %v907
        %v1408 = vpack.c.b16 %v912, %v908
        %v1409 = vpack.c.b16 %v913, %v909
        %v1410 = vpack.c.b16 %v914, %v910
        %v1411 = vpack.c.b16 %v919, %v915
        %v1412 = vpack.c.b16 %v920, %v916
        %v1413 = vpack.c.b16 %v921, %v917
        %v1414 = vpack.c.b16 %v922, %v918
        %v1415 = vpack.c.b16 %v927, %v923
        %v1416 = vpack.c.b16 %v928, %v924
        %v1417 = vpack.c.b16 %v929, %v925
        %v1418 = vpack.c.b16 %v930, %v926
        %v1419 = vpack.c.b16 %v935, %v931
        %v1420 = vpack.c.b16 %v936, %v932
        %v1421 = vpack.c.b16 %v937, %v933
        %v1422 = vpack.c.b16 %v938, %v934
        %v1423 = vpack.c.b16 %v943, %v939
        %v1424 = vpack.c.b16 %v944, %v940
        %v1425 = vpack.c.b16 %v945, %v941
        %v1426 = vpack.c.b16 %v946, %v942
        %v1427 = vpack.c.b16 %v951, %v947
        %v1428 = vpack.c.b16 %v952, %v948
        %v1429 = vpack.c.b16 %v953, %v949
        %v1430 = vpack.c.b16 %v954, %v950
        %v1431 = vpack.c.b16 %v959, %v955
        %v1432 = vpack.c.b16 %v960, %v956
        %v1433 = vpack.c.b16 %v961, %v957
        %v1434 = vpack.c.b16 %v962, %v958
        %v1435 = vpack.c.b16 %v967, %v963
        %v1436 = vpack.c.b16 %v968, %v964
        %v1437 = vpack.c.b16 %v969, %v965
        %v1438 = vpack.c.b16 %v970, %v966
        %v1439 = vpack.c.b16 %v975, %v971
        %v1440 = vpack.c.b16 %v976, %v972
        %v1441 = vpack.c.b16 %v977, %v973
        %v1442 = vpack.c.b16 %v978, %v974
        %v1443 = vpack.c.b16 %v983, %v979
        %v1444 = vpack.c.b16 %v984, %v980
        %v1445 = vpack.c.b16 %v985, %v981
        %v1446 = vpack.c.b16 %v986, %v982
        %v1447 = vpack.c.b16 %v991, %v987
        %v1448 = vpack.c.b16 %v992, %v988
        %v1449 = vpack.c.b16 %v993, %v989
        %v1450 = vpack.c.b16 %v994, %v990
        %v1451 = vpack.c.b16 %v999, %v995
        %v1452 = vpack.c.b16 %v1000, %v996
        %v1453 = vpack.c.b16 %v1001, %v997
        %v1454 = vpack.c.b16 %v1002, %v998
        %v1455 = vpack.c.b16 %v1007, %v1003
        %v1456 = vpack.c.b16 %v1008, %v1004
        %v1457 = vpack.c.b16 %v1009, %v1005
        %v1458 = vpack.c.b16 %v1010, %v1006
        %v1459 = vpack.c.b16 %v1015, %v1011
        %v1460 = vpack.c.b16 %v1016, %v1012
        %v1461 = vpack.c.b16 %v1017, %v1013
        %v1462 = vpack.c.b16 %v1018, %v1014
        %v1463 = vpack.c.b16 %v1023, %v1019
        %v1464 = vpack.c.b16 %v1024, %v1020
        %v1465 = vpack.c.b16 %v1025, %v1021
        %v1466 = vpack.c.b16 %v1026, %v1022
        %v1467 = vpack.c.b16 %v1031, %v1027
        %v1468 = vpack.c.b16 %v1032, %v1028
        %v1469 = vpack.c.b16 %v1033, %v1029
        %v1470 = vpack.c.b16 %v1034, %v1030
        %v1471 = vpack.c.b16 %v1039, %v1035
        %v1472 = vpack.c.b16 %v1040, %v1036
        %v1473 = vpack.c.b16 %v1041, %v1037
        %v1474 = vpack.c.b16 %v1042, %v1038
        %v1475 = vpack.c.b16 %v1047, %v1043
        %v1476 = vpack.c.b16 %v1048, %v1044
        %v1477 = vpack.c.b16 %v1049, %v1045
        %v1478 = vpack.c.b16 %v1050, %v1046
        %v1479 = vpack.c.b16 %v1055, %v1051
        %v1480 = vpack.c.b16 %v1056, %v1052
        %v1481 = vpack.c.b16 %v1057, %v1053
        %v1482 = vpack.c.b16 %v1058, %v1054
        %v1483 = vpack.c.b16 %v1063, %v1059
        %v1484 = vpack.c.b16 %v1064, %v1060
        %v1485 = vpack.c.b16 %v1065, %v1061
        %v1486 = vpack.c.b16 %v1066, %v1062
        %v1487 = vpack.c.b16 %v1071, %v1067
        %v1488 = vpack.c.b16 %v1072, %v1068
        %v1489 = vpack.c.b16 %v1073, %v1069
        %v1490 = vpack.c.b16 %v1074, %v1070
        %v1491 = vpack.c.b16 %v1079, %v1075
        %v1492 = vpack.c.b16 %v1080, %v1076
        %v1493 = vpack.c.b16 %v1081, %v1077
        %v1494 = vpack.c.b16 %v1082, %v1078
        %v1495 = vpack.c.b16 %v1087, %v1083
        %v1496 = vpack.c.b16 %v1088, %v1084
        %v1497 = vpack.c.b16 %v1089, %v1085
        %v1498 = vpack.c.b16 %v1090, %v1086
        %v1499 = vpack.c.b16 %v1095, %v1091
        %v1500 = vpack.c.b16 %v1096, %v1092
        %v1501 = vpack.c.b16 %v1097, %v1093
        %v1502 = vpack.c.b16 %v1098, %v1094
        %v1503 = vpack.c.b16 %v1103, %v1099
        %v1504 = vpack.c.b16 %v1104, %v1100
        %v1505 = vpack.c.b16 %v1105, %v1101
        %v1506 = vpack.c.b16 %v1106, %v1102
        %v1507 = vpack.c.b16 %v1111, %v1107
        %v1508 = vpack.c.b16 %v1112, %v1108
        %v1509 = vpack.c.b16 %v1113, %v1109
        %v1510 = vpack.c.b16 %v1114, %v1110
        %v1511 = vpack.c.b16 %v1119, %v1115
        %v1512 = vpack.c.b16 %v1120, %v1116
        %v1513 = vpack.c.b16 %v1121, %v1117
        %v1514 = vpack.c.b16 %v1122, %v1118
        %v1515 = vpack.c.b16 %v1127, %v1123
        %v1516 = vpack.c.b16 %v1128, %v1124
        %v1517 = vpack.c.b16 %v1129, %v1125
        %v1518 = vpack.c.b16 %v1130, %v1126
        %v1519 = vpack.c.b16 %v1135, %v1131
        %v1520 = vpack.c.b16 %v1136, %v1132
        %v1521 = vpack.c.b16 %v1137, %v1133
        %v1522 = vpack.c.b16 %v1138, %v1134
        %v1523 = vpack.c.b16 %v1143, %v1139
        %v1524 = vpack.c.b16 %v1144, %v1140
        %v1525 = vpack.c.b16 %v1145, %v1141
        %v1526 = vpack.c.b16 %v1146, %v1142
        %v1527 = vpack.c.b16 %v1151, %v1147
        %v1528 = vpack.c.b16 %v1152, %v1148
        %v1529 = vpack.c.b16 %v1153, %v1149
        %v1530 = vpack.c.b16 %v1154, %v1150
        %v1531 = vpack.c.b16 %v1159, %v1155
        %v1532 = vpack.c.b16 %v1160, %v1156
        %v1533 = vpack.c.b16 %v1161, %v1157
        %v1534 = vpack.c.b16 %v1162, %v1158
        %v1535 = vpack.c.b16 %v1167, %v1163
        %v1536 = vpack.c.b16 %v1168, %v1164
        %v1537 = vpack.c.b16 %v1169, %v1165
        %v1538 = vpack.c.b16 %v1170, %v1166
        %v1539 = vpack.c.b16 %v1175, %v1171
        %v1540 = vpack.c.b16 %v1176, %v1172
        %v1541 = vpack.c.b16 %v1177, %v1173
        %v1542 = vpack.c.b16 %v1178, %v1174
        %v1543 = vpack.c.b16 %v1183, %v1179
        %v1544 = vpack.c.b16 %v1184, %v1180
        %v1545 = vpack.c.b16 %v1185, %v1181
        %v1546 = vpack.c.b16 %v1186, %v1182
        %v1547 = vpack.c.b16 %v1191, %v1187
        %v1548 = vpack.c.b16 %v1192, %v1188
        %v1549 = vpack.c.b16 %v1193, %v1189
        %v1550 = vpack.c.b16 %v1194, %v1190
        %v1551 = vpack.c.b16 %v1199, %v1195
        %v1552 = vpack.c.b16 %v1200, %v1196
        %v1553 = vpack.c.b16 %v1201, %v1197
        %v1554 = vpack.c.b16 %v1202, %v1198
        %v1555 = vpack.c.b16 %v1207, %v1203
        %v1556 = vpack.c.b16 %v1208, %v1204
        %v1557 = vpack.c.b16 %v1209, %v1205
        %v1558 = vpack.c.b16 %v1210, %v1206
        %v1559 = vpack.c.b16 %v1215, %v1211
        %v1560 = vpack.c.b16 %v1216, %v1212
        %v1561 = vpack.c.b16 %v1217, %v1213
        %v1562 = vpack.c.b16 %v1218, %v1214
        %v1563 = vpack.c.b16 %v1223, %v1219
        %v1564 = vpack.c.b16 %v1224, %v1220
        %v1565 = vpack.c.b16 %v1225, %v1221
        %v1566 = vpack.c.b16 %v1226, %v1222
        %v1567 = vpack.c.b16 %v1231, %v1227
        %v1568 = vpack.c.b16 %v1232, %v1228
        %v1569 = vpack.c.b16 %v1233, %v1229
        %v1570 = vpack.c.b16 %v1234, %v1230
        %v1571 = vpack.c.b16 %v1239, %v1235
        %v1572 = vpack.c.b16 %v1240, %v1236
        %v1573 = vpack.c.b16 %v1241, %v1237
        %v1574 = vpack.c.b16 %v1242, %v1238
        %v1575 = vpack.c.b16 %v1247, %v1243
        %v1576 = vpack.c.b16 %v1248, %v1244
        %v1577 = vpack.c.b16 %v1249, %v1245
        %v1578 = vpack.c.b16 %v1250, %v1246
        %v1579 = vpack.c.b16 %v1255, %v1251
        %v1580 = vpack.c.b16 %v1256, %v1252
        %v1581 = vpack.c.b16 %v1257, %v1253
        %v1582 = vpack.c.b16 %v1258, %v1254
        %v1583 = vpack.c.b16 %v1263, %v1259
        %v1584 = vpack.c.b16 %v1264, %v1260
        %v1585 = vpack.c.b16 %v1265, %v1261
        %v1586 = vpack.c.b16 %v1266, %v1262
        %v1587 = vpack.c.b16 %v1271, %v1267
        %v1588 = vpack.c.b16 %v1272, %v1268
        %v1589 = vpack.c.b16 %v1273, %v1269
        %v1590 = vpack.c.b16 %v1274, %v1270
        %v1591 = vpack.c.b16 %v1279, %v1275
        %v1592 = vpack.c.b16 %v1280, %v1276
        %v1593 = vpack.c.b16 %v1281, %v1277
        %v1594 = vpack.c.b16 %v1282, %v1278
        %v1595 = vpack.c.b16 %v1287, %v1283
        %v1596 = vpack.c.b16 %v1288, %v1284
        %v1597 = vpack.c.b16 %v1289, %v1285
        %v1598 = vpack.c.b16 %v1290, %v1286
        %v1599 = vpack.c.b16 %v1295, %v1291
        %v1600 = vpack.c.b16 %v1296, %v1292
        %v1601 = vpack.c.b16 %v1297, %v1293
        %v1602 = vpack.c.b16 %v1298, %v1294
        %v1603 = vpack.c.b16 %v1303, %v1299
        %v1604 = vpack.c.b16 %v1304, %v1300
        %v1605 = vpack.c.b16 %v1305, %v1301
        %v1606 = vpack.c.b16 %v1306, %v1302
        %v1607 = vpack.c.b16 %v1311, %v1307
        %v1608 = vpack.c.b16 %v1312, %v1308
        %v1609 = vpack.c.b16 %v1313, %v1309
        %v1610 = vpack.c.b16 %v1314, %v1310
        %v1611 = vpack.c.b16 %v1319, %v1315
        %v1612 = vpack.c.b16 %v1320, %v1316
        %v1613 = vpack.c.b16 %v1321, %v1317
        %v1614 = vpack.c.b16 %v1322, %v1318
        %v1615 = vpack.c.b16 %v1327, %v1323
        %v1616 = vpack.c.b16 %v1328, %v1324
        %v1617 = vpack.c.b16 %v1329, %v1325
        %v1618 = vpack.c.b16 %v1330, %v1326
        %v1619 = vpack.c.b16 %v1335, %v1331
        %v1620 = vpack.c.b16 %v1336, %v1332
        %v1621 = vpack.c.b16 %v1337, %v1333
        %v1622 = vpack.c.b16 %v1338, %v1334
        %v1623 = vpack.c.b16 %v1343, %v1339
        %v1624 = vpack.c.b16 %v1344, %v1340
        %v1625 = vpack.c.b16 %v1345, %v1341
        %v1626 = vpack.c.b16 %v1346, %v1342
        %v1627 = vpack.c.b16 %v1351, %v1347
        %v1628 = vpack.c.b16 %v1352, %v1348
        %v1629 = vpack.c.b16 %v1353, %v1349
        %v1630 = vpack.c.b16 %v1354, %v1350
        %v1631 = vpack.c.b16 %v1359, %v1355
        %v1632 = vpack.c.b16 %v1360, %v1356
        %v1633 = vpack.c.b16 %v1361, %v1357
        %v1634 = vpack.c.b16 %v1362, %v1358
        %v1635 = vpack.c.b16 %v1367, %v1363
        %v1636 = vpack.c.b16 %v1368, %v1364
        %v1637 = vpack.c.b16 %v1369, %v1365
        %v1638 = vpack.c.b16 %v1370, %v1366
        %v1639 = vpack.c.b16 %v1375, %v1371
        %v1640 = vpack.c.b16 %v1376, %v1372
        %v1641 = vpack.c.b16 %v1377, %v1373
        %v1642 = vpack.c.b16 %v1378, %v1374
        %v1643 = vpack.c.b16 %v1383, %v1379
        %v1644 = vpack.c.b16 %v1384, %v1380
        %v1645 = vpack.c.b16 %v1385, %v1381
        %v1646 = vpack.c.b16 %v1386, %v1382
        %v1647 = vpack.c.b16 %v1391, %v1387
        %v1648 = vpack.c.b16 %v1392, %v1388
        %v1649 = vpack.c.b16 %v1393, %v1389
        %v1650 = vpack.c.b16 %v1394, %v1390
        %1907 = vmatprep.subr.bf16.mxu0 %v1396
        %1908 = vmatpush1.bf16.msra.mxu0 %v1395
        %1909 = vmatprep.subr.bf16.mxu0 %v1400
        %1910 = vmatpush1.bf16.msra.mxu0 %v1399
        %1911 = vmatprep.subr.bf16.mxu0 %v1404
        %1912 = vmatpush1.bf16.msra.mxu0 %v1403
        %1913 = vmatprep.subr.bf16.mxu0 %v1408
        %1914 = vmatpush1.bf16.msra.mxu0 %v1407
        %1915 = vmatprep.subr.bf16.mxu0 %v1412
        %1916 = vmatpush1.bf16.msra.mxu0 %v1411
        %1917 = vmatprep.subr.bf16.mxu0 %v1416
        %1918 = vmatpush1.bf16.msra.mxu0 %v1415
        %1919 = vmatprep.subr.bf16.mxu0 %v1420
        %1920 = vmatpush1.bf16.msra.mxu0 %v1419
        %1921 = vmatprep.subr.bf16.mxu0 %v1424
        %1922 = vmatpush1.bf16.msra.mxu0 %v1423
        %1923 = vmatprep.subr.bf16.mxu0 %v1428
        %1924 = vmatpush1.bf16.msra.mxu0 %v1427
        %1925 = vmatprep.subr.bf16.mxu0 %v1432
        %1926 = vmatpush1.bf16.msra.mxu0 %v1431
        %1927 = vmatprep.subr.bf16.mxu0 %v1436
        %1928 = vmatpush1.bf16.msra.mxu0 %v1435
        %1929 = vmatprep.subr.bf16.mxu0 %v1440
        %1930 = vmatpush1.bf16.msra.mxu0 %v1439
        %1931 = vmatprep.subr.bf16.mxu0 %v1444
        %1932 = vmatpush1.bf16.msra.mxu0 %v1443
        %1933 = vmatprep.subr.bf16.mxu0 %v1448
        %1934 = vmatpush1.bf16.msra.mxu0 %v1447
        %1935 = vmatprep.subr.bf16.mxu0 %v1452
        %1936 = vmatpush1.bf16.msra.mxu0 %v1451
        %1937 = vmatprep.subr.bf16.mxu0 %v1456
        %1938 = vmatpush1.bf16.msra.mxu0 %v1455
        %1939 = vmatprep.mubr.bf16.mxu0 %v612
        %1940 = vmatmul.mubr.bf16.gmra.mrb[0].mxu0 %v611
        %v1941 = vpop.f32.mrb[0].mxu0
        %v1942 = vadd.f32 %v570, %v1941
        %v1943 = vpop.f32.mrb[0].mxu0
        %v1944 = vadd.f32 %v574, %v1943
        %v1945 = vpop.f32.mrb[0].mxu0
        %v1946 = vadd.f32 %v570, %v1945
        %v1947 = vpop.f32.mrb[0].mxu0
        %v1948 = vadd.f32 %v574, %v1947
        %1949 = vdwg.mxu0
        %1950 = vmatprep.subr.bf16.mxu0 %v1460
        %1951 = vmatpush1.bf16.msra.mxu0 %v1459
        %1952 = vmatprep.subr.bf16.mxu0 %v1464
        %1953 = vmatpush1.bf16.msra.mxu0 %v1463
        %1954 = vmatprep.subr.bf16.mxu0 %v1468
        %1955 = vmatpush1.bf16.msra.mxu0 %v1467
        %1956 = vmatprep.subr.bf16.mxu0 %v1472
        %1957 = vmatpush1.bf16.msra.mxu0 %v1471
        %1958 = vmatprep.subr.bf16.mxu0 %v1476
        %1959 = vmatpush1.bf16.msra.mxu0 %v1475
        %1960 = vmatprep.subr.bf16.mxu0 %v1480
        %1961 = vmatpush1.bf16.msra.mxu0 %v1479
        %1962 = vmatprep.subr.bf16.mxu0 %v1484
        %1963 = vmatpush1.bf16.msra.mxu0 %v1483
        %1964 = vmatprep.subr.bf16.mxu0 %v1488
        %1965 = vmatpush1.bf16.msra.mxu0 %v1487
        %1966 = vmatprep.subr.bf16.mxu0 %v1492
        %1967 = vmatpush1.bf16.msra.mxu0 %v1491
        %1968 = vmatprep.subr.bf16.mxu0 %v1496
        %1969 = vmatpush1.bf16.msra.mxu0 %v1495
        %1970 = vmatprep.subr.bf16.mxu0 %v1500
        %1971 = vmatpush1.bf16.msra.mxu0 %v1499
        %1972 = vmatprep.subr.bf16.mxu0 %v1504
        %1973 = vmatpush1.bf16.msra.mxu0 %v1503
        %1974 = vmatprep.subr.bf16.mxu0 %v1508
        %1975 = vmatpush1.bf16.msra.mxu0 %v1507
        %1976 = vmatprep.subr.bf16.mxu0 %v1512
        %1977 = vmatpush1.bf16.msra.mxu0 %v1511
        %1978 = vmatprep.subr.bf16.mxu0 %v1516
        %1979 = vmatpush1.bf16.msra.mxu0 %v1515
        %1980 = vmatprep.subr.bf16.mxu0 %v1520
        %1981 = vmatpush1.bf16.msra.mxu0 %v1519
        %1982 = vmatprep.mubr.bf16.mxu0 %v614
        %1983 = vmatmul.mubr.bf16.gmra.mrb[0].mxu0 %v613
        %v1984 = vpop.f32.mrb[0].mxu0
        %v1985 = vadd.f32 %v1942, %v1984
        %v1986 = vpop.f32.mrb[0].mxu0
        %v1987 = vadd.f32 %v1944, %v1986
        %v1988 = vpop.f32.mrb[0].mxu0
        %v1989 = vadd.f32 %v1946, %v1988
        %v1990 = vpop.f32.mrb[0].mxu0
        %v1991 = vadd.f32 %v1948, %v1990
        %1992 = vdwg.mxu0
        %1993 = vmatprep.subr.bf16.mxu0 %v1524
        %1994 = vmatpush1.bf16.msra.mxu0 %v1523
        %1995 = vmatprep.subr.bf16.mxu0 %v1528
        %1996 = vmatpush1.bf16.msra.mxu0 %v1527
        %1997 = vmatprep.subr.bf16.mxu0 %v1532
        %1998 = vmatpush1.bf16.msra.mxu0 %v1531
        %1999 = vmatprep.subr.bf16.mxu0 %v1536
        %2000 = vmatpush1.bf16.msra.mxu0 %v1535
        %2001 = vmatprep.subr.bf16.mxu0 %v1540
        %2002 = vmatpush1.bf16.msra.mxu0 %v1539
        %2003 = vmatprep.subr.bf16.mxu0 %v1544
        %2004 = vmatpush1.bf16.msra.mxu0 %v1543
        %2005 = vmatprep.subr.bf16.mxu0 %v1548
        %2006 = vmatpush1.bf16.msra.mxu0 %v1547
        %2007 = vmatprep.subr.bf16.mxu0 %v1552
        %2008 = vmatpush1.bf16.msra.mxu0 %v1551
        %2009 = vmatprep.subr.bf16.mxu0 %v1556
        %2010 = vmatpush1.bf16.msra.mxu0 %v1555
        %2011 = vmatprep.subr.bf16.mxu0 %v1560
        %2012 = vmatpush1.bf16.msra.mxu0 %v1559
        %2013 = vmatprep.subr.bf16.mxu0 %v1564
        %2014 = vmatpush1.bf16.msra.mxu0 %v1563
        %2015 = vmatprep.subr.bf16.mxu0 %v1568
        %2016 = vmatpush1.bf16.msra.mxu0 %v1567
        %2017 = vmatprep.subr.bf16.mxu0 %v1572
        %2018 = vmatpush1.bf16.msra.mxu0 %v1571
        %2019 = vmatprep.subr.bf16.mxu0 %v1576
        %2020 = vmatpush1.bf16.msra.mxu0 %v1575
        %2021 = vmatprep.subr.bf16.mxu0 %v1580
        %2022 = vmatpush1.bf16.msra.mxu0 %v1579
        %2023 = vmatprep.subr.bf16.mxu0 %v1584
        %2024 = vmatpush1.bf16.msra.mxu0 %v1583
        %2025 = vmatprep.mubr.bf16.mxu0 %v616
        %2026 = vmatmul.mubr.bf16.gmra.mrb[0].mxu0 %v615
        %v2027 = vpop.f32.mrb[0].mxu0
        %v2028 = vadd.f32 %v1985, %v2027
        %v2029 = vpop.f32.mrb[0].mxu0
        %v2030 = vadd.f32 %v1987, %v2029
        %v2031 = vpop.f32.mrb[0].mxu0
        %v2032 = vadd.f32 %v1989, %v2031
        %v2033 = vpop.f32.mrb[0].mxu0
        %v2034 = vadd.f32 %v1991, %v2033
        %2035 = vdwg.mxu0
        %2036 = vmatprep.subr.bf16.mxu0 %v1588
        %2037 = vmatpush1.bf16.msra.mxu0 %v1587
        %2038 = vmatprep.subr.bf16.mxu0 %v1592
        %2039 = vmatpush1.bf16.msra.mxu0 %v1591
        %2040 = vmatprep.subr.bf16.mxu0 %v1596
        %2041 = vmatpush1.bf16.msra.mxu0 %v1595
        %2042 = vmatprep.subr.bf16.mxu0 %v1600
        %2043 = vmatpush1.bf16.msra.mxu0 %v1599
        %2044 = vmatprep.subr.bf16.mxu0 %v1604
        %2045 = vmatpush1.bf16.msra.mxu0 %v1603
        %2046 = vmatprep.subr.bf16.mxu0 %v1608
        %2047 = vmatpush1.bf16.msra.mxu0 %v1607
        %2048 = vmatprep.subr.bf16.mxu0 %v1612
        %2049 = vmatpush1.bf16.msra.mxu0 %v1611
        %2050 = vmatprep.subr.bf16.mxu0 %v1616
        %2051 = vmatpush1.bf16.msra.mxu0 %v1615
        %2052 = vmatprep.subr.bf16.mxu0 %v1620
        %2053 = vmatpush1.bf16.msra.mxu0 %v1619
        %2054 = vmatprep.subr.bf16.mxu0 %v1624
        %2055 = vmatpush1.bf16.msra.mxu0 %v1623
        %2056 = vmatprep.subr.bf16.mxu0 %v1628
        %2057 = vmatpush1.bf16.msra.mxu0 %v1627
        %2058 = vmatprep.subr.bf16.mxu0 %v1632
        %2059 = vmatpush1.bf16.msra.mxu0 %v1631
        %2060 = vmatprep.subr.bf16.mxu0 %v1636
        %2061 = vmatpush1.bf16.msra.mxu0 %v1635
        %2062 = vmatprep.subr.bf16.mxu0 %v1640
        %2063 = vmatpush1.bf16.msra.mxu0 %v1639
        %2064 = vmatprep.subr.bf16.mxu0 %v1644
        %2065 = vmatpush1.bf16.msra.mxu0 %v1643
        %2066 = vmatprep.subr.bf16.mxu0 %v1648
        %2067 = vmatpush1.bf16.msra.mxu0 %v1647
        %2068 = vmatprep.mubr.bf16.mxu0 %v618
        %2069 = vmatmul.mubr.bf16.gmra.mrb[0].mxu0 %v617
        %v2070 = vpop.f32.mrb[0].mxu0
        %v2071 = vadd.f32 %v2028, %v2070
        %v2072 = vpop.f32.mrb[0].mxu0
        %v2073 = vadd.f32 %v2030, %v2072
        %v2074 = vpop.f32.mrb[0].mxu0
        %v2075 = vadd.f32 %v2032, %v2074
        %v2076 = vpop.f32.mrb[0].mxu0
        %v2077 = vadd.f32 %v2034, %v2076
        %2078 = vdwg.mxu0
        %2079 = vmatprep.subr.bf16.mxu0 %v1398
        %2080 = vmatpush1.bf16.msra.mxu0 %v1397
        %2081 = vmatprep.subr.bf16.mxu0 %v1402
        %2082 = vmatpush1.bf16.msra.mxu0 %v1401
        %2083 = vmatprep.subr.bf16.mxu0 %v1406
        %2084 = vmatpush1.bf16.msra.mxu0 %v1405
        %2085 = vmatprep.subr.bf16.mxu0 %v1410
        %2086 = vmatpush1.bf16.msra.mxu0 %v1409
        %2087 = vmatprep.subr.bf16.mxu0 %v1414
        %2088 = vmatpush1.bf16.msra.mxu0 %v1413
        %2089 = vmatprep.subr.bf16.mxu0 %v1418
        %2090 = vmatpush1.bf16.msra.mxu0 %v1417
        %2091 = vmatprep.subr.bf16.mxu0 %v1422
        %2092 = vmatpush1.bf16.msra.mxu0 %v1421
        %2093 = vmatprep.subr.bf16.mxu0 %v1426
        %2094 = vmatpush1.bf16.msra.mxu0 %v1425
        %2095 = vmatprep.subr.bf16.mxu0 %v1430
        %2096 = vmatpush1.bf16.msra.mxu0 %v1429
        %2097 = vmatprep.subr.bf16.mxu0 %v1434
        %2098 = vmatpush1.bf16.msra.mxu0 %v1433
        %2099 = vmatprep.subr.bf16.mxu0 %v1438
        %2100 = vmatpush1.bf16.msra.mxu0 %v1437
        %2101 = vmatprep.subr.bf16.mxu0 %v1442
        %2102 = vmatpush1.bf16.msra.mxu0 %v1441
        %2103 = vmatprep.subr.bf16.mxu0 %v1446
        %2104 = vmatpush1.bf16.msra.mxu0 %v1445
        %2105 = vmatprep.subr.bf16.mxu0 %v1450
        %2106 = vmatpush1.bf16.msra.mxu0 %v1449
        %2107 = vmatprep.subr.bf16.mxu0 %v1454
        %2108 = vmatpush1.bf16.msra.mxu0 %v1453
        %2109 = vmatprep.subr.bf16.mxu0 %v1458
        %2110 = vmatpush1.bf16.msra.mxu0 %v1457
        %2111 = vmatprep.mubr.bf16.mxu0 %v612
        %2112 = vmatmul.mubr.bf16.gmra.mrb[0].mxu0 %v611
        %v2113 = vpop.f32.mrb[0].mxu0
        %v2114 = vadd.f32 %v578, %v2113
        %v2115 = vpop.f32.mrb[0].mxu0
        %v2116 = vadd.f32 %v582, %v2115
        %v2117 = vpop.f32.mrb[0].mxu0
        %v2118 = vadd.f32 %v578, %v2117
        %v2119 = vpop.f32.mrb[0].mxu0
        %v2120 = vadd.f32 %v582, %v2119
        %2121 = vdwg.mxu0
        %2122 = vmatprep.subr.bf16.mxu0 %v1462
        %2123 = vmatpush1.bf16.msra.mxu0 %v1461
        %2124 = vmatprep.subr.bf16.mxu0 %v1466
        %2125 = vmatpush1.bf16.msra.mxu0 %v1465
        %2126 = vmatprep.subr.bf16.mxu0 %v1470
        %2127 = vmatpush1.bf16.msra.mxu0 %v1469
        %2128 = vmatprep.subr.bf16.mxu0 %v1474
        %2129 = vmatpush1.bf16.msra.mxu0 %v1473
        %2130 = vmatprep.subr.bf16.mxu0 %v1478
        %2131 = vmatpush1.bf16.msra.mxu0 %v1477
        %2132 = vmatprep.subr.bf16.mxu0 %v1482
        %2133 = vmatpush1.bf16.msra.mxu0 %v1481
        %2134 = vmatprep.subr.bf16.mxu0 %v1486
        %2135 = vmatpush1.bf16.msra.mxu0 %v1485
        %2136 = vmatprep.subr.bf16.mxu0 %v1490
        %2137 = vmatpush1.bf16.msra.mxu0 %v1489
        %2138 = vmatprep.subr.bf16.mxu0 %v1494
        %2139 = vmatpush1.bf16.msra.mxu0 %v1493
        %2140 = vmatprep.subr.bf16.mxu0 %v1498
        %2141 = vmatpush1.bf16.msra.mxu0 %v1497
        %2142 = vmatprep.subr.bf16.mxu0 %v1502
        %2143 = vmatpush1.bf16.msra.mxu0 %v1501
        %2144 = vmatprep.subr.bf16.mxu0 %v1506
        %2145 = vmatpush1.bf16.msra.mxu0 %v1505
        %2146 = vmatprep.subr.bf16.mxu0 %v1510
        %2147 = vmatpush1.bf16.msra.mxu0 %v1509
        %2148 = vmatprep.subr.bf16.mxu0 %v1514
        %2149 = vmatpush1.bf16.msra.mxu0 %v1513
        %2150 = vmatprep.subr.bf16.mxu0 %v1518
        %2151 = vmatpush1.bf16.msra.mxu0 %v1517
        %2152 = vmatprep.subr.bf16.mxu0 %v1522
        %2153 = vmatpush1.bf16.msra.mxu0 %v1521
        %2154 = vmatprep.mubr.bf16.mxu0 %v614
        %2155 = vmatmul.mubr.bf16.gmra.mrb[0].mxu0 %v613
        %v2156 = vpop.f32.mrb[0].mxu0
        %v2157 = vadd.f32 %v2114, %v2156
        %v2158 = vpop.f32.mrb[0].mxu0
        %v2159 = vadd.f32 %v2116, %v2158
        %v2160 = vpop.f32.mrb[0].mxu0
        %v2161 = vadd.f32 %v2118, %v2160
        %v2162 = vpop.f32.mrb[0].mxu0
        %v2163 = vadd.f32 %v2120, %v2162
        %2164 = vdwg.mxu0
        %2165 = vmatprep.subr.bf16.mxu0 %v1526
        %2166 = vmatpush1.bf16.msra.mxu0 %v1525
        %2167 = vmatprep.subr.bf16.mxu0 %v1530
        %2168 = vmatpush1.bf16.msra.mxu0 %v1529
        %2169 = vmatprep.subr.bf16.mxu0 %v1534
        %2170 = vmatpush1.bf16.msra.mxu0 %v1533
        %2171 = vmatprep.subr.bf16.mxu0 %v1538
        %2172 = vmatpush1.bf16.msra.mxu0 %v1537
        %2173 = vmatprep.subr.bf16.mxu0 %v1542
        %2174 = vmatpush1.bf16.msra.mxu0 %v1541
        %2175 = vmatprep.subr.bf16.mxu0 %v1546
        %2176 = vmatpush1.bf16.msra.mxu0 %v1545
        %2177 = vmatprep.subr.bf16.mxu0 %v1550
        %2178 = vmatpush1.bf16.msra.mxu0 %v1549
        %2179 = vmatprep.subr.bf16.mxu0 %v1554
        %2180 = vmatpush1.bf16.msra.mxu0 %v1553
        %2181 = vmatprep.subr.bf16.mxu0 %v1558
        %2182 = vmatpush1.bf16.msra.mxu0 %v1557
        %2183 = vmatprep.subr.bf16.mxu0 %v1562
        %2184 = vmatpush1.bf16.msra.mxu0 %v1561
        %2185 = vmatprep.subr.bf16.mxu0 %v1566
        %2186 = vmatpush1.bf16.msra.mxu0 %v1565
        %2187 = vmatprep.subr.bf16.mxu0 %v1570
        %2188 = vmatpush1.bf16.msra.mxu0 %v1569
        %2189 = vmatprep.subr.bf16.mxu0 %v1574
        %2190 = vmatpush1.bf16.msra.mxu0 %v1573
        %2191 = vmatprep.subr.bf16.mxu0 %v1578
        %2192 = vmatpush1.bf16.msra.mxu0 %v1577
        %2193 = vmatprep.subr.bf16.mxu0 %v1582
        %2194 = vmatpush1.bf16.msra.mxu0 %v1581
        %2195 = vmatprep.subr.bf16.mxu0 %v1586
        %2196 = vmatpush1.bf16.msra.mxu0 %v1585
        %2197 = vmatprep.mubr.bf16.mxu0 %v616
        %2198 = vmatmul.mubr.bf16.gmra.mrb[0].mxu0 %v615
        %v2199 = vpop.f32.mrb[0].mxu0
        %v2200 = vadd.f32 %v2157, %v2199
        %v2201 = vpop.f32.mrb[0].mxu0
        %v2202 = vadd.f32 %v2159, %v2201
        %v2203 = vpop.f32.mrb[0].mxu0
        %v2204 = vadd.f32 %v2161, %v2203
        %v2205 = vpop.f32.mrb[0].mxu0
        %v2206 = vadd.f32 %v2163, %v2205
        %2207 = vdwg.mxu0
        %2208 = vmatprep.subr.bf16.mxu0 %v1590
        %2209 = vmatpush1.bf16.msra.mxu0 %v1589
        %2210 = vmatprep.subr.bf16.mxu0 %v1594
        %2211 = vmatpush1.bf16.msra.mxu0 %v1593
        %2212 = vmatprep.subr.bf16.mxu0 %v1598
        %2213 = vmatpush1.bf16.msra.mxu0 %v1597
        %2214 = vmatprep.subr.bf16.mxu0 %v1602
        %2215 = vmatpush1.bf16.msra.mxu0 %v1601
        %2216 = vmatprep.subr.bf16.mxu0 %v1606
        %2217 = vmatpush1.bf16.msra.mxu0 %v1605
        %2218 = vmatprep.subr.bf16.mxu0 %v1610
        %2219 = vmatpush1.bf16.msra.mxu0 %v1609
        %2220 = vmatprep.subr.bf16.mxu0 %v1614
        %2221 = vmatpush1.bf16.msra.mxu0 %v1613
        %2222 = vmatprep.subr.bf16.mxu0 %v1618
        %2223 = vmatpush1.bf16.msra.mxu0 %v1617
        %2224 = vmatprep.subr.bf16.mxu0 %v1622
        %2225 = vmatpush1.bf16.msra.mxu0 %v1621
        %2226 = vmatprep.subr.bf16.mxu0 %v1626
        %2227 = vmatpush1.bf16.msra.mxu0 %v1625
        %2228 = vmatprep.subr.bf16.mxu0 %v1630
        %2229 = vmatpush1.bf16.msra.mxu0 %v1629
        %2230 = vmatprep.subr.bf16.mxu0 %v1634
        %2231 = vmatpush1.bf16.msra.mxu0 %v1633
        %2232 = vmatprep.subr.bf16.mxu0 %v1638
        %2233 = vmatpush1.bf16.msra.mxu0 %v1637
        %2234 = vmatprep.subr.bf16.mxu0 %v1642
        %2235 = vmatpush1.bf16.msra.mxu0 %v1641
        %2236 = vmatprep.subr.bf16.mxu0 %v1646
        %2237 = vmatpush1.bf16.msra.mxu0 %v1645
        %2238 = vmatprep.subr.bf16.mxu0 %v1650
        %2239 = vmatpush1.bf16.msra.mxu0 %v1649
        %2240 = vmatprep.mubr.bf16.mxu0 %v618
        %2241 = vmatmul.mubr.bf16.gmra.mrb[0].mxu0 %v617
        %v2242 = vpop.f32.mrb[0].mxu0
        %v2243 = vadd.f32 %v2200, %v2242
        %v2244 = vpop.f32.mrb[0].mxu0
        %v2245 = vadd.f32 %v2202, %v2244
        %v2246 = vpop.f32.mrb[0].mxu0
        %v2247 = vadd.f32 %v2204, %v2246
        %v2248 = vpop.f32.mrb[0].mxu0
        %v2249 = vadd.f32 %v2206, %v2248
        %2250 = vdwg.mxu0
        %v2251 = vmax.f32 %v2071, 0.0
        %v2252 = vmax.f32 %v2073, 0.0
        %v2253 = vmax.f32 %v2243, 0.0
        %v2254 = vmax.f32 %v2245, 0.0
        %v2255 = vmax.f32 %v2075, 0.0
        %v2256 = vmax.f32 %v2077, 0.0
        %v2257 = vmax.f32 %v2247, 0.0
        %v2258 = vmax.f32 %v2249, 0.0
        %v2259 = vpack.c.bf16 %v2255, %v2251
        %v2260 = vpack.c.bf16 %v2256, %v2252
        %v2261 = vpack.c.bf16 %v2257, %v2253
        %v2262 = vpack.c.bf16 %v2258, %v2254
        %v2263 = vld [vmem:[#allocation2] sm:$0xff]
        %v2264 = vld [vmem:[#allocation2 + $0x8] sm:$0xff]
        %v2265 = vld [vmem:[#allocation2 + $0x10] sm:$0xff]
        %v2266 = vld [vmem:[#allocation2 + $0x18] sm:$0xff]
        %v2267 = vld [vmem:[#allocation2 + $0x20] sm:$0xff]
        %v2268 = vld [vmem:[#allocation2 + $0x28] sm:$0xff]
        %v2269 = vld [vmem:[#allocation2 + $0x30] sm:$0xff]
        %v2270 = vld [vmem:[#allocation2 + $0x38] sm:$0xff]
        %v2271 = vld [vmem:[#allocation2 + $0x40] sm:$0xff]
        %v2272 = vld [vmem:[#allocation2 + $0x48] sm:$0xff]
        %v2273 = vld [vmem:[#allocation2 + $0x50] sm:$0xff]
        %v2274 = vld [vmem:[#allocation2 + $0x58] sm:$0xff]
        %v2275 = vld [vmem:[#allocation2 + $0x60] sm:$0xff]
        %v2276 = vld [vmem:[#allocation2 + $0x68] sm:$0xff]
        %v2277 = vld [vmem:[#allocation2 + $0x70] sm:$0xff]
        %v2278 = vld [vmem:[#allocation2 + $0x78] sm:$0xff]
        %v2279 = vld [vmem:[#allocation2 + $0x80] sm:$0xff]
        %v2280 = vld [vmem:[#allocation2 + $0x88] sm:$0xff]
        %v2281 = vld [vmem:[#allocation2 + $0x90] sm:$0xff]
        %v2282 = vld [vmem:[#allocation2 + $0x98] sm:$0xff]
        %v2283 = vld [vmem:[#allocation2 + $0xa0] sm:$0xff]
        %v2284 = vld [vmem:[#allocation2 + $0xa8] sm:$0xff]
        %v2285 = vld [vmem:[#allocation2 + $0xb0] sm:$0xff]
        %v2286 = vld [vmem:[#allocation2 + $0xb8] sm:$0xff]
        %v2287 = vld [vmem:[#allocation2 + $0xc0] sm:$0xff]
        %v2288 = vld [vmem:[#allocation2 + $0xc8] sm:$0xff]
        %v2289 = vld [vmem:[#allocation2 + $0xd0] sm:$0xff]
        %v2290 = vld [vmem:[#allocation2 + $0xd8] sm:$0xff]
        %v2291 = vld [vmem:[#allocation2 + $0xe0] sm:$0xff]
        %v2292 = vld [vmem:[#allocation2 + $0xe8] sm:$0xff]
        %v2293 = vld [vmem:[#allocation2 + $0xf0] sm:$0xff]
        %v2294 = vld [vmem:[#allocation2 + $0xf8] sm:$0xff]
        %v2295 = vld [vmem:[#allocation2 + $0x100] sm:$0xff]
        %v2296 = vld [vmem:[#allocation2 + $0x108] sm:$0xff]
        %v2297 = vld [vmem:[#allocation2 + $0x110] sm:$0xff]
        %v2298 = vld [vmem:[#allocation2 + $0x118] sm:$0xff]
        %v2299 = vld [vmem:[#allocation2 + $0x120] sm:$0xff]
        %v2300 = vld [vmem:[#allocation2 + $0x128] sm:$0xff]
        %v2301 = vld [vmem:[#allocation2 + $0x130] sm:$0xff]
        %v2302 = vld [vmem:[#allocation2 + $0x138] sm:$0xff]
        %v2303 = vld [vmem:[#allocation2 + $0x140] sm:$0xff]
        %v2304 = vld [vmem:[#allocation2 + $0x148] sm:$0xff]
        %v2305 = vld [vmem:[#allocation2 + $0x150] sm:$0xff]
        %v2306 = vld [vmem:[#allocation2 + $0x158] sm:$0xff]
        %v2307 = vld [vmem:[#allocation2 + $0x160] sm:$0xff]
        %v2308 = vld [vmem:[#allocation2 + $0x168] sm:$0xff]
        %v2309 = vld [vmem:[#allocation2 + $0x170] sm:$0xff]
        %v2310 = vld [vmem:[#allocation2 + $0x178] sm:$0xff]
        %v2311 = vld [vmem:[#allocation2 + $0x180] sm:$0xff]
        %v2312 = vld [vmem:[#allocation2 + $0x188] sm:$0xff]
        %v2313 = vld [vmem:[#allocation2 + $0x190] sm:$0xff]
        %v2314 = vld [vmem:[#allocation2 + $0x198] sm:$0xff]
        %v2315 = vld [vmem:[#allocation2 + $0x1a0] sm:$0xff]
        %v2316 = vld [vmem:[#allocation2 + $0x1a8] sm:$0xff]
        %v2317 = vld [vmem:[#allocation2 + $0x1b0] sm:$0xff]
        %v2318 = vld [vmem:[#allocation2 + $0x1b8] sm:$0xff]
        %v2319 = vld [vmem:[#allocation2 + $0x1c0] sm:$0xff]
        %v2320 = vld [vmem:[#allocation2 + $0x1c8] sm:$0xff]
        %v2321 = vld [vmem:[#allocation2 + $0x1d0] sm:$0xff]
        %v2322 = vld [vmem:[#allocation2 + $0x1d8] sm:$0xff]
        %v2323 = vld [vmem:[#allocation2 + $0x1e0] sm:$0xff]
        %v2324 = vld [vmem:[#allocation2 + $0x1e8] sm:$0xff]
        %v2325 = vld [vmem:[#allocation2 + $0x1f0] sm:$0xff]
        %v2326 = vld [vmem:[#allocation2 + $0x1f8] sm:$0xff]
        %v2327 = vld [vmem:[%s4] sm:$0x3]
        %v2329 = vlaneseq
        %v2330 = vshrl.u32 %v2329, 7
        %v2331 = vsub.s32 0, %v2330
        %v2332 = vrot.slane %v2327, %v2331
        %v2333 = vlaneseq
        %v2334 = vshrl.u32 %v2333, 7
        %v2335 = vsub.s32 1, %v2334
        %v2336 = vrot.slane %v2327, %v2335
        %v2403 = vunpack.c.l.b16 %v2263
        %v2404 = vunpack.c.h.b16 %v2263
        %v2405 = vunpack.c.l.b16 %v2264
        %v2406 = vunpack.c.h.b16 %v2264
        %v2407 = vunpack.c.l.b16 %v2265
        %v2408 = vunpack.c.h.b16 %v2265
        %v2409 = vunpack.c.l.b16 %v2266
        %v2410 = vunpack.c.h.b16 %v2266
        %v2411 = vunpack.c.l.b16 %v2267
        %v2412 = vunpack.c.h.b16 %v2267
        %v2413 = vunpack.c.l.b16 %v2268
        %v2414 = vunpack.c.h.b16 %v2268
        %v2415 = vunpack.c.l.b16 %v2269
        %v2416 = vunpack.c.h.b16 %v2269
        %v2417 = vunpack.c.l.b16 %v2270
        %v2418 = vunpack.c.h.b16 %v2270
        %v2419 = vunpack.c.l.b16 %v2271
        %v2420 = vunpack.c.h.b16 %v2271
        %v2421 = vunpack.c.l.b16 %v2272
        %v2422 = vunpack.c.h.b16 %v2272
        %v2423 = vunpack.c.l.b16 %v2273
        %v2424 = vunpack.c.h.b16 %v2273
        %v2425 = vunpack.c.l.b16 %v2274
        %v2426 = vunpack.c.h.b16 %v2274
        %v2427 = vunpack.c.l.b16 %v2275
        %v2428 = vunpack.c.h.b16 %v2275
        %v2429 = vunpack.c.l.b16 %v2276
        %v2430 = vunpack.c.h.b16 %v2276
        %v2431 = vunpack.c.l.b16 %v2277
        %v2432 = vunpack.c.h.b16 %v2277
        %v2433 = vunpack.c.l.b16 %v2278
        %v2434 = vunpack.c.h.b16 %v2278
        %v2435 = vunpack.c.l.b16 %v2279
        %v2436 = vunpack.c.h.b16 %v2279
        %v2437 = vunpack.c.l.b16 %v2280
        %v2438 = vunpack.c.h.b16 %v2280
        %v2439 = vunpack.c.l.b16 %v2281
        %v2440 = vunpack.c.h.b16 %v2281
        %v2441 = vunpack.c.l.b16 %v2282
        %v2442 = vunpack.c.h.b16 %v2282
        %v2443 = vunpack.c.l.b16 %v2283
        %v2444 = vunpack.c.h.b16 %v2283
        %v2445 = vunpack.c.l.b16 %v2284
        %v2446 = vunpack.c.h.b16 %v2284
        %v2447 = vunpack.c.l.b16 %v2285
        %v2448 = vunpack.c.h.b16 %v2285
        %v2449 = vunpack.c.l.b16 %v2286
        %v2450 = vunpack.c.h.b16 %v2286
        %v2451 = vunpack.c.l.b16 %v2287
        %v2452 = vunpack.c.h.b16 %v2287
        %v2453 = vunpack.c.l.b16 %v2288
        %v2454 = vunpack.c.h.b16 %v2288
        %v2455 = vunpack.c.l.b16 %v2289
        %v2456 = vunpack.c.h.b16 %v2289
        %v2457 = vunpack.c.l.b16 %v2290
        %v2458 = vunpack.c.h.b16 %v2290
        %v2459 = vunpack.c.l.b16 %v2291
        %v2460 = vunpack.c.h.b16 %v2291
        %v2461 = vunpack.c.l.b16 %v2292
        %v2462 = vunpack.c.h.b16 %v2292
        %v2463 = vunpack.c.l.b16 %v2293
        %v2464 = vunpack.c.h.b16 %v2293
        %v2465 = vunpack.c.l.b16 %v2294
        %v2466 = vunpack.c.h.b16 %v2294
        %v2467 = vunpack.c.l.b16 %v2295
        %v2468 = vunpack.c.h.b16 %v2295
        %v2469 = vunpack.c.l.b16 %v2296
        %v2470 = vunpack.c.h.b16 %v2296
        %v2471 = vunpack.c.l.b16 %v2297
        %v2472 = vunpack.c.h.b16 %v2297
        %v2473 = vunpack.c.l.b16 %v2298
        %v2474 = vunpack.c.h.b16 %v2298
        %v2475 = vunpack.c.l.b16 %v2299
        %v2476 = vunpack.c.h.b16 %v2299
        %v2477 = vunpack.c.l.b16 %v2300
        %v2478 = vunpack.c.h.b16 %v2300
        %v2479 = vunpack.c.l.b16 %v2301
        %v2480 = vunpack.c.h.b16 %v2301
        %v2481 = vunpack.c.l.b16 %v2302
        %v2482 = vunpack.c.h.b16 %v2302
        %v2483 = vunpack.c.l.b16 %v2303
        %v2484 = vunpack.c.h.b16 %v2303
        %v2485 = vunpack.c.l.b16 %v2304
        %v2486 = vunpack.c.h.b16 %v2304
        %v2487 = vunpack.c.l.b16 %v2305
        %v2488 = vunpack.c.h.b16 %v2305
        %v2489 = vunpack.c.l.b16 %v2306
        %v2490 = vunpack.c.h.b16 %v2306
        %v2491 = vunpack.c.l.b16 %v2307
        %v2492 = vunpack.c.h.b16 %v2307
        %v2493 = vunpack.c.l.b16 %v2308
        %v2494 = vunpack.c.h.b16 %v2308
        %v2495 = vunpack.c.l.b16 %v2309
        %v2496 = vunpack.c.h.b16 %v2309
        %v2497 = vunpack.c.l.b16 %v2310
        %v2498 = vunpack.c.h.b16 %v2310
        %v2499 = vunpack.c.l.b16 %v2311
        %v2500 = vunpack.c.h.b16 %v2311
        %v2501 = vunpack.c.l.b16 %v2312
        %v2502 = vunpack.c.h.b16 %v2312
        %v2503 = vunpack.c.l.b16 %v2313
        %v2504 = vunpack.c.h.b16 %v2313
        %v2505 = vunpack.c.l.b16 %v2314
        %v2506 = vunpack.c.h.b16 %v2314
        %v2507 = vunpack.c.l.b16 %v2315
        %v2508 = vunpack.c.h.b16 %v2315
        %v2509 = vunpack.c.l.b16 %v2316
        %v2510 = vunpack.c.h.b16 %v2316
        %v2511 = vunpack.c.l.b16 %v2317
        %v2512 = vunpack.c.h.b16 %v2317
        %v2513 = vunpack.c.l.b16 %v2318
        %v2514 = vunpack.c.h.b16 %v2318
        %v2515 = vunpack.c.l.b16 %v2319
        %v2516 = vunpack.c.h.b16 %v2319
        %v2517 = vunpack.c.l.b16 %v2320
        %v2518 = vunpack.c.h.b16 %v2320
        %v2519 = vunpack.c.l.b16 %v2321
        %v2520 = vunpack.c.h.b16 %v2321
        %v2521 = vunpack.c.l.b16 %v2322
        %v2522 = vunpack.c.h.b16 %v2322
        %v2523 = vunpack.c.l.b16 %v2323
        %v2524 = vunpack.c.h.b16 %v2323
        %v2525 = vunpack.c.l.b16 %v2324
        %v2526 = vunpack.c.h.b16 %v2324
        %v2527 = vunpack.c.l.b16 %v2325
        %v2528 = vunpack.c.h.b16 %v2325
        %v2529 = vunpack.c.l.b16 %v2326
        %v2530 = vunpack.c.h.b16 %v2326
        %v2531 = vpack.c.b16 %v2405, %v2403
        %v2532 = vpack.c.b16 %v2406, %v2404
        %v2533 = vpack.c.b16 %v2409, %v2407
        %v2534 = vpack.c.b16 %v2410, %v2408
        %v2535 = vpack.c.b16 %v2413, %v2411
        %v2536 = vpack.c.b16 %v2414, %v2412
        %v2537 = vpack.c.b16 %v2417, %v2415
        %v2538 = vpack.c.b16 %v2418, %v2416
        %v2539 = vpack.c.b16 %v2421, %v2419
        %v2540 = vpack.c.b16 %v2422, %v2420
        %v2541 = vpack.c.b16 %v2425, %v2423
        %v2542 = vpack.c.b16 %v2426, %v2424
        %v2543 = vpack.c.b16 %v2429, %v2427
        %v2544 = vpack.c.b16 %v2430, %v2428
        %v2545 = vpack.c.b16 %v2433, %v2431
        %v2546 = vpack.c.b16 %v2434, %v2432
        %v2547 = vpack.c.b16 %v2437, %v2435
        %v2548 = vpack.c.b16 %v2438, %v2436
        %v2549 = vpack.c.b16 %v2441, %v2439
        %v2550 = vpack.c.b16 %v2442, %v2440
        %v2551 = vpack.c.b16 %v2445, %v2443
        %v2552 = vpack.c.b16 %v2446, %v2444
        %v2553 = vpack.c.b16 %v2449, %v2447
        %v2554 = vpack.c.b16 %v2450, %v2448
        %v2555 = vpack.c.b16 %v2453, %v2451
        %v2556 = vpack.c.b16 %v2454, %v2452
        %v2557 = vpack.c.b16 %v2457, %v2455
        %v2558 = vpack.c.b16 %v2458, %v2456
        %v2559 = vpack.c.b16 %v2461, %v2459
        %v2560 = vpack.c.b16 %v2462, %v2460
        %v2561 = vpack.c.b16 %v2465, %v2463
        %v2562 = vpack.c.b16 %v2466, %v2464
        %v2563 = vpack.c.b16 %v2469, %v2467
        %v2564 = vpack.c.b16 %v2470, %v2468
        %v2565 = vpack.c.b16 %v2473, %v2471
        %v2566 = vpack.c.b16 %v2474, %v2472
        %v2567 = vpack.c.b16 %v2477, %v2475
        %v2568 = vpack.c.b16 %v2478, %v2476
        %v2569 = vpack.c.b16 %v2481, %v2479
        %v2570 = vpack.c.b16 %v2482, %v2480
        %v2571 = vpack.c.b16 %v2485, %v2483
        %v2572 = vpack.c.b16 %v2486, %v2484
        %v2573 = vpack.c.b16 %v2489, %v2487
        %v2574 = vpack.c.b16 %v2490, %v2488
        %v2575 = vpack.c.b16 %v2493, %v2491
        %v2576 = vpack.c.b16 %v2494, %v2492
        %v2577 = vpack.c.b16 %v2497, %v2495
        %v2578 = vpack.c.b16 %v2498, %v2496
        %v2579 = vpack.c.b16 %v2501, %v2499
        %v2580 = vpack.c.b16 %v2502, %v2500
        %v2581 = vpack.c.b16 %v2505, %v2503
        %v2582 = vpack.c.b16 %v2506, %v2504
        %v2583 = vpack.c.b16 %v2509, %v2507
        %v2584 = vpack.c.b16 %v2510, %v2508
        %v2585 = vpack.c.b16 %v2513, %v2511
        %v2586 = vpack.c.b16 %v2514, %v2512
        %v2587 = vpack.c.b16 %v2517, %v2515
        %v2588 = vpack.c.b16 %v2518, %v2516
        %v2589 = vpack.c.b16 %v2521, %v2519
        %v2590 = vpack.c.b16 %v2522, %v2520
        %v2591 = vpack.c.b16 %v2525, %v2523
        %v2592 = vpack.c.b16 %v2526, %v2524
        %v2593 = vpack.c.b16 %v2529, %v2527
        %v2594 = vpack.c.b16 %v2530, %v2528
        %2659 = vmatprep.subr.bf16.mxu0 %v2532
        %2660 = vmatpush1.bf16.msra.mxu0 %v2531
        %2661 = vmatprep.subr.bf16.mxu0 %v2534
        %2662 = vmatpush1.bf16.msra.mxu0 %v2533
        %2663 = vmatprep.subr.bf16.mxu0 %v2536
        %2664 = vmatpush1.bf16.msra.mxu0 %v2535
        %2665 = vmatprep.subr.bf16.mxu0 %v2538
        %2666 = vmatpush1.bf16.msra.mxu0 %v2537
        %2667 = vmatprep.subr.bf16.mxu0 %v2540
        %2668 = vmatpush1.bf16.msra.mxu0 %v2539
        %2669 = vmatprep.subr.bf16.mxu0 %v2542
        %2670 = vmatpush1.bf16.msra.mxu0 %v2541
        %2671 = vmatprep.subr.bf16.mxu0 %v2544
        %2672 = vmatpush1.bf16.msra.mxu0 %v2543
        %2673 = vmatprep.subr.bf16.mxu0 %v2546
        %2674 = vmatpush1.bf16.msra.mxu0 %v2545
        %2675 = vmatprep.subr.bf16.mxu0 %v2548
        %2676 = vmatpush1.bf16.msra.mxu0 %v2547
        %2677 = vmatprep.subr.bf16.mxu0 %v2550
        %2678 = vmatpush1.bf16.msra.mxu0 %v2549
        %2679 = vmatprep.subr.bf16.mxu0 %v2552
        %2680 = vmatpush1.bf16.msra.mxu0 %v2551
        %2681 = vmatprep.subr.bf16.mxu0 %v2554
        %2682 = vmatpush1.bf16.msra.mxu0 %v2553
        %2683 = vmatprep.subr.bf16.mxu0 %v2556
        %2684 = vmatpush1.bf16.msra.mxu0 %v2555
        %2685 = vmatprep.subr.bf16.mxu0 %v2558
        %2686 = vmatpush1.bf16.msra.mxu0 %v2557
        %2687 = vmatprep.subr.bf16.mxu0 %v2560
        %2688 = vmatpush1.bf16.msra.mxu0 %v2559
        %2689 = vmatprep.subr.bf16.mxu0 %v2562
        %2690 = vmatpush1.bf16.msra.mxu0 %v2561
        %2691 = vmatprep.mubr.bf16.mxu0 %v2260
        %2692 = vmatmul.mubr.bf16.gmra.mrb[0].mxu0 %v2259
        %v2693 = vpop.f32.mrb[0].mxu0
        %v2694 = vadd.f32 %v2332, %v2693
        %v2695 = vpop.f32.mrb[0].mxu0
        %v2696 = vadd.f32 %v2336, %v2695
        %v2697 = vpop.f32.mrb[0].mxu0
        %v2698 = vadd.f32 %v2332, %v2697
        %v2699 = vpop.f32.mrb[0].mxu0
        %v2700 = vadd.f32 %v2336, %v2699
        %2701 = vdwg.mxu0
        %2702 = vmatprep.subr.bf16.mxu0 %v2564
        %2703 = vmatpush1.bf16.msra.mxu0 %v2563
        %2704 = vmatprep.subr.bf16.mxu0 %v2566
        %2705 = vmatpush1.bf16.msra.mxu0 %v2565
        %2706 = vmatprep.subr.bf16.mxu0 %v2568
        %2707 = vmatpush1.bf16.msra.mxu0 %v2567
        %2708 = vmatprep.subr.bf16.mxu0 %v2570
        %2709 = vmatpush1.bf16.msra.mxu0 %v2569
        %2710 = vmatprep.subr.bf16.mxu0 %v2572
        %2711 = vmatpush1.bf16.msra.mxu0 %v2571
        %2712 = vmatprep.subr.bf16.mxu0 %v2574
        %2713 = vmatpush1.bf16.msra.mxu0 %v2573
        %2714 = vmatprep.subr.bf16.mxu0 %v2576
        %2715 = vmatpush1.bf16.msra.mxu0 %v2575
        %2716 = vmatprep.subr.bf16.mxu0 %v2578
        %2717 = vmatpush1.bf16.msra.mxu0 %v2577
        %2718 = vmatprep.subr.bf16.mxu0 %v2580
        %2719 = vmatpush1.bf16.msra.mxu0 %v2579
        %2720 = vmatprep.subr.bf16.mxu0 %v2582
        %2721 = vmatpush1.bf16.msra.mxu0 %v2581
        %2722 = vmatprep.subr.bf16.mxu0 %v2584
        %2723 = vmatpush1.bf16.msra.mxu0 %v2583
        %2724 = vmatprep.subr.bf16.mxu0 %v2586
        %2725 = vmatpush1.bf16.msra.mxu0 %v2585
        %2726 = vmatprep.subr.bf16.mxu0 %v2588
        %2727 = vmatpush1.bf16.msra.mxu0 %v2587
        %2728 = vmatprep.subr.bf16.mxu0 %v2590
        %2729 = vmatpush1.bf16.msra.mxu0 %v2589
        %2730 = vmatprep.subr.bf16.mxu0 %v2592
        %2731 = vmatpush1.bf16.msra.mxu0 %v2591
        %2732 = vmatprep.subr.bf16.mxu0 %v2594
        %2733 = vmatpush1.bf16.msra.mxu0 %v2593
        %2734 = vmatprep.mubr.bf16.mxu0 %v2262
        %2735 = vmatmul.mubr.bf16.gmra.mrb[0].mxu0 %v2261
        %v2736 = vpop.f32.mrb[0].mxu0
        %v2737 = vadd.f32 %v2694, %v2736
        %v2738 = vpop.f32.mrb[0].mxu0
        %v2739 = vadd.f32 %v2696, %v2738
        %v2740 = vpop.f32.mrb[0].mxu0
        %v2741 = vadd.f32 %v2698, %v2740
        %v2742 = vpop.f32.mrb[0].mxu0
        %v2743 = vadd.f32 %v2700, %v2742
        %2744 = vdwg.mxu0
        %v2745 = vmax.f32 %v2737, 0.0
        %v2746 = vmax.f32 %v2739, 0.0
        %v2747 = vmax.f32 %v2741, 0.0
        %v2748 = vmax.f32 %v2743, 0.0
        %v2749 = vpack.c.bf16 %v2747, %v2745
        %v2750 = vpack.c.bf16 %v2748, %v2746
        %v2751 = vld [vmem:[%s5] sm:$0xf]
        %v2752 = vld [vmem:[%s5 + $0x4] sm:$0xf]
        %v2753 = vld [vmem:[%s5 + $0x8] sm:$0xf]
        %v2754 = vld [vmem:[%s5 + $0xc] sm:$0xf]
        %v2755 = vld [vmem:[%s5 + $0x10] sm:$0xf]
        %v2756 = vld [vmem:[%s5 + $0x14] sm:$0xf]
        %v2757 = vld [vmem:[%s5 + $0x18] sm:$0xf]
        %v2758 = vld [vmem:[%s5 + $0x1c] sm:$0xf]
        %v2759 = vld [vmem:[%s5 + $0x20] sm:$0xf]
        %v2760 = vld [vmem:[%s5 + $0x24] sm:$0xf]
        %v2761 = vld [vmem:[%s5 + $0x28] sm:$0xf]
        %v2762 = vld [vmem:[%s5 + $0x2c] sm:$0xf]
        %v2763 = vld [vmem:[%s5 + $0x30] sm:$0xf]
        %v2764 = vld [vmem:[%s5 + $0x34] sm:$0xf]
        %v2765 = vld [vmem:[%s5 + $0x38] sm:$0xf]
        %v2766 = vld [vmem:[%s5 + $0x3c] sm:$0xf]
        %v2767 = vld [vmem:[%s5 + $0x40] sm:$0xf]
        %v2768 = vld [vmem:[%s5 + $0x44] sm:$0xf]
        %v2769 = vld [vmem:[%s5 + $0x48] sm:$0xf]
        %v2770 = vld [vmem:[%s5 + $0x4c] sm:$0xf]
        %v2771 = vld [vmem:[%s5 + $0x50] sm:$0xf]
        %v2772 = vld [vmem:[%s5 + $0x54] sm:$0xf]
        %v2773 = vld [vmem:[%s5 + $0x58] sm:$0xf]
        %v2774 = vld [vmem:[%s5 + $0x5c] sm:$0xf]
        %v2775 = vld [vmem:[%s5 + $0x60] sm:$0xf]
        %v2776 = vld [vmem:[%s5 + $0x64] sm:$0xf]
        %v2777 = vld [vmem:[%s5 + $0x68] sm:$0xf]
        %v2778 = vld [vmem:[%s5 + $0x6c] sm:$0xf]
        %v2779 = vld [vmem:[%s5 + $0x70] sm:$0xf]
        %v2780 = vld [vmem:[%s5 + $0x74] sm:$0xf]
        %v2781 = vld [vmem:[%s5 + $0x78] sm:$0xf]
        %v2782 = vld [vmem:[%s5 + $0x7c] sm:$0xf]
        %v2783 = vld [vmem:[%s6] sm:$0x1]
        %v2785 = vlaneseq
        %v2786 = vshrl.u32 %v2785, 7
        %v2787 = vsub.s32 0, %v2786
        %v2788 = vrot.slane %v2783, %v2787
        %v2822 = vunpack.c.l.b16 %v2751
        %v2823 = vunpack.c.l.b16 %v2752
        %v2824 = vunpack.c.l.b16 %v2753
        %v2825 = vunpack.c.l.b16 %v2754
        %v2826 = vunpack.c.l.b16 %v2755
        %v2827 = vunpack.c.l.b16 %v2756
        %v2828 = vunpack.c.l.b16 %v2757
        %v2829 = vunpack.c.l.b16 %v2758
        %v2830 = vunpack.c.l.b16 %v2759
        %v2831 = vunpack.c.l.b16 %v2760
        %v2832 = vunpack.c.l.b16 %v2761
        %v2833 = vunpack.c.l.b16 %v2762
        %v2834 = vunpack.c.l.b16 %v2763
        %v2835 = vunpack.c.l.b16 %v2764
        %v2836 = vunpack.c.l.b16 %v2765
        %v2837 = vunpack.c.l.b16 %v2766
        %v2838 = vunpack.c.l.b16 %v2767
        %v2839 = vunpack.c.l.b16 %v2768
        %v2840 = vunpack.c.l.b16 %v2769
        %v2841 = vunpack.c.l.b16 %v2770
        %v2842 = vunpack.c.l.b16 %v2771
        %v2843 = vunpack.c.l.b16 %v2772
        %v2844 = vunpack.c.l.b16 %v2773
        %v2845 = vunpack.c.l.b16 %v2774
        %v2846 = vunpack.c.l.b16 %v2775
        %v2847 = vunpack.c.l.b16 %v2776
        %v2848 = vunpack.c.l.b16 %v2777
        %v2849 = vunpack.c.l.b16 %v2778
        %v2850 = vunpack.c.l.b16 %v2779
        %v2851 = vunpack.c.l.b16 %v2780
        %v2852 = vunpack.c.l.b16 %v2781
        %v2853 = vunpack.c.l.b16 %v2782
        %v2854 = vpack.c.b16 %v2823, %v2822
        %v2855 = vpack.c.b16 %v2825, %v2824
        %v2856 = vpack.c.b16 %v2827, %v2826
        %v2857 = vpack.c.b16 %v2829, %v2828
        %v2858 = vpack.c.b16 %v2831, %v2830
        %v2859 = vpack.c.b16 %v2833, %v2832
        %v2860 = vpack.c.b16 %v2835, %v2834
        %v2861 = vpack.c.b16 %v2837, %v2836
        %v2862 = vpack.c.b16 %v2839, %v2838
        %v2863 = vpack.c.b16 %v2841, %v2840
        %v2864 = vpack.c.b16 %v2843, %v2842
        %v2865 = vpack.c.b16 %v2845, %v2844
        %v2866 = vpack.c.b16 %v2847, %v2846
        %v2867 = vpack.c.b16 %v2849, %v2848
        %v2868 = vpack.c.b16 %v2851, %v2850
        %v2869 = vpack.c.b16 %v2853, %v2852
        %2886 = vmatprep.subr.bf16.mxu0 0
        %2887 = vmatpush1.bf16.msra.mxu0 %v2854
        %2888 = vmatprep.subr.bf16.mxu0 0
        %2889 = vmatpush1.bf16.msra.mxu0 %v2855
        %2890 = vmatprep.subr.bf16.mxu0 0
        %2891 = vmatpush1.bf16.msra.mxu0 %v2856
        %2892 = vmatprep.subr.bf16.mxu0 0
        %2893 = vmatpush1.bf16.msra.mxu0 %v2857
        %2894 = vmatprep.subr.bf16.mxu0 0
        %2895 = vmatpush1.bf16.msra.mxu0 %v2858
        %2896 = vmatprep.subr.bf16.mxu0 0
        %2897 = vmatpush1.bf16.msra.mxu0 %v2859
        %2898 = vmatprep.subr.bf16.mxu0 0
        %2899 = vmatpush1.bf16.msra.mxu0 %v2860
        %2900 = vmatprep.subr.bf16.mxu0 0
        %2901 = vmatpush1.bf16.msra.mxu0 %v2861
        %2902 = vmatprep.subr.bf16.mxu0 0
        %2903 = vmatpush1.bf16.msra.mxu0 %v2862
        %2904 = vmatprep.subr.bf16.mxu0 0
        %2905 = vmatpush1.bf16.msra.mxu0 %v2863
        %2906 = vmatprep.subr.bf16.mxu0 0
        %2907 = vmatpush1.bf16.msra.mxu0 %v2864
        %2908 = vmatprep.subr.bf16.mxu0 0
        %2909 = vmatpush1.bf16.msra.mxu0 %v2865
        %2910 = vmatprep.subr.bf16.mxu0 0
        %2911 = vmatpush1.bf16.msra.mxu0 %v2866
        %2912 = vmatprep.subr.bf16.mxu0 0
        %2913 = vmatpush1.bf16.msra.mxu0 %v2867
        %2914 = vmatprep.subr.bf16.mxu0 0
        %2915 = vmatpush1.bf16.msra.mxu0 %v2868
        %2916 = vmatprep.subr.bf16.mxu0 0
        %2917 = vmatpush1.bf16.msra.mxu0 %v2869
        %2918 = vmatprep.mubr.bf16.mxu0 %v2750
        %2919 = vmatmul.mubr.bf16.gmra.mrb[0].mxu0 %v2749
        %v2920 = vpop.f32.mrb[0].mxu0
        %v2921 = vadd.f32 %v2788, %v2920
        %v2922 = vpop.f32.mrb[0].mxu0
        %v2923 = vpop.f32.mrb[0].mxu0
        %v2924 = vadd.f32 %v2788, %v2923
        %v2925 = vpop.f32.mrb[0].mxu0
        %2926 = vdwg.mxu0
        %v2927 = vld [vmem:[%s292 + $0x20] sm:$0xff]
        %v2928 = vld [vmem:[%s292 + $0x28] sm:$0xff]
        %v2929 = vld [vmem:[%s292 + $0x30] sm:$0xff]
        %v2930 = vld [vmem:[%s292 + $0x38] sm:$0xff]
        %v2931 = vld [vmem:[%s292 + $0x60] sm:$0xff]
        %v2932 = vld [vmem:[%s292 + $0x68] sm:$0xff]
        %v2933 = vld [vmem:[%s292 + $0x70] sm:$0xff]
        %v2934 = vld [vmem:[%s292 + $0x78] sm:$0xff]
        %v2943 = vunpack.c.l.b16 %v2927
        %v2944 = vunpack.c.h.b16 %v2927
        %v2945 = vunpack.c.l.b16 %v2928
        %v2946 = vunpack.c.h.b16 %v2928
        %v2947 = vunpack.c.l.b16 %v2929
        %v2948 = vunpack.c.h.b16 %v2929
        %v2949 = vunpack.c.l.b16 %v2930
        %v2950 = vunpack.c.h.b16 %v2930
        %v2951 = vunpack.c.l.b16 %v2931
        %v2952 = vunpack.c.h.b16 %v2931
        %v2953 = vunpack.c.l.b16 %v2932
        %v2954 = vunpack.c.h.b16 %v2932
        %v2955 = vunpack.c.l.b16 %v2933
        %v2956 = vunpack.c.h.b16 %v2933
        %v2957 = vunpack.c.l.b16 %v2934
        %v2958 = vunpack.c.h.b16 %v2934
        %v2959 = vpack.c.b16 %v2951, %v2943
        %v2960 = vpack.c.b16 %v2952, %v2944
        %v2961 = vpack.c.b16 %v2953, %v2945
        %v2962 = vpack.c.b16 %v2954, %v2946
        %v2963 = vpack.c.b16 %v2955, %v2947
        %v2964 = vpack.c.b16 %v2956, %v2948
        %v2965 = vpack.c.b16 %v2957, %v2949
        %v2966 = vpack.c.b16 %v2958, %v2950
        %2975 = vmatprep.subr.bf16.mxu0 %v1396
        %2976 = vmatpush1.bf16.msra.mxu0 %v1395
        %2977 = vmatprep.subr.bf16.mxu0 %v1400
        %2978 = vmatpush1.bf16.msra.mxu0 %v1399
        %2979 = vmatprep.subr.bf16.mxu0 %v1404
        %2980 = vmatpush1.bf16.msra.mxu0 %v1403
        %2981 = vmatprep.subr.bf16.mxu0 %v1408
        %2982 = vmatpush1.bf16.msra.mxu0 %v1407
        %2983 = vmatprep.subr.bf16.mxu0 %v1412
        %2984 = vmatpush1.bf16.msra.mxu0 %v1411
        %2985 = vmatprep.subr.bf16.mxu0 %v1416
        %2986 = vmatpush1.bf16.msra.mxu0 %v1415
        %2987 = vmatprep.subr.bf16.mxu0 %v1420
        %2988 = vmatpush1.bf16.msra.mxu0 %v1419
        %2989 = vmatprep.subr.bf16.mxu0 %v1424
        %2990 = vmatpush1.bf16.msra.mxu0 %v1423
        %2991 = vmatprep.subr.bf16.mxu0 %v1428
        %2992 = vmatpush1.bf16.msra.mxu0 %v1427
        %2993 = vmatprep.subr.bf16.mxu0 %v1432
        %2994 = vmatpush1.bf16.msra.mxu0 %v1431
        %2995 = vmatprep.subr.bf16.mxu0 %v1436
        %2996 = vmatpush1.bf16.msra.mxu0 %v1435
        %2997 = vmatprep.subr.bf16.mxu0 %v1440
        %2998 = vmatpush1.bf16.msra.mxu0 %v1439
        %2999 = vmatprep.subr.bf16.mxu0 %v1444
        %3000 = vmatpush1.bf16.msra.mxu0 %v1443
        %3001 = vmatprep.subr.bf16.mxu0 %v1448
        %3002 = vmatpush1.bf16.msra.mxu0 %v1447
        %3003 = vmatprep.subr.bf16.mxu0 %v1452
        %3004 = vmatpush1.bf16.msra.mxu0 %v1451
        %3005 = vmatprep.subr.bf16.mxu0 %v1456
        %3006 = vmatpush1.bf16.msra.mxu0 %v1455
        %3007 = vmatprep.mubr.bf16.mxu0 %v2960
        %3008 = vmatmul.mubr.bf16.gmra.mrb[0].mxu0 %v2959
        %v3009 = vpop.f32.mrb[0].mxu0
        %v3010 = vadd.f32 %v570, %v3009
        %v3011 = vpop.f32.mrb[0].mxu0
        %v3012 = vadd.f32 %v574, %v3011
        %v3013 = vpop.f32.mrb[0].mxu0
        %v3014 = vadd.f32 %v570, %v3013
        %v3015 = vpop.f32.mrb[0].mxu0
        %v3016 = vadd.f32 %v574, %v3015
        %3017 = vdwg.mxu0
        %3018 = vmatprep.subr.bf16.mxu0 %v1460
        %3019 = vmatpush1.bf16.msra.mxu0 %v1459
        %3020 = vmatprep.subr.bf16.mxu0 %v1464
        %3021 = vmatpush1.bf16.msra.mxu0 %v1463
        %3022 = vmatprep.subr.bf16.mxu0 %v1468
        %3023 = vmatpush1.bf16.msra.mxu0 %v1467
        %3024 = vmatprep.subr.bf16.mxu0 %v1472
        %3025 = vmatpush1.bf16.msra.mxu0 %v1471
        %3026 = vmatprep.subr.bf16.mxu0 %v1476
        %3027 = vmatpush1.bf16.msra.mxu0 %v1475
        %3028 = vmatprep.subr.bf16.mxu0 %v1480
        %3029 = vmatpush1.bf16.msra.mxu0 %v1479
        %3030 = vmatprep.subr.bf16.mxu0 %v1484
        %3031 = vmatpush1.bf16.msra.mxu0 %v1483
        %3032 = vmatprep.subr.bf16.mxu0 %v1488
        %3033 = vmatpush1.bf16.msra.mxu0 %v1487
        %3034 = vmatprep.subr.bf16.mxu0 %v1492
        %3035 = vmatpush1.bf16.msra.mxu0 %v1491
        %3036 = vmatprep.subr.bf16.mxu0 %v1496
        %3037 = vmatpush1.bf16.msra.mxu0 %v1495
        %3038 = vmatprep.subr.bf16.mxu0 %v1500
        %3039 = vmatpush1.bf16.msra.mxu0 %v1499
        %3040 = vmatprep.subr.bf16.mxu0 %v1504
        %3041 = vmatpush1.bf16.msra.mxu0 %v1503
        %3042 = vmatprep.subr.bf16.mxu0 %v1508
        %3043 = vmatpush1.bf16.msra.mxu0 %v1507
        %3044 = vmatprep.subr.bf16.mxu0 %v1512
        %3045 = vmatpush1.bf16.msra.mxu0 %v1511
        %3046 = vmatprep.subr.bf16.mxu0 %v1516
        %3047 = vmatpush1.bf16.msra.mxu0 %v1515
        %3048 = vmatprep.subr.bf16.mxu0 %v1520
        %3049 = vmatpush1.bf16.msra.mxu0 %v1519
        %3050 = vmatprep.mubr.bf16.mxu0 %v2962
        %3051 = vmatmul.mubr.bf16.gmra.mrb[0].mxu0 %v2961
        %v3052 = vpop.f32.mrb[0].mxu0
        %v3053 = vadd.f32 %v3010, %v3052
        %v3054 = vpop.f32.mrb[0].mxu0
        %v3055 = vadd.f32 %v3012, %v3054
        %v3056 = vpop.f32.mrb[0].mxu0
        %v3057 = vadd.f32 %v3014, %v3056
        %v3058 = vpop.f32.mrb[0].mxu0
        %v3059 = vadd.f32 %v3016, %v3058
        %3060 = vdwg.mxu0
        %3061 = vmatprep.subr.bf16.mxu0 %v1524
        %3062 = vmatpush1.bf16.msra.mxu0 %v1523
        %3063 = vmatprep.subr.bf16.mxu0 %v1528
        %3064 = vmatpush1.bf16.msra.mxu0 %v1527
        %3065 = vmatprep.subr.bf16.mxu0 %v1532
        %3066 = vmatpush1.bf16.msra.mxu0 %v1531
        %3067 = vmatprep.subr.bf16.mxu0 %v1536
        %3068 = vmatpush1.bf16.msra.mxu0 %v1535
        %3069 = vmatprep.subr.bf16.mxu0 %v1540
        %3070 = vmatpush1.bf16.msra.mxu0 %v1539
        %3071 = vmatprep.subr.bf16.mxu0 %v1544
        %3072 = vmatpush1.bf16.msra.mxu0 %v1543
        %3073 = vmatprep.subr.bf16.mxu0 %v1548
        %3074 = vmatpush1.bf16.msra.mxu0 %v1547
        %3075 = vmatprep.subr.bf16.mxu0 %v1552
        %3076 = vmatpush1.bf16.msra.mxu0 %v1551
        %3077 = vmatprep.subr.bf16.mxu0 %v1556
        %3078 = vmatpush1.bf16.msra.mxu0 %v1555
        %3079 = vmatprep.subr.bf16.mxu0 %v1560
        %3080 = vmatpush1.bf16.msra.mxu0 %v1559
        %3081 = vmatprep.subr.bf16.mxu0 %v1564
        %3082 = vmatpush1.bf16.msra.mxu0 %v1563
        %3083 = vmatprep.subr.bf16.mxu0 %v1568
        %3084 = vmatpush1.bf16.msra.mxu0 %v1567
        %3085 = vmatprep.subr.bf16.mxu0 %v1572
        %3086 = vmatpush1.bf16.msra.mxu0 %v1571
        %3087 = vmatprep.subr.bf16.mxu0 %v1576
        %3088 = vmatpush1.bf16.msra.mxu0 %v1575
        %3089 = vmatprep.subr.bf16.mxu0 %v1580
        %3090 = vmatpush1.bf16.msra.mxu0 %v1579
        %3091 = vmatprep.subr.bf16.mxu0 %v1584
        %3092 = vmatpush1.bf16.msra.mxu0 %v1583
        %3093 = vmatprep.mubr.bf16.mxu0 %v2964
        %3094 = vmatmul.mubr.bf16.gmra.mrb[0].mxu0 %v2963
        %v3095 = vpop.f32.mrb[0].mxu0
        %v3096 = vadd.f32 %v3053, %v3095
        %v3097 = vpop.f32.mrb[0].mxu0
        %v3098 = vadd.f32 %v3055, %v3097
        %v3099 = vpop.f32.mrb[0].mxu0
        %v3100 = vadd.f32 %v3057, %v3099
        %v3101 = vpop.f32.mrb[0].mxu0
        %v3102 = vadd.f32 %v3059, %v3101
        %3103 = vdwg.mxu0
        %3104 = vmatprep.subr.bf16.mxu0 %v1588
        %3105 = vmatpush1.bf16.msra.mxu0 %v1587
        %3106 = vmatprep.subr.bf16.mxu0 %v1592
        %3107 = vmatpush1.bf16.msra.mxu0 %v1591
        %3108 = vmatprep.subr.bf16.mxu0 %v1596
        %3109 = vmatpush1.bf16.msra.mxu0 %v1595
        %3110 = vmatprep.subr.bf16.mxu0 %v1600
        %3111 = vmatpush1.bf16.msra.mxu0 %v1599
        %3112 = vmatprep.subr.bf16.mxu0 %v1604
        %3113 = vmatpush1.bf16.msra.mxu0 %v1603
        %3114 = vmatprep.subr.bf16.mxu0 %v1608
        %3115 = vmatpush1.bf16.msra.mxu0 %v1607
        %3116 = vmatprep.subr.bf16.mxu0 %v1612
        %3117 = vmatpush1.bf16.msra.mxu0 %v1611
        %3118 = vmatprep.subr.bf16.mxu0 %v1616
        %3119 = vmatpush1.bf16.msra.mxu0 %v1615
        %3120 = vmatprep.subr.bf16.mxu0 %v1620
        %3121 = vmatpush1.bf16.msra.mxu0 %v1619
        %3122 = vmatprep.subr.bf16.mxu0 %v1624
        %3123 = vmatpush1.bf16.msra.mxu0 %v1623
        %3124 = vmatprep.subr.bf16.mxu0 %v1628
        %3125 = vmatpush1.bf16.msra.mxu0 %v1627
        %3126 = vmatprep.subr.bf16.mxu0 %v1632
        %3127 = vmatpush1.bf16.msra.mxu0 %v1631
        %3128 = vmatprep.subr.bf16.mxu0 %v1636
        %3129 = vmatpush1.bf16.msra.mxu0 %v1635
        %3130 = vmatprep.subr.bf16.mxu0 %v1640
        %3131 = vmatpush1.bf16.msra.mxu0 %v1639
        %3132 = vmatprep.subr.bf16.mxu0 %v1644
        %3133 = vmatpush1.bf16.msra.mxu0 %v1643
        %3134 = vmatprep.subr.bf16.mxu0 %v1648
        %3135 = vmatpush1.bf16.msra.mxu0 %v1647
        %3136 = vmatprep.mubr.bf16.mxu0 %v2966
        %3137 = vmatmul.mubr.bf16.gmra.mrb[0].mxu0 %v2965
        %v3138 = vpop.f32.mrb[0].mxu0
        %v3139 = vadd.f32 %v3096, %v3138
        %v3140 = vpop.f32.mrb[0].mxu0
        %v3141 = vadd.f32 %v3098, %v3140
        %v3142 = vpop.f32.mrb[0].mxu0
        %v3143 = vadd.f32 %v3100, %v3142
        %v3144 = vpop.f32.mrb[0].mxu0
        %v3145 = vadd.f32 %v3102, %v3144
        %3146 = vdwg.mxu0
        %3147 = vmatprep.subr.bf16.mxu0 %v1398
        %3148 = vmatpush1.bf16.msra.mxu0 %v1397
        %3149 = vmatprep.subr.bf16.mxu0 %v1402
        %3150 = vmatpush1.bf16.msra.mxu0 %v1401
        %3151 = vmatprep.subr.bf16.mxu0 %v1406
        %3152 = vmatpush1.bf16.msra.mxu0 %v1405
        %3153 = vmatprep.subr.bf16.mxu0 %v1410
        %3154 = vmatpush1.bf16.msra.mxu0 %v1409
        %3155 = vmatprep.subr.bf16.mxu0 %v1414
        %3156 = vmatpush1.bf16.msra.mxu0 %v1413
        %3157 = vmatprep.subr.bf16.mxu0 %v1418
        %3158 = vmatpush1.bf16.msra.mxu0 %v1417
        %3159 = vmatprep.subr.bf16.mxu0 %v1422
        %3160 = vmatpush1.bf16.msra.mxu0 %v1421
        %3161 = vmatprep.subr.bf16.mxu0 %v1426
        %3162 = vmatpush1.bf16.msra.mxu0 %v1425
        %3163 = vmatprep.subr.bf16.mxu0 %v1430
        %3164 = vmatpush1.bf16.msra.mxu0 %v1429
        %3165 = vmatprep.subr.bf16.mxu0 %v1434
        %3166 = vmatpush1.bf16.msra.mxu0 %v1433
        %3167 = vmatprep.subr.bf16.mxu0 %v1438
        %3168 = vmatpush1.bf16.msra.mxu0 %v1437
        %3169 = vmatprep.subr.bf16.mxu0 %v1442
        %3170 = vmatpush1.bf16.msra.mxu0 %v1441
        %3171 = vmatprep.subr.bf16.mxu0 %v1446
        %3172 = vmatpush1.bf16.msra.mxu0 %v1445
        %3173 = vmatprep.subr.bf16.mxu0 %v1450
        %3174 = vmatpush1.bf16.msra.mxu0 %v1449
        %3175 = vmatprep.subr.bf16.mxu0 %v1454
        %3176 = vmatpush1.bf16.msra.mxu0 %v1453
        %3177 = vmatprep.subr.bf16.mxu0 %v1458
        %3178 = vmatpush1.bf16.msra.mxu0 %v1457
        %3179 = vmatprep.mubr.bf16.mxu0 %v2960
        %3180 = vmatmul.mubr.bf16.gmra.mrb[0].mxu0 %v2959
        %v3181 = vpop.f32.mrb[0].mxu0
        %v3182 = vadd.f32 %v578, %v3181
        %v3183 = vpop.f32.mrb[0].mxu0
        %v3184 = vadd.f32 %v582, %v3183
        %v3185 = vpop.f32.mrb[0].mxu0
        %v3186 = vadd.f32 %v578, %v3185
        %v3187 = vpop.f32.mrb[0].mxu0
        %v3188 = vadd.f32 %v582, %v3187
        %3189 = vdwg.mxu0
        %3190 = vmatprep.subr.bf16.mxu0 %v1462
        %3191 = vmatpush1.bf16.msra.mxu0 %v1461
        %3192 = vmatprep.subr.bf16.mxu0 %v1466
        %3193 = vmatpush1.bf16.msra.mxu0 %v1465
        %3194 = vmatprep.subr.bf16.mxu0 %v1470
        %3195 = vmatpush1.bf16.msra.mxu0 %v1469
        %3196 = vmatprep.subr.bf16.mxu0 %v1474
        %3197 = vmatpush1.bf16.msra.mxu0 %v1473
        %3198 = vmatprep.subr.bf16.mxu0 %v1478
        %3199 = vmatpush1.bf16.msra.mxu0 %v1477
        %3200 = vmatprep.subr.bf16.mxu0 %v1482
        %3201 = vmatpush1.bf16.msra.mxu0 %v1481
        %3202 = vmatprep.subr.bf16.mxu0 %v1486
        %3203 = vmatpush1.bf16.msra.mxu0 %v1485
        %3204 = vmatprep.subr.bf16.mxu0 %v1490
        %3205 = vmatpush1.bf16.msra.mxu0 %v1489
        %3206 = vmatprep.subr.bf16.mxu0 %v1494
        %3207 = vmatpush1.bf16.msra.mxu0 %v1493
        %3208 = vmatprep.subr.bf16.mxu0 %v1498
        %3209 = vmatpush1.bf16.msra.mxu0 %v1497
        %3210 = vmatprep.subr.bf16.mxu0 %v1502
        %3211 = vmatpush1.bf16.msra.mxu0 %v1501
        %3212 = vmatprep.subr.bf16.mxu0 %v1506
        %3213 = vmatpush1.bf16.msra.mxu0 %v1505
        %3214 = vmatprep.subr.bf16.mxu0 %v1510
        %3215 = vmatpush1.bf16.msra.mxu0 %v1509
        %3216 = vmatprep.subr.bf16.mxu0 %v1514
        %3217 = vmatpush1.bf16.msra.mxu0 %v1513
        %3218 = vmatprep.subr.bf16.mxu0 %v1518
        %3219 = vmatpush1.bf16.msra.mxu0 %v1517
        %3220 = vmatprep.subr.bf16.mxu0 %v1522
        %3221 = vmatpush1.bf16.msra.mxu0 %v1521
        %3222 = vmatprep.mubr.bf16.mxu0 %v2962
        %3223 = vmatmul.mubr.bf16.gmra.mrb[0].mxu0 %v2961
        %v3224 = vpop.f32.mrb[0].mxu0
        %v3225 = vadd.f32 %v3182, %v3224
        %v3226 = vpop.f32.mrb[0].mxu0
        %v3227 = vadd.f32 %v3184, %v3226
        %v3228 = vpop.f32.mrb[0].mxu0
        %v3229 = vadd.f32 %v3186, %v3228
        %v3230 = vpop.f32.mrb[0].mxu0
        %v3231 = vadd.f32 %v3188, %v3230
        %3232 = vdwg.mxu0
        %3233 = vmatprep.subr.bf16.mxu0 %v1526
        %3234 = vmatpush1.bf16.msra.mxu0 %v1525
        %3235 = vmatprep.subr.bf16.mxu0 %v1530
        %3236 = vmatpush1.bf16.msra.mxu0 %v1529
        %3237 = vmatprep.subr.bf16.mxu0 %v1534
        %3238 = vmatpush1.bf16.msra.mxu0 %v1533
        %3239 = vmatprep.subr.bf16.mxu0 %v1538
        %3240 = vmatpush1.bf16.msra.mxu0 %v1537
        %3241 = vmatprep.subr.bf16.mxu0 %v1542
        %3242 = vmatpush1.bf16.msra.mxu0 %v1541
        %3243 = vmatprep.subr.bf16.mxu0 %v1546
        %3244 = vmatpush1.bf16.msra.mxu0 %v1545
        %3245 = vmatprep.subr.bf16.mxu0 %v1550
        %3246 = vmatpush1.bf16.msra.mxu0 %v1549
        %3247 = vmatprep.subr.bf16.mxu0 %v1554
        %3248 = vmatpush1.bf16.msra.mxu0 %v1553
        %3249 = vmatprep.subr.bf16.mxu0 %v1558
        %3250 = vmatpush1.bf16.msra.mxu0 %v1557
        %3251 = vmatprep.subr.bf16.mxu0 %v1562
        %3252 = vmatpush1.bf16.msra.mxu0 %v1561
        %3253 = vmatprep.subr.bf16.mxu0 %v1566
        %3254 = vmatpush1.bf16.msra.mxu0 %v1565
        %3255 = vmatprep.subr.bf16.mxu0 %v1570
        %3256 = vmatpush1.bf16.msra.mxu0 %v1569
        %3257 = vmatprep.subr.bf16.mxu0 %v1574
        %3258 = vmatpush1.bf16.msra.mxu0 %v1573
        %3259 = vmatprep.subr.bf16.mxu0 %v1578
        %3260 = vmatpush1.bf16.msra.mxu0 %v1577
        %3261 = vmatprep.subr.bf16.mxu0 %v1582
        %3262 = vmatpush1.bf16.msra.mxu0 %v1581
        %3263 = vmatprep.subr.bf16.mxu0 %v1586
        %3264 = vmatpush1.bf16.msra.mxu0 %v1585
        %3265 = vmatprep.mubr.bf16.mxu0 %v2964
        %3266 = vmatmul.mubr.bf16.gmra.mrb[0].mxu0 %v2963
        %v3267 = vpop.f32.mrb[0].mxu0
        %v3268 = vadd.f32 %v3225, %v3267
        %v3269 = vpop.f32.mrb[0].mxu0
        %v3270 = vadd.f32 %v3227, %v3269
        %v3271 = vpop.f32.mrb[0].mxu0
        %v3272 = vadd.f32 %v3229, %v3271
        %v3273 = vpop.f32.mrb[0].mxu0
        %v3274 = vadd.f32 %v3231, %v3273
        %3275 = vdwg.mxu0
        %3276 = vmatprep.subr.bf16.mxu0 %v1590
        %3277 = vmatpush1.bf16.msra.mxu0 %v1589
        %3278 = vmatprep.subr.bf16.mxu0 %v1594
        %3279 = vmatpush1.bf16.msra.mxu0 %v1593
        %3280 = vmatprep.subr.bf16.mxu0 %v1598
        %3281 = vmatpush1.bf16.msra.mxu0 %v1597
        %3282 = vmatprep.subr.bf16.mxu0 %v1602
        %3283 = vmatpush1.bf16.msra.mxu0 %v1601
        %3284 = vmatprep.subr.bf16.mxu0 %v1606
        %3285 = vmatpush1.bf16.msra.mxu0 %v1605
        %3286 = vmatprep.subr.bf16.mxu0 %v1610
        %3287 = vmatpush1.bf16.msra.mxu0 %v1609
        %3288 = vmatprep.subr.bf16.mxu0 %v1614
        %3289 = vmatpush1.bf16.msra.mxu0 %v1613
        %3290 = vmatprep.subr.bf16.mxu0 %v1618
        %3291 = vmatpush1.bf16.msra.mxu0 %v1617
        %3292 = vmatprep.subr.bf16.mxu0 %v1622
        %3293 = vmatpush1.bf16.msra.mxu0 %v1621
        %3294 = vmatprep.subr.bf16.mxu0 %v1626
        %3295 = vmatpush1.bf16.msra.mxu0 %v1625
        %3296 = vmatprep.subr.bf16.mxu0 %v1630
        %3297 = vmatpush1.bf16.msra.mxu0 %v1629
        %3298 = vmatprep.subr.bf16.mxu0 %v1634
        %3299 = vmatpush1.bf16.msra.mxu0 %v1633
        %3300 = vmatprep.subr.bf16.mxu0 %v1638
        %3301 = vmatpush1.bf16.msra.mxu0 %v1637
        %3302 = vmatprep.subr.bf16.mxu0 %v1642
        %3303 = vmatpush1.bf16.msra.mxu0 %v1641
        %3304 = vmatprep.subr.bf16.mxu0 %v1646
        %3305 = vmatpush1.bf16.msra.mxu0 %v1645
        %3306 = vmatprep.subr.bf16.mxu0 %v1650
        %3307 = vmatpush1.bf16.msra.mxu0 %v1649
        %3308 = vmatprep.mubr.bf16.mxu0 %v2966
        %3309 = vmatmul.mubr.bf16.gmra.mrb[0].mxu0 %v2965
        %v3310 = vpop.f32.mrb[0].mxu0
        %v3311 = vadd.f32 %v3268, %v3310
        %v3312 = vpop.f32.mrb[0].mxu0
        %v3313 = vadd.f32 %v3270, %v3312
        %v3314 = vpop.f32.mrb[0].mxu0
        %v3315 = vadd.f32 %v3272, %v3314
        %v3316 = vpop.f32.mrb[0].mxu0
        %v3317 = vadd.f32 %v3274, %v3316
        %3318 = vdwg.mxu0
        %v3319 = vmax.f32 %v3139, 0.0
        %v3320 = vmax.f32 %v3141, 0.0
        %v3321 = vmax.f32 %v3311, 0.0
        %v3322 = vmax.f32 %v3313, 0.0
        %v3323 = vmax.f32 %v3143, 0.0
        %v3324 = vmax.f32 %v3145, 0.0
        %v3325 = vmax.f32 %v3315, 0.0
        %v3326 = vmax.f32 %v3317, 0.0
        %v3327 = vpack.c.bf16 %v3323, %v3319
        %v3328 = vpack.c.bf16 %v3324, %v3320
        %v3329 = vpack.c.bf16 %v3325, %v3321
        %v3330 = vpack.c.bf16 %v3326, %v3322
        %3331 = vmatprep.subr.bf16.mxu0 %v2532
        %3332 = vmatpush1.bf16.msra.mxu0 %v2531
        %3333 = vmatprep.subr.bf16.mxu0 %v2534
        %3334 = vmatpush1.bf16.msra.mxu0 %v2533
        %3335 = vmatprep.subr.bf16.mxu0 %v2536
        %3336 = vmatpush1.bf16.msra.mxu0 %v2535
        %3337 = vmatprep.subr.bf16.mxu0 %v2538
        %3338 = vmatpush1.bf16.msra.mxu0 %v2537
        %3339 = vmatprep.subr.bf16.mxu0 %v2540
        %3340 = vmatpush1.bf16.msra.mxu0 %v2539
        %3341 = vmatprep.subr.bf16.mxu0 %v2542
        %3342 = vmatpush1.bf16.msra.mxu0 %v2541
        %3343 = vmatprep.subr.bf16.mxu0 %v2544
        %3344 = vmatpush1.bf16.msra.mxu0 %v2543
        %3345 = vmatprep.subr.bf16.mxu0 %v2546
        %3346 = vmatpush1.bf16.msra.mxu0 %v2545
        %3347 = vmatprep.subr.bf16.mxu0 %v2548
        %3348 = vmatpush1.bf16.msra.mxu0 %v2547
        %3349 = vmatprep.subr.bf16.mxu0 %v2550
        %3350 = vmatpush1.bf16.msra.mxu0 %v2549
        %3351 = vmatprep.subr.bf16.mxu0 %v2552
        %3352 = vmatpush1.bf16.msra.mxu0 %v2551
        %3353 = vmatprep.subr.bf16.mxu0 %v2554
        %3354 = vmatpush1.bf16.msra.mxu0 %v2553
        %3355 = vmatprep.subr.bf16.mxu0 %v2556
        %3356 = vmatpush1.bf16.msra.mxu0 %v2555
        %3357 = vmatprep.subr.bf16.mxu0 %v2558
        %3358 = vmatpush1.bf16.msra.mxu0 %v2557
        %3359 = vmatprep.subr.bf16.mxu0 %v2560
        %3360 = vmatpush1.bf16.msra.mxu0 %v2559
        %3361 = vmatprep.subr.bf16.mxu0 %v2562
        %3362 = vmatpush1.bf16.msra.mxu0 %v2561
        %3363 = vmatprep.mubr.bf16.mxu0 %v3328
        %3364 = vmatmul.mubr.bf16.gmra.mrb[0].mxu0 %v3327
        %v3365 = vpop.f32.mrb[0].mxu0
        %v3366 = vadd.f32 %v2332, %v3365
        %v3367 = vpop.f32.mrb[0].mxu0
        %v3368 = vadd.f32 %v2336, %v3367
        %v3369 = vpop.f32.mrb[0].mxu0
        %v3370 = vadd.f32 %v2332, %v3369
        %v3371 = vpop.f32.mrb[0].mxu0
        %v3372 = vadd.f32 %v2336, %v3371
        %3373 = vdwg.mxu0
        %3374 = vmatprep.subr.bf16.mxu0 %v2564
        %3375 = vmatpush1.bf16.msra.mxu0 %v2563
        %3376 = vmatprep.subr.bf16.mxu0 %v2566
        %3377 = vmatpush1.bf16.msra.mxu0 %v2565
        %3378 = vmatprep.subr.bf16.mxu0 %v2568
        %3379 = vmatpush1.bf16.msra.mxu0 %v2567
        %3380 = vmatprep.subr.bf16.mxu0 %v2570
        %3381 = vmatpush1.bf16.msra.mxu0 %v2569
        %3382 = vmatprep.subr.bf16.mxu0 %v2572
        %3383 = vmatpush1.bf16.msra.mxu0 %v2571
        %3384 = vmatprep.subr.bf16.mxu0 %v2574
        %3385 = vmatpush1.bf16.msra.mxu0 %v2573
        %3386 = vmatprep.subr.bf16.mxu0 %v2576
        %3387 = vmatpush1.bf16.msra.mxu0 %v2575
        %3388 = vmatprep.subr.bf16.mxu0 %v2578
        %3389 = vmatpush1.bf16.msra.mxu0 %v2577
        %3390 = vmatprep.subr.bf16.mxu0 %v2580
        %3391 = vmatpush1.bf16.msra.mxu0 %v2579
        %3392 = vmatprep.subr.bf16.mxu0 %v2582
        %3393 = vmatpush1.bf16.msra.mxu0 %v2581
        %3394 = vmatprep.subr.bf16.mxu0 %v2584
        %3395 = vmatpush1.bf16.msra.mxu0 %v2583
        %3396 = vmatprep.subr.bf16.mxu0 %v2586
        %3397 = vmatpush1.bf16.msra.mxu0 %v2585
        %3398 = vmatprep.subr.bf16.mxu0 %v2588
        %3399 = vmatpush1.bf16.msra.mxu0 %v2587
        %3400 = vmatprep.subr.bf16.mxu0 %v2590
        %3401 = vmatpush1.bf16.msra.mxu0 %v2589
        %3402 = vmatprep.subr.bf16.mxu0 %v2592
        %3403 = vmatpush1.bf16.msra.mxu0 %v2591
        %3404 = vmatprep.subr.bf16.mxu0 %v2594
        %3405 = vmatpush1.bf16.msra.mxu0 %v2593
        %3406 = vmatprep.mubr.bf16.mxu0 %v3330
        %3407 = vmatmul.mubr.bf16.gmra.mrb[0].mxu0 %v3329
        %v3408 = vpop.f32.mrb[0].mxu0
        %v3409 = vadd.f32 %v3366, %v3408
        %v3410 = vpop.f32.mrb[0].mxu0
        %v3411 = vadd.f32 %v3368, %v3410
        %v3412 = vpop.f32.mrb[0].mxu0
        %v3413 = vadd.f32 %v3370, %v3412
        %v3414 = vpop.f32.mrb[0].mxu0
        %v3415 = vadd.f32 %v3372, %v3414
        %3416 = vdwg.mxu0
        %v3417 = vmax.f32 %v3409, 0.0
        %v3418 = vmax.f32 %v3411, 0.0
        %v3419 = vmax.f32 %v3413, 0.0
        %v3420 = vmax.f32 %v3415, 0.0
        %v3421 = vpack.c.bf16 %v3419, %v3417
        %v3422 = vpack.c.bf16 %v3420, %v3418
        %3423 = vmatprep.subr.bf16.mxu0 0
        %3424 = vmatpush1.bf16.msra.mxu0 %v2854
        %3425 = vmatprep.subr.bf16.mxu0 0
        %3426 = vmatpush1.bf16.msra.mxu0 %v2855
        %3427 = vmatprep.subr.bf16.mxu0 0
        %3428 = vmatpush1.bf16.msra.mxu0 %v2856
        %3429 = vmatprep.subr.bf16.mxu0 0
        %3430 = vmatpush1.bf16.msra.mxu0 %v2857
        %3431 = vmatprep.subr.bf16.mxu0 0
        %3432 = vmatpush1.bf16.msra.mxu0 %v2858
        %3433 = vmatprep.subr.bf16.mxu0 0
        %3434 = vmatpush1.bf16.msra.mxu0 %v2859
        %3435 = vmatprep.subr.bf16.mxu0 0
        %3436 = vmatpush1.bf16.msra.mxu0 %v2860
        %3437 = vmatprep.subr.bf16.mxu0 0
        %3438 = vmatpush1.bf16.msra.mxu0 %v2861
        %3439 = vmatprep.subr.bf16.mxu0 0
        %3440 = vmatpush1.bf16.msra.mxu0 %v2862
        %3441 = vmatprep.subr.bf16.mxu0 0
        %3442 = vmatpush1.bf16.msra.mxu0 %v2863
        %3443 = vmatprep.subr.bf16.mxu0 0
        %3444 = vmatpush1.bf16.msra.mxu0 %v2864
        %3445 = vmatprep.subr.bf16.mxu0 0
        %3446 = vmatpush1.bf16.msra.mxu0 %v2865
        %3447 = vmatprep.subr.bf16.mxu0 0
        %3448 = vmatpush1.bf16.msra.mxu0 %v2866
        %3449 = vmatprep.subr.bf16.mxu0 0
        %3450 = vmatpush1.bf16.msra.mxu0 %v2867
        %3451 = vmatprep.subr.bf16.mxu0 0
        %3452 = vmatpush1.bf16.msra.mxu0 %v2868
        %3453 = vmatprep.subr.bf16.mxu0 0
        %3454 = vmatpush1.bf16.msra.mxu0 %v2869
        %3455 = vmatprep.mubr.bf16.mxu0 %v3422
        %3456 = vmatmul.mubr.bf16.gmra.mrb[0].mxu0 %v3421
        %v3457 = vpop.f32.mrb[0].mxu0
        %v3458 = vadd.f32 %v2788, %v3457
        %v3459 = vpop.f32.mrb[0].mxu0
        %v3460 = vpop.f32.mrb[0].mxu0
        %v3461 = vadd.f32 %v2788, %v3460
        %v3462 = vpop.f32.mrb[0].mxu0
        %3463 = vdwg.mxu0
        %v3464 = vmax.f32 %v2921, %v3458
        %v3465 = vmax.f32 %v2924, %v3461
        %v3466 = vsub.f32 %v2921, %v3464
        %v3467 = vsub.f32 %v2924, %v3465
        %v3468 = vmul.f32 %v3466, 1.442695
        %v3469 = vpow.pop %v3468
        %v3470 = vmul.f32 %v3467, 1.442695
        %v3471 = vpow.pop %v3470
        %v3472 = vadd.f32 %v3469, 0.0
        %v3473 = vadd.f32 %v3471, 0.0
        %v3474 = vsub.f32 %v3458, %v3464
        %v3475 = vsub.f32 %v3461, %v3465
        %v3476 = vmul.f32 %v3474, 1.442695
        %v3477 = vpow.pop %v3476
        %v3478 = vmul.f32 %v3475, 1.442695
        %v3479 = vpow.pop %v3478
        %v3480 = vadd.f32 %v3472, %v3477
        %v3481 = vadd.f32 %v3473, %v3479
        %v3482 = vlog2.pop %v3480
        %v3483 = vmul.f32 %v3482, 0.6931472
        %v3484 = vlog2.pop %v3481
        %v3485 = vmul.f32 %v3484, 0.6931472
        %v3486 = vadd.f32 %v3464, %v3483
        %v3487 = vadd.f32 %v3465, %v3485
        %v3488 = vsub.f32 %v2921, %v3486
        %v3489 = vsub.f32 %v2924, %v3487
        %v3490 = vsub.f32 %v3458, %v3486
        %v3491 = vsub.f32 %v3461, %v3487
        %3494 = vrot.lane.b32.xlu0 %v3490, 2
        %v3495 = vpop.permute.xlu0 %3494
        %3496 = vrot.lane.b32.xlu0 %v3491, 2
        %v3497 = vpop.permute.xlu0 %3496
        %vm3500 = vcmask 15360
        %v3501 = vsel %vm3500, %v3488, %v3495
        %v3502 = vsel %vm3500, %v3489, %v3497
        %vm3503 = vcmask 31744
        %3504 = vst.msk [vmem:[%s298] sm:$0xff] %vm3503, %v3501
        %3505 = vst.msk [vmem:[%s298 + $0x8] sm:$0xff] %vm3503, %v3502
        %s3506 = smul.u32 2, %s19
        %p3507 = scmp.lt.s32.totalorder %s3506, 7
        %s3508 = scalar_select %p3507, %s3506, 7
        %s3509 = smul.addr %s3508, 8
        %s3510 = scalar_lea.vmem %s7, %s3509
        // Predicated region
        $region53: #{pointnet_cls_forward.3} parent=47 // pred_check
          %p3511 = pneg %p189
        $region54: #{pointnet_cls_forward.3} parent=47 // pred_check_branch
          %3513 = sbr.rel (%p3511) target = $region56
        $region55: #{pointnet_cls_forward.3} parent=47 // pred_region
          %s3514 = smul.u32 2, %s19
        $region56: #{pointnet_cls_forward.3} parent=47 // pred_fallthru
          _
      $region48: #{pointnet_cls_forward.3} parent=5 // pred_fallthru
        _
      %p3515 = scmp.le.s32.totalorder 2, %s14
      // Predicated region
      $region57: #{pointnet_cls_forward.3} parent=5 // pred_check
        %p3516 = pneg %p3515
      $region58: #{pointnet_cls_forward.3} parent=5 // pred_check_branch
        %3518 = sbr.rel (%p3516) target = $region60
      $region59: #{pointnet_cls_forward.3} parent=5 // pred_region
        %s3519 = ssub.s32 %s14, 2
        // Predicated region
        $region61: #{pointnet_cls_forward.3} parent=59 // pred_check
          %p3520 = pneg %p195
        $region62: #{pointnet_cls_forward.3} parent=59 // pred_check_branch
          %3522 = sbr.rel (%p3520) target = $region64
        $region63: #{pointnet_cls_forward.3} parent=59 // pred_region
          %s3523 = smul.u32 2, %s20
          %p3524 = scmp.lt.s32.totalorder %s3523, 7
          %s3525 = scalar_select %p3524, %s3523, 7
          %s3526 = smul.addr %s3525, 8
          %s3527 = scalar_lea.vmem %s7, %s3526
        $region64: #{pointnet_cls_forward.3} parent=59 // pred_fallthru
          _
      $region60: #{pointnet_cls_forward.3} parent=5 // pred_fallthru
        _
    $region6: #{pointnet_cls_forward.3} parent=1 // loop_footer
      %s18 = sadd.s32 1, %s14
    $region7: #{pointnet_cls_forward.3} parent=1 // loop_footer_branch
      %13 = sbr.rel target = $region3
    $region8: #{pointnet_cls_forward.3} parent=1 // loop_exit
      _
    %3528 = vsyncpa [#allocation3], 1
    %s3529 = scalar_lea.sflag [#allocation3], 1
    %3530 = vsyncpa %s3529, 1

</llo_original>
